<compile_context>
chip_gen: v7x
topology: tpu7x:2x2x1
jax: 0.10.0
libtpu: 0.0.40
codegen_flags: <defaults>
</compile_context>

<pallas_src>
import functools
import math

import jax
import jax.numpy as jnp
from jax import lax
from jax.experimental import pallas as pl
from jax.experimental.pallas import tpu as pltpu

KERNELS = (1, 3, 5, 7)
NK = len(KERNELS)
KMAX = max(KERNELS)              # 7
PAD = KMAX // 2                  # 3
HIDDEN = 32                      # fixed by the module: Linear(C, 32)
BN_EPS = 1e-5


def _dyn_rfatt_kernel(xp_ref, w1_ref, w3_ref, w5_ref, w7_ref, shift_ref,
                      fc1_ref, fb1_ref, fc2_ref, fb2_ref, wc_ref, bc_ref,
                      out_ref, *, H, W, Wp, C):
    L = H * Wp                                   # lane-dense working length

    # Hoisted weight reads (no tiny per-tap ref loads inside the inner loop).
    w_taps = (w1_ref[...], w3_ref[...], w5_ref[...], w7_ref[...])   # (k*k, C, 1)
    shifts = shift_ref[...]                                          # (NK, C, 1)

    # Center-tap window == x restricted to the valid rows; its per-row tail
    # columns only ever see zero padding of x, so they stay exactly zero.
    cbase = PAD * Wp + PAD
    x_val = xp_ref[0, :, cbase:cbase + L].astype(jnp.float32)        # (C, L)

    # ---------------- selector: GAP -> FC -> ReLU -> FC -> softmax -------------
    # Depends only on x, so it is computed first and each branch is weighted and
    # accumulated on the fly (no branch tensors staged).
    s = jnp.sum(x_val, axis=1, keepdims=True) * (1.0 / (H * W))      # (C, 1)
    h = jnp.sum(s * fc1_ref[...], axis=0, keepdims=True) + fb1_ref[...]
    h = jnp.maximum(h, 0.0)                                          # (1, HIDDEN)
    logits = jnp.sum(h * fc2_ref[...], axis=1, keepdims=True) + fb2_ref[...]
    logits = logits - jnp.max(logits, axis=0, keepdims=True)         # (NK, 1)
    ez = jnp.exp(logits)
    z = ez / jnp.sum(ez, axis=0, keepdims=True)                      # (NK, 1)

    # --------- shared 7x7 tap loop: 7 row loads + XLU rolls, 4 accumulators ----
    # Branch k's taps live at absolute positions r,c in [off, off+k) of the 7x7
    # grid (off = PAD - k//2), so every distinct window is materialized exactly
    # once and accumulated into every branch that uses it.
    offs = tuple(PAD - k // 2 for k in KERNELS)
    accs = [jnp.zeros((C, L), jnp.float32) for _ in range(NK)]
    for r in range(KMAX):
        row = xp_ref[0, :, r * Wp:r * Wp + L].astype(jnp.float32)    # tap (r, 0)
        for c in range(KMAX):
            if r == PAD and c == PAD:
                win = x_val                          # center tap already loaded
            elif c == 0:
                win = row
            else:
                # win[m] = row[(m + c) % L]; the wrapped elements land in the
                # discarded tail columns of the last row (Wp - 2*PAD >= W).
                win = pltpu.roll(row, shift=L - c, axis=1)
            for bi, k in enumerate(KERNELS):
                off = offs[bi]
                if off <= r < off + k and off <= c < off + k:
                    t = (r - off) * k + (c - off)
                    accs[bi] = accs[bi] + win * w_taps[bi][t]        # (C,1) bcast

    # ------- SiLU (+folded BN shift) and per-batch weighting, EUP together -----
    out_acc = jnp.zeros((C, L), jnp.float32)
    for bi in range(NK):
        pre = accs[bi] + shifts[bi]                                  # folded BN
        out_acc = out_acc + (pre * jax.nn.sigmoid(pre)) * z[bi:bi + 1, 0:1]

    # ---------------- enhance: 1x1 conv (MXU) + sigmoid, residual --------------
    # TODO(synk): on v5e a VPU broadcast-MAC formulation of this tiny (C,C)@(C,L)
    # matmul may beat the MXU path; kept on the MXU (bf16-native on v6e/v7x).
    e = jnp.dot(wc_ref[...], out_acc, preferred_element_type=jnp.float32)
    e = jax.nn.sigmoid(e + bc_ref[...])
    out_ref[0] = (x_val * (e + 1.0)).astype(out_ref.dtype)           # x*e + x


def _fold_branch(br):
    """Fold conv bias + inference BatchNorm into conv weights / channel shift."""
    w = br["w"]                                        # (C, 1, k, k) depthwise OIHW
    cdim, _, k, _ = w.shape
    scale = br["gamma"] / jnp.sqrt(br["var"] + BN_EPS)            # (C,)
    w_f = jnp.transpose(w[:, 0], (1, 2, 0)) * scale               # (k, k, C)
    w_f = w_f.reshape(k * k, cdim, 1).astype(jnp.float32)
    shift = scale * (br["b"] - br["mean"]) + br["beta"]           # (C,)
    return w_f, shift.astype(jnp.float32)


def prepare_kernel_params(params):
    kp, shifts = {}, []
    for bi, k in enumerate(KERNELS):
        w_f, shift = _fold_branch(params["branches"][bi])
        kp[f"dw{k}"] = w_f                                        # (k*k, C, 1)
        shifts.append(shift[:, None])
    kp["shift"] = jnp.stack(shifts, axis=0)                       # (NK, C, 1)
    kp["fc1"] = params["w1"].T.astype(jnp.float32)                # (C, HIDDEN)
    kp["fb1"] = params["b1"].reshape(1, -1).astype(jnp.float32)   # (1, HIDDEN)
    kp["fc2"] = params["w2"].astype(jnp.float32)                  # (NK, HIDDEN)
    kp["fb2"] = params["b2"].reshape(-1, 1).astype(jnp.float32)   # (NK, 1)
    kp["wc"] = params["wc"][:, :, 0, 0].astype(jnp.float32)       # (C, C)
    kp["bc"] = params["bc"].reshape(-1, 1).astype(jnp.float32)    # (C, 1)
    return kp


def dynamic_rfatt_forward(x, params):
    """x: (B, C, H, W) NCHW float32 -> (B, C, H, W)."""
    B, C, H, W = x.shape

    # Lane-dense row stride: smallest Wp >= W + 2*PAD with H*Wp % 128 == 0, so
    # every (C, H*Wp) slab is an exact number of 128-lane vregs (H=16,W=16 ->
    # Wp=24, L=384) and the output stores are unmasked.
    step = 128 // math.gcd(H, 128)
    Wp = -(-(W + 2 * PAD) // step) * step
    L = H * Wp
    Lp = (H + 2 * PAD) * Wp        # padded rows: PAD on top and bottom suffice
    assert L % 128 == 0 and Wp >= W + 2 * PAD
    assert Wp - 2 * PAD >= W       # roll wrap-around stays in discarded tail cols

    # TODO(synk): the halo could be built inside the kernel (zeroed VMEM scratch
    # + per-row DMA of the unpadded rows) to avoid this extra HBM round trip.
    xp = jnp.pad(x, ((0, 0), (0, 0), (PAD, PAD),
                     (PAD, Wp - W - PAD))).reshape(B, C, Lp)
    kp = prepare_kernel_params(params)

    def const_spec(shape):
        n = len(shape)
        return pl.BlockSpec(shape, lambda b, _n=n: (0,) * _n)

    kernel = functools.partial(_dyn_rfatt_kernel, H=H, W=W, Wp=Wp, C=C)
    # grid=(B,) "parallel": one batch per step; with B=2 this is the v7x-friendly
    # 2-way TensorCore split.  For larger B, pack ceil(B/2) batches per step on
    # the sublane axis to amortize the per-step pipeline overhead.
    out_flat = pl.pallas_call(
        kernel,
        out_shape=jax.ShapeDtypeStruct((B, C, L), x.dtype),
        grid=(B,),
        in_specs=[
            pl.BlockSpec((1, C, Lp), lambda b: (b, 0, 0)),
            const_spec((1 * 1, C, 1)),
            const_spec((3 * 3, C, 1)),
            const_spec((5 * 5, C, 1)),
            const_spec((7 * 7, C, 1)),
            const_spec((NK, C, 1)),
            const_spec((C, HIDDEN)),
            const_spec((1, HIDDEN)),
            const_spec((NK, HIDDEN)),
            const_spec((NK, 1)),
            const_spec((C, C)),
            const_spec((C, 1)),
        ],
        out_specs=pl.BlockSpec((1, C, L), lambda b: (b, 0, 0)),
        compiler_params=pltpu.CompilerParams(
            dimension_semantics=("parallel",),
            vmem_limit_bytes=32 * 1024 * 1024,
        ),
    )(xp, kp["dw1"], kp["dw3"], kp["dw5"], kp["dw7"], kp["shift"],
      kp["fc1"], kp["fb1"], kp["fc2"], kp["fb2"], kp["wc"], kp["bc"])

    # NOTE: this reshape+slice is an extra XLA copy of the output; consumers
    # able to read the padded (B, C, H, Wp) layout (tail columns are exactly 0)
    # should skip it.
    return out_flat.reshape(B, C, H, Wp)[:, :, :, :W]


def init_params(key, C, hidden=HIDDEN):
    keys = iter(jax.random.split(key, 6 * NK + 6))
    branches = []
    for k in KERNELS:
        branches.append(dict(
            w=0.1 * jax.random.normal(next(keys), (C, 1, k, k), jnp.float32),
            b=0.1 * jax.random.normal(next(keys), (C,), jnp.float32),
            gamma=1.0 + 0.1 * jax.random.normal(next(keys), (C,), jnp.float32),
            beta=0.1 * jax.random.normal(next(keys), (C,), jnp.float32),
            mean=0.1 * jax.random.normal(next(keys), (C,), jnp.float32),
            var=0.5 + jax.random.uniform(next(keys), (C,), jnp.float32),
        ))
    # TODO(synk): BatchNorm is handled in inference mode (running stats folded);
    # training-mode batch-statistics update has no clean single-kernel equivalent.
    return dict(
        branches=branches,
        w1=0.1 * jax.random.normal(next(keys), (hidden, C), jnp.float32),
        b1=0.1 * jax.random.normal(next(keys), (hidden,), jnp.float32),
        w2=0.1 * jax.random.normal(next(keys), (NK, hidden), jnp.float32),
        b2=0.1 * jax.random.normal(next(keys), (NK,), jnp.float32),
        wc=0.1 * jax.random.normal(next(keys), (C, C, 1, 1), jnp.float32),
        bc=0.1 * jax.random.normal(next(keys), (C,), jnp.float32),
    )


def dynamic_rfatt_reference(x, params):
    """Pure-JAX (lax.conv) mirror of the PyTorch DynamicRFAtt forward."""
    B, C, H, W = x.shape
    dn = ("NCHW", "OIHW", "NCHW")
    outs = []
    for bi, k in enumerate(KERNELS):
        br = params["branches"][bi]
        pad = k // 2
        y = lax.conv_general_dilated(
            x, br["w"], window_strides=(1, 1), padding=[(pad, pad), (pad, pad)],
            dimension_numbers=dn, feature_group_count=C,
            precision=lax.Precision.HIGHEST)
        y = y + br["b"][None, :, None, None]
        y = (y - br["mean"][None, :, None, None]) * (
            br["gamma"] / jnp.sqrt(br["var"] + BN_EPS))[None, :, None, None]
        y = y + br["beta"][None, :, None, None]
        y = y * jax.nn.sigmoid(y)                        # SiLU
        outs.append(y)
    s = jnp.mean(x, axis=(2, 3))                         # (B, C)
    h = jnp.maximum(s @ params["w1"].T + params["b1"], 0.0)
    wts = jax.nn.softmax(h @ params["w2"].T + params["b2"], axis=1)   # (B, NK)
    out = sum(wts[:, i, None, None, None] * outs[i] for i in range(NK))
    e = lax.conv_general_dilated(
        out, params["wc"], window_strides=(1, 1), padding="VALID",
        dimension_numbers=dn, precision=lax.Precision.HIGHEST)
    e = jax.nn.sigmoid(e + params["bc"][None, :, None, None])
    return x * e + x


if __name__ == "__main__":
    # C=8 fills a full f32 sublane tile in the channel-major (C, H*Wp) layout.
    B, C, H, W = 2, 8, 16, 16
    key = jax.random.PRNGKey(0)
    k_x, k_p = jax.random.split(key)
    x = jax.random.normal(k_x, (B, C, H, W), jnp.float32)    # NCHW like PyTorch
    params = init_params(k_p, C)

    out = jax.block_until_ready(dynamic_rfatt_forward(x, params))
    ref = jax.block_until_ready(dynamic_rfatt_reference(x, params))

    assert out.shape == (B, C, H, W), out.shape
    max_err = float(jnp.max(jnp.abs(out - ref)))
    assert jnp.allclose(out, ref, rtol=1e-3, atol=1e-4), max_err
    print("KERNEL_OK")
</pallas_src>

<mosaic_0001>
module attributes {stable_mosaic.version = 11 : i64} {
  func.func @_dyn_rfatt_kernel(%arg0: i32, %arg1: memref<1x8x528xf32, #tpu.memory_space<vmem>>, %arg2: memref<1x8x1xf32, #tpu.memory_space<vmem>>, %arg3: memref<9x8x1xf32, #tpu.memory_space<vmem>>, %arg4: memref<25x8x1xf32, #tpu.memory_space<vmem>>, %arg5: memref<49x8x1xf32, #tpu.memory_space<vmem>>, %arg6: memref<4x8x1xf32, #tpu.memory_space<vmem>>, %arg7: memref<8x32xf32, #tpu.memory_space<vmem>>, %arg8: memref<1x32xf32, #tpu.memory_space<vmem>>, %arg9: memref<4x32xf32, #tpu.memory_space<vmem>>, %arg10: memref<4x1xf32, #tpu.memory_space<vmem>>, %arg11: memref<8x8xf32, #tpu.memory_space<vmem>>, %arg12: memref<8x1xf32, #tpu.memory_space<vmem>>, %arg13: memref<1x8x384xf32, #tpu.memory_space<vmem>>) attributes {dimension_semantics = [#tpu.dimension_semantics<parallel>], iteration_bounds = array<i64: 2>, scalar_prefetch = 0 : i64, scratch_operands = 0 : i64, tpu.core_type = #tpu.core_type<tc>, window_params = [{transform_indices = @transform_0, window_bounds = array<i64: 1, 8, 528>}, {pipeline_mode = #tpu.pipeline_mode<synchronous>, transform_indices = @transform_1, window_bounds = array<i64: 1, 8, 1>}, {pipeline_mode = #tpu.pipeline_mode<synchronous>, transform_indices = @transform_2, window_bounds = array<i64: 9, 8, 1>}, {pipeline_mode = #tpu.pipeline_mode<synchronous>, transform_indices = @transform_3, window_bounds = array<i64: 25, 8, 1>}, {pipeline_mode = #tpu.pipeline_mode<synchronous>, transform_indices = @transform_4, window_bounds = array<i64: 49, 8, 1>}, {pipeline_mode = #tpu.pipeline_mode<synchronous>, transform_indices = @transform_5, window_bounds = array<i64: 4, 8, 1>}, {pipeline_mode = #tpu.pipeline_mode<synchronous>, transform_indices = @transform_6, window_bounds = array<i64: 8, 32>}, {pipeline_mode = #tpu.pipeline_mode<synchronous>, transform_indices = @transform_7, window_bounds = array<i64: 1, 32>}, {pipeline_mode = #tpu.pipeline_mode<synchronous>, transform_indices = @transform_8, window_bounds = array<i64: 4, 32>}, {pipeline_mode = #tpu.pipeline_mode<synchronous>, transform_indices = @transform_9, window_bounds = array<i64: 4, 1>}, {pipeline_mode = #tpu.pipeline_mode<synchronous>, transform_indices = @transform_10, window_bounds = array<i64: 8, 8>}, {pipeline_mode = #tpu.pipeline_mode<synchronous>, transform_indices = @transform_11, window_bounds = array<i64: 8, 1>}, {transform_indices = @transform_12, window_bounds = array<i64: 1, 8, 384>}]} {
    %c0 = arith.constant 0 : index
    %c0_0 = arith.constant 0 : index
    %c0_1 = arith.constant 0 : index
    %0 = vector.load %arg2[%c0, %c0_0, %c0_1] : memref<1x8x1xf32, #tpu.memory_space<vmem>>, vector<1x8x1xf32>
    %c0_2 = arith.constant 0 : index
    %c0_3 = arith.constant 0 : index
    %c0_4 = arith.constant 0 : index
    %1 = vector.load %arg3[%c0_2, %c0_3, %c0_4] : memref<9x8x1xf32, #tpu.memory_space<vmem>>, vector<9x8x1xf32>
    %c0_5 = arith.constant 0 : index
    %c0_6 = arith.constant 0 : index
    %c0_7 = arith.constant 0 : index
    %2 = vector.load %arg4[%c0_5, %c0_6, %c0_7] : memref<25x8x1xf32, #tpu.memory_space<vmem>>, vector<25x8x1xf32>
    %c0_8 = arith.constant 0 : index
    %c0_9 = arith.constant 0 : index
    %c0_10 = arith.constant 0 : index
    %3 = vector.load %arg5[%c0_8, %c0_9, %c0_10] : memref<49x8x1xf32, #tpu.memory_space<vmem>>, vector<49x8x1xf32>
    %c0_11 = arith.constant 0 : index
    %c0_12 = arith.constant 0 : index
    %c0_13 = arith.constant 0 : index
    %4 = vector.load %arg6[%c0_11, %c0_12, %c0_13] : memref<4x8x1xf32, #tpu.memory_space<vmem>>, vector<4x8x1xf32>
    %c0_14 = arith.constant 0 : index
    %c0_15 = arith.constant 0 : index
    %c75 = arith.constant 75 : index
    %5 = vector.load %arg1[%c0_14, %c0_15, %c75] : memref<1x8x528xf32, #tpu.memory_space<vmem>>, vector<1x8x384xf32>
    %6 = vector.shape_cast %5 : vector<1x8x384xf32> to vector<8x384xf32>
    %cst = arith.constant dense<0.000000e+00> : vector<8xf32>
    %7 = vector.multi_reduction <add>, %6, %cst [1] : vector<8x384xf32> to vector<8xf32>
    %8 = vector.shape_cast %7 : vector<8xf32> to vector<8x1xf32>
    %cst_16 = arith.constant 3.906250e-03 : f32
    %9 = vector.broadcast %cst_16 : f32 to vector<8x1xf32>
    %10 = arith.mulf %8, %9 : vector<8x1xf32>
    %c0_17 = arith.constant 0 : index
    %c0_18 = arith.constant 0 : index
    %11 = vector.load %arg7[%c0_17, %c0_18] : memref<8x32xf32, #tpu.memory_space<vmem>>, vector<8x32xf32>
    %12 = vector.broadcast %10 : vector<8x1xf32> to vector<8x32xf32>
    %13 = arith.mulf %12, %11 : vector<8x32xf32>
    %cst_19 = arith.constant dense<0.000000e+00> : vector<32xf32>
    %14 = vector.multi_reduction <add>, %13, %cst_19 [0] : vector<8x32xf32> to vector<32xf32>
    %15 = vector.shape_cast %14 : vector<32xf32> to vector<1x32xf32>
    %c0_20 = arith.constant 0 : index
    %c0_21 = arith.constant 0 : index
    %16 = vector.load %arg8[%c0_20, %c0_21] : memref<1x32xf32, #tpu.memory_space<vmem>>, vector<1x32xf32>
    %17 = arith.addf %15, %16 : vector<1x32xf32>
    %cst_22 = arith.constant 0.000000e+00 : f32
    %18 = vector.broadcast %cst_22 : f32 to vector<1x32xf32>
    %19 = arith.maximumf %17, %18 : vector<1x32xf32>
    %c0_23 = arith.constant 0 : index
    %c0_24 = arith.constant 0 : index
    %20 = vector.load %arg9[%c0_23, %c0_24] : memref<4x32xf32, #tpu.memory_space<vmem>>, vector<4x32xf32>
    %21 = vector.broadcast %19 : vector<1x32xf32> to vector<4x32xf32>
    %22 = arith.mulf %21, %20 : vector<4x32xf32>
    %cst_25 = arith.constant dense<0.000000e+00> : vector<4xf32>
    %23 = vector.multi_reduction <add>, %22, %cst_25 [1] : vector<4x32xf32> to vector<4xf32>
    %24 = vector.shape_cast %23 : vector<4xf32> to vector<4x1xf32>
    %c0_26 = arith.constant 0 : index
    %c0_27 = arith.constant 0 : index
    %25 = vector.load %arg10[%c0_26, %c0_27] : memref<4x1xf32, #tpu.memory_space<vmem>>, vector<4x1xf32>
    %26 = arith.addf %24, %25 : vector<4x1xf32>
    %cst_28 = arith.constant dense<0xFF800000> : vector<1xf32>
    %27 = vector.multi_reduction <maximumf>, %26, %cst_28 [0] : vector<4x1xf32> to vector<1xf32>
    %28 = vector.shape_cast %27 : vector<1xf32> to vector<1x1xf32>
    %29 = vector.broadcast %28 : vector<1x1xf32> to vector<4x1xf32>
    %30 = arith.subf %26, %29 : vector<4x1xf32>
    %31 = math.exp %30 : vector<4x1xf32>
    %cst_29 = arith.constant dense<0.000000e+00> : vector<1xf32>
    %32 = vector.multi_reduction <add>, %31, %cst_29 [0] : vector<4x1xf32> to vector<1xf32>
    %33 = vector.shape_cast %32 : vector<1xf32> to vector<1x1xf32>
    %34 = vector.broadcast %33 : vector<1x1xf32> to vector<4x1xf32>
    %35 = arith.divf %31, %34 : vector<4x1xf32>
    %cst_30 = arith.constant 0.000000e+00 : f32
    %36 = vector.broadcast %cst_30 : f32 to vector<8x384xf32>
    %cst_31 = arith.constant 0.000000e+00 : f32
    %37 = vector.broadcast %cst_31 : f32 to vector<8x384xf32>
    %cst_32 = arith.constant 0.000000e+00 : f32
    %38 = vector.broadcast %cst_32 : f32 to vector<8x384xf32>
    %cst_33 = arith.constant 0.000000e+00 : f32
    %39 = vector.broadcast %cst_33 : f32 to vector<8x384xf32>
    %c0_34 = arith.constant 0 : index
    %c0_35 = arith.constant 0 : index
    %c0_36 = arith.constant 0 : index
    %40 = vector.load %arg1[%c0_34, %c0_35, %c0_36] : memref<1x8x528xf32, #tpu.memory_space<vmem>>, vector<1x8x384xf32>
    %41 = vector.shape_cast %40 : vector<1x8x384xf32> to vector<8x384xf32>
    %42 = vector.extract_strided_slice %3 {offsets = [0, 0, 0], sizes = [1, 8, 1], strides = [1, 1, 1]} : vector<49x8x1xf32> to vector<1x8x1xf32>
    %43 = vector.shape_cast %42 : vector<1x8x1xf32> to vector<8x1xf32>
    %44 = vector.broadcast %43 : vector<8x1xf32> to vector<8x384xf32>
    %45 = arith.mulf %41, %44 : vector<8x384xf32>
    %46 = arith.addf %39, %45 : vector<8x384xf32>
    %c383_i32 = arith.constant 383 : i32
    %47 = tpu.dynamic_rotate %41 by %c383_i32 dim 1 : vector<8x384xf32>, i32 -> vector<8x384xf32>
    %48 = vector.extract_strided_slice %3 {offsets = [1, 0, 0], sizes = [1, 8, 1], strides = [1, 1, 1]} : vector<49x8x1xf32> to vector<1x8x1xf32>
    %49 = vector.shape_cast %48 : vector<1x8x1xf32> to vector<8x1xf32>
    %50 = vector.broadcast %49 : vector<8x1xf32> to vector<8x384xf32>
    %51 = arith.mulf %47, %50 : vector<8x384xf32>
    %52 = arith.addf %46, %51 : vector<8x384xf32>
    %c382_i32 = arith.constant 382 : i32
    %53 = tpu.dynamic_rotate %41 by %c382_i32 dim 1 : vector<8x384xf32>, i32 -> vector<8x384xf32>
    %54 = vector.extract_strided_slice %3 {offsets = [2, 0, 0], sizes = [1, 8, 1], strides = [1, 1, 1]} : vector<49x8x1xf32> to vector<1x8x1xf32>
    %55 = vector.shape_cast %54 : vector<1x8x1xf32> to vector<8x1xf32>
    %56 = vector.broadcast %55 : vector<8x1xf32> to vector<8x384xf32>
    %57 = arith.mulf %53, %56 : vector<8x384xf32>
    %58 = arith.addf %52, %57 : vector<8x384xf32>
    %c381_i32 = arith.constant 381 : i32
    %59 = tpu.dynamic_rotate %41 by %c381_i32 dim 1 : vector<8x384xf32>, i32 -> vector<8x384xf32>
    %60 = vector.extract_strided_slice %3 {offsets = [3, 0, 0], sizes = [1, 8, 1], strides = [1, 1, 1]} : vector<49x8x1xf32> to vector<1x8x1xf32>
    %61 = vector.shape_cast %60 : vector<1x8x1xf32> to vector<8x1xf32>
    %62 = vector.broadcast %61 : vector<8x1xf32> to vector<8x384xf32>
    %63 = arith.mulf %59, %62 : vector<8x384xf32>
    %64 = arith.addf %58, %63 : vector<8x384xf32>
    %c380_i32 = arith.constant 380 : i32
    %65 = tpu.dynamic_rotate %41 by %c380_i32 dim 1 : vector<8x384xf32>, i32 -> vector<8x384xf32>
    %66 = vector.extract_strided_slice %3 {offsets = [4, 0, 0], sizes = [1, 8, 1], strides = [1, 1, 1]} : vector<49x8x1xf32> to vector<1x8x1xf32>
    %67 = vector.shape_cast %66 : vector<1x8x1xf32> to vector<8x1xf32>
    %68 = vector.broadcast %67 : vector<8x1xf32> to vector<8x384xf32>
    %69 = arith.mulf %65, %68 : vector<8x384xf32>
    %70 = arith.addf %64, %69 : vector<8x384xf32>
    %c379_i32 = arith.constant 379 : i32
    %71 = tpu.dynamic_rotate %41 by %c379_i32 dim 1 : vector<8x384xf32>, i32 -> vector<8x384xf32>
    %72 = vector.extract_strided_slice %3 {offsets = [5, 0, 0], sizes = [1, 8, 1], strides = [1, 1, 1]} : vector<49x8x1xf32> to vector<1x8x1xf32>
    %73 = vector.shape_cast %72 : vector<1x8x1xf32> to vector<8x1xf32>
    %74 = vector.broadcast %73 : vector<8x1xf32> to vector<8x384xf32>
    %75 = arith.mulf %71, %74 : vector<8x384xf32>
    %76 = arith.addf %70, %75 : vector<8x384xf32>
    %c378_i32 = arith.constant 378 : i32
    %77 = tpu.dynamic_rotate %41 by %c378_i32 dim 1 : vector<8x384xf32>, i32 -> vector<8x384xf32>
    %78 = vector.extract_strided_slice %3 {offsets = [6, 0, 0], sizes = [1, 8, 1], strides = [1, 1, 1]} : vector<49x8x1xf32> to vector<1x8x1xf32>
    %79 = vector.shape_cast %78 : vector<1x8x1xf32> to vector<8x1xf32>
    %80 = vector.broadcast %79 : vector<8x1xf32> to vector<8x384xf32>
    %81 = arith.mulf %77, %80 : vector<8x384xf32>
    %82 = arith.addf %76, %81 : vector<8x384xf32>
    %c0_37 = arith.constant 0 : index
    %c0_38 = arith.constant 0 : index
    %c24 = arith.constant 24 : index
    %83 = vector.load %arg1[%c0_37, %c0_38, %c24] : memref<1x8x528xf32, #tpu.memory_space<vmem>>, vector<1x8x384xf32>
    %84 = vector.shape_cast %83 : vector<1x8x384xf32> to vector<8x384xf32>
    %85 = vector.extract_strided_slice %3 {offsets = [7, 0, 0], sizes = [1, 8, 1], strides = [1, 1, 1]} : vector<49x8x1xf32> to vector<1x8x1xf32>
    %86 = vector.shape_cast %85 : vector<1x8x1xf32> to vector<8x1xf32>
    %87 = vector.broadcast %86 : vector<8x1xf32> to vector<8x384xf32>
    %88 = arith.mulf %84, %87 : vector<8x384xf32>
    %89 = arith.addf %82, %88 : vector<8x384xf32>
    %c383_i32_39 = arith.constant 383 : i32
    %90 = tpu.dynamic_rotate %84 by %c383_i32_39 dim 1 : vector<8x384xf32>, i32 -> vector<8x384xf32>
    %91 = vector.extract_strided_slice %2 {offsets = [0, 0, 0], sizes = [1, 8, 1], strides = [1, 1, 1]} : vector<25x8x1xf32> to vector<1x8x1xf32>
    %92 = vector.shape_cast %91 : vector<1x8x1xf32> to vector<8x1xf32>
    %93 = vector.broadcast %92 : vector<8x1xf32> to vector<8x384xf32>
    %94 = arith.mulf %90, %93 : vector<8x384xf32>
    %95 = arith.addf %38, %94 : vector<8x384xf32>
    %96 = vector.extract_strided_slice %3 {offsets = [8, 0, 0], sizes = [1, 8, 1], strides = [1, 1, 1]} : vector<49x8x1xf32> to vector<1x8x1xf32>
    %97 = vector.shape_cast %96 : vector<1x8x1xf32> to vector<8x1xf32>
    %98 = vector.broadcast %97 : vector<8x1xf32> to vector<8x384xf32>
    %99 = arith.mulf %90, %98 : vector<8x384xf32>
    %100 = arith.addf %89, %99 : vector<8x384xf32>
    %c382_i32_40 = arith.constant 382 : i32
    %101 = tpu.dynamic_rotate %84 by %c382_i32_40 dim 1 : vector<8x384xf32>, i32 -> vector<8x384xf32>
    %102 = vector.extract_strided_slice %2 {offsets = [1, 0, 0], sizes = [1, 8, 1], strides = [1, 1, 1]} : vector<25x8x1xf32> to vector<1x8x1xf32>
    %103 = vector.shape_cast %102 : vector<1x8x1xf32> to vector<8x1xf32>
    %104 = vector.broadcast %103 : vector<8x1xf32> to vector<8x384xf32>
    %105 = arith.mulf %101, %104 : vector<8x384xf32>
    %106 = arith.addf %95, %105 : vector<8x384xf32>
    %107 = vector.extract_strided_slice %3 {offsets = [9, 0, 0], sizes = [1, 8, 1], strides = [1, 1, 1]} : vector<49x8x1xf32> to vector<1x8x1xf32>
    %108 = vector.shape_cast %107 : vector<1x8x1xf32> to vector<8x1xf32>
    %109 = vector.broadcast %108 : vector<8x1xf32> to vector<8x384xf32>
    %110 = arith.mulf %101, %109 : vector<8x384xf32>
    %111 = arith.addf %100, %110 : vector<8x384xf32>
    %c381_i32_41 = arith.constant 381 : i32
    %112 = tpu.dynamic_rotate %84 by %c381_i32_41 dim 1 : vector<8x384xf32>, i32 -> vector<8x384xf32>
    %113 = vector.extract_strided_slice %2 {offsets = [2, 0, 0], sizes = [1, 8, 1], strides = [1, 1, 1]} : vector<25x8x1xf32> to vector<1x8x1xf32>
    %114 = vector.shape_cast %113 : vector<1x8x1xf32> to vector<8x1xf32>
    %115 = vector.broadcast %114 : vector<8x1xf32> to vector<8x384xf32>
    %116 = arith.mulf %112, %115 : vector<8x384xf32>
    %117 = arith.addf %106, %116 : vector<8x384xf32>
    %118 = vector.extract_strided_slice %3 {offsets = [10, 0, 0], sizes = [1, 8, 1], strides = [1, 1, 1]} : vector<49x8x1xf32> to vector<1x8x1xf32>
    %119 = vector.shape_cast %118 : vector<1x8x1xf32> to vector<8x1xf32>
    %120 = vector.broadcast %119 : vector<8x1xf32> to vector<8x384xf32>
    %121 = arith.mulf %112, %120 : vector<8x384xf32>
    %122 = arith.addf %111, %121 : vector<8x384xf32>
    %c380_i32_42 = arith.constant 380 : i32
    %123 = tpu.dynamic_rotate %84 by %c380_i32_42 dim 1 : vector<8x384xf32>, i32 -> vector<8x384xf32>
    %124 = vector.extract_strided_slice %2 {offsets = [3, 0, 0], sizes = [1, 8, 1], strides = [1, 1, 1]} : vector<25x8x1xf32> to vector<1x8x1xf32>
    %125 = vector.shape_cast %124 : vector<1x8x1xf32> to vector<8x1xf32>
    %126 = vector.broadcast %125 : vector<8x1xf32> to vector<8x384xf32>
    %127 = arith.mulf %123, %126 : vector<8x384xf32>
    %128 = arith.addf %117, %127 : vector<8x384xf32>
    %129 = vector.extract_strided_slice %3 {offsets = [11, 0, 0], sizes = [1, 8, 1], strides = [1, 1, 1]} : vector<49x8x1xf32> to vector<1x8x1xf32>
    %130 = vector.shape_cast %129 : vector<1x8x1xf32> to vector<8x1xf32>
    %131 = vector.broadcast %130 : vector<8x1xf32> to vector<8x384xf32>
    %132 = arith.mulf %123, %131 : vector<8x384xf32>
    %133 = arith.addf %122, %132 : vector<8x384xf32>
    %c379_i32_43 = arith.constant 379 : i32
    %134 = tpu.dynamic_rotate %84 by %c379_i32_43 dim 1 : vector<8x384xf32>, i32 -> vector<8x384xf32>
    %135 = vector.extract_strided_slice %2 {offsets = [4, 0, 0], sizes = [1, 8, 1], strides = [1, 1, 1]} : vector<25x8x1xf32> to vector<1x8x1xf32>
    %136 = vector.shape_cast %135 : vector<1x8x1xf32> to vector<8x1xf32>
    %137 = vector.broadcast %136 : vector<8x1xf32> to vector<8x384xf32>
    %138 = arith.mulf %134, %137 : vector<8x384xf32>
    %139 = arith.addf %128, %138 : vector<8x384xf32>
    %140 = vector.extract_strided_slice %3 {offsets = [12, 0, 0], sizes = [1, 8, 1], strides = [1, 1, 1]} : vector<49x8x1xf32> to vector<1x8x1xf32>
    %141 = vector.shape_cast %140 : vector<1x8x1xf32> to vector<8x1xf32>
    %142 = vector.broadcast %141 : vector<8x1xf32> to vector<8x384xf32>
    %143 = arith.mulf %134, %142 : vector<8x384xf32>
    %144 = arith.addf %133, %143 : vector<8x384xf32>
    %c378_i32_44 = arith.constant 378 : i32
    %145 = tpu.dynamic_rotate %84 by %c378_i32_44 dim 1 : vector<8x384xf32>, i32 -> vector<8x384xf32>
    %146 = vector.extract_strided_slice %3 {offsets = [13, 0, 0], sizes = [1, 8, 1], strides = [1, 1, 1]} : vector<49x8x1xf32> to vector<1x8x1xf32>
    %147 = vector.shape_cast %146 : vector<1x8x1xf32> to vector<8x1xf32>
    %148 = vector.broadcast %147 : vector<8x1xf32> to vector<8x384xf32>
    %149 = arith.mulf %145, %148 : vector<8x384xf32>
    %150 = arith.addf %144, %149 : vector<8x384xf32>
    %c0_45 = arith.constant 0 : index
    %c0_46 = arith.constant 0 : index
    %c48 = arith.constant 48 : index
    %151 = vector.load %arg1[%c0_45, %c0_46, %c48] : memref<1x8x528xf32, #tpu.memory_space<vmem>>, vector<1x8x384xf32>
    %152 = vector.shape_cast %151 : vector<1x8x384xf32> to vector<8x384xf32>
    %153 = vector.extract_strided_slice %3 {offsets = [14, 0, 0], sizes = [1, 8, 1], strides = [1, 1, 1]} : vector<49x8x1xf32> to vector<1x8x1xf32>
    %154 = vector.shape_cast %153 : vector<1x8x1xf32> to vector<8x1xf32>
    %155 = vector.broadcast %154 : vector<8x1xf32> to vector<8x384xf32>
    %156 = arith.mulf %152, %155 : vector<8x384xf32>
    %157 = arith.addf %150, %156 : vector<8x384xf32>
    %c383_i32_47 = arith.constant 383 : i32
    %158 = tpu.dynamic_rotate %152 by %c383_i32_47 dim 1 : vector<8x384xf32>, i32 -> vector<8x384xf32>
    %159 = vector.extract_strided_slice %2 {offsets = [5, 0, 0], sizes = [1, 8, 1], strides = [1, 1, 1]} : vector<25x8x1xf32> to vector<1x8x1xf32>
    %160 = vector.shape_cast %159 : vector<1x8x1xf32> to vector<8x1xf32>
    %161 = vector.broadcast %160 : vector<8x1xf32> to vector<8x384xf32>
    %162 = arith.mulf %158, %161 : vector<8x384xf32>
    %163 = arith.addf %139, %162 : vector<8x384xf32>
    %164 = vector.extract_strided_slice %3 {offsets = [15, 0, 0], sizes = [1, 8, 1], strides = [1, 1, 1]} : vector<49x8x1xf32> to vector<1x8x1xf32>
    %165 = vector.shape_cast %164 : vector<1x8x1xf32> to vector<8x1xf32>
    %166 = vector.broadcast %165 : vector<8x1xf32> to vector<8x384xf32>
    %167 = arith.mulf %158, %166 : vector<8x384xf32>
    %168 = arith.addf %157, %167 : vector<8x384xf32>
    %c382_i32_48 = arith.constant 382 : i32
    %169 = tpu.dynamic_rotate %152 by %c382_i32_48 dim 1 : vector<8x384xf32>, i32 -> vector<8x384xf32>
    %170 = vector.extract_strided_slice %1 {offsets = [0, 0, 0], sizes = [1, 8, 1], strides = [1, 1, 1]} : vector<9x8x1xf32> to vector<1x8x1xf32>
    %171 = vector.shape_cast %170 : vector<1x8x1xf32> to vector<8x1xf32>
    %172 = vector.broadcast %171 : vector<8x1xf32> to vector<8x384xf32>
    %173 = arith.mulf %169, %172 : vector<8x384xf32>
    %174 = arith.addf %37, %173 : vector<8x384xf32>
    %175 = vector.extract_strided_slice %2 {offsets = [6, 0, 0], sizes = [1, 8, 1], strides = [1, 1, 1]} : vector<25x8x1xf32> to vector<1x8x1xf32>
    %176 = vector.shape_cast %175 : vector<1x8x1xf32> to vector<8x1xf32>
    %177 = vector.broadcast %176 : vector<8x1xf32> to vector<8x384xf32>
    %178 = arith.mulf %169, %177 : vector<8x384xf32>
    %179 = arith.addf %163, %178 : vector<8x384xf32>
    %180 = vector.extract_strided_slice %3 {offsets = [16, 0, 0], sizes = [1, 8, 1], strides = [1, 1, 1]} : vector<49x8x1xf32> to vector<1x8x1xf32>
    %181 = vector.shape_cast %180 : vector<1x8x1xf32> to vector<8x1xf32>
    %182 = vector.broadcast %181 : vector<8x1xf32> to vector<8x384xf32>
    %183 = arith.mulf %169, %182 : vector<8x384xf32>
    %184 = arith.addf %168, %183 : vector<8x384xf32>
    %c381_i32_49 = arith.constant 381 : i32
    %185 = tpu.dynamic_rotate %152 by %c381_i32_49 dim 1 : vector<8x384xf32>, i32 -> vector<8x384xf32>
    %186 = vector.extract_strided_slice %1 {offsets = [1, 0, 0], sizes = [1, 8, 1], strides = [1, 1, 1]} : vector<9x8x1xf32> to vector<1x8x1xf32>
    %187 = vector.shape_cast %186 : vector<1x8x1xf32> to vector<8x1xf32>
    %188 = vector.broadcast %187 : vector<8x1xf32> to vector<8x384xf32>
    %189 = arith.mulf %185, %188 : vector<8x384xf32>
    %190 = arith.addf %174, %189 : vector<8x384xf32>
    %191 = vector.extract_strided_slice %2 {offsets = [7, 0, 0], sizes = [1, 8, 1], strides = [1, 1, 1]} : vector<25x8x1xf32> to vector<1x8x1xf32>
    %192 = vector.shape_cast %191 : vector<1x8x1xf32> to vector<8x1xf32>
    %193 = vector.broadcast %192 : vector<8x1xf32> to vector<8x384xf32>
    %194 = arith.mulf %185, %193 : vector<8x384xf32>
    %195 = arith.addf %179, %194 : vector<8x384xf32>
    %196 = vector.extract_strided_slice %3 {offsets = [17, 0, 0], sizes = [1, 8, 1], strides = [1, 1, 1]} : vector<49x8x1xf32> to vector<1x8x1xf32>
    %197 = vector.shape_cast %196 : vector<1x8x1xf32> to vector<8x1xf32>
    %198 = vector.broadcast %197 : vector<8x1xf32> to vector<8x384xf32>
    %199 = arith.mulf %185, %198 : vector<8x384xf32>
    %200 = arith.addf %184, %199 : vector<8x384xf32>
    %c380_i32_50 = arith.constant 380 : i32
    %201 = tpu.dynamic_rotate %152 by %c380_i32_50 dim 1 : vector<8x384xf32>, i32 -> vector<8x384xf32>
    %202 = vector.extract_strided_slice %1 {offsets = [2, 0, 0], sizes = [1, 8, 1], strides = [1, 1, 1]} : vector<9x8x1xf32> to vector<1x8x1xf32>
    %203 = vector.shape_cast %202 : vector<1x8x1xf32> to vector<8x1xf32>
    %204 = vector.broadcast %203 : vector<8x1xf32> to vector<8x384xf32>
    %205 = arith.mulf %201, %204 : vector<8x384xf32>
    %206 = arith.addf %190, %205 : vector<8x384xf32>
    %207 = vector.extract_strided_slice %2 {offsets = [8, 0, 0], sizes = [1, 8, 1], strides = [1, 1, 1]} : vector<25x8x1xf32> to vector<1x8x1xf32>
    %208 = vector.shape_cast %207 : vector<1x8x1xf32> to vector<8x1xf32>
    %209 = vector.broadcast %208 : vector<8x1xf32> to vector<8x384xf32>
    %210 = arith.mulf %201, %209 : vector<8x384xf32>
    %211 = arith.addf %195, %210 : vector<8x384xf32>
    %212 = vector.extract_strided_slice %3 {offsets = [18, 0, 0], sizes = [1, 8, 1], strides = [1, 1, 1]} : vector<49x8x1xf32> to vector<1x8x1xf32>
    %213 = vector.shape_cast %212 : vector<1x8x1xf32> to vector<8x1xf32>
    %214 = vector.broadcast %213 : vector<8x1xf32> to vector<8x384xf32>
    %215 = arith.mulf %201, %214 : vector<8x384xf32>
    %216 = arith.addf %200, %215 : vector<8x384xf32>
    %c379_i32_51 = arith.constant 379 : i32
    %217 = tpu.dynamic_rotate %152 by %c379_i32_51 dim 1 : vector<8x384xf32>, i32 -> vector<8x384xf32>
    %218 = vector.extract_strided_slice %2 {offsets = [9, 0, 0], sizes = [1, 8, 1], strides = [1, 1, 1]} : vector<25x8x1xf32> to vector<1x8x1xf32>
    %219 = vector.shape_cast %218 : vector<1x8x1xf32> to vector<8x1xf32>
    %220 = vector.broadcast %219 : vector<8x1xf32> to vector<8x384xf32>
    %221 = arith.mulf %217, %220 : vector<8x384xf32>
    %222 = arith.addf %211, %221 : vector<8x384xf32>
    %223 = vector.extract_strided_slice %3 {offsets = [19, 0, 0], sizes = [1, 8, 1], strides = [1, 1, 1]} : vector<49x8x1xf32> to vector<1x8x1xf32>
    %224 = vector.shape_cast %223 : vector<1x8x1xf32> to vector<8x1xf32>
    %225 = vector.broadcast %224 : vector<8x1xf32> to vector<8x384xf32>
    %226 = arith.mulf %217, %225 : vector<8x384xf32>
    %227 = arith.addf %216, %226 : vector<8x384xf32>
    %c378_i32_52 = arith.constant 378 : i32
    %228 = tpu.dynamic_rotate %152 by %c378_i32_52 dim 1 : vector<8x384xf32>, i32 -> vector<8x384xf32>
    %229 = vector.extract_strided_slice %3 {offsets = [20, 0, 0], sizes = [1, 8, 1], strides = [1, 1, 1]} : vector<49x8x1xf32> to vector<1x8x1xf32>
    %230 = vector.shape_cast %229 : vector<1x8x1xf32> to vector<8x1xf32>
    %231 = vector.broadcast %230 : vector<8x1xf32> to vector<8x384xf32>
    %232 = arith.mulf %228, %231 : vector<8x384xf32>
    %233 = arith.addf %227, %232 : vector<8x384xf32>
    %c0_53 = arith.constant 0 : index
    %c0_54 = arith.constant 0 : index
    %c72 = arith.constant 72 : index
    %234 = vector.load %arg1[%c0_53, %c0_54, %c72] : memref<1x8x528xf32, #tpu.memory_space<vmem>>, vector<1x8x384xf32>
    %235 = vector.shape_cast %234 : vector<1x8x384xf32> to vector<8x384xf32>
    %236 = vector.extract_strided_slice %3 {offsets = [21, 0, 0], sizes = [1, 8, 1], strides = [1, 1, 1]} : vector<49x8x1xf32> to vector<1x8x1xf32>
    %237 = vector.shape_cast %236 : vector<1x8x1xf32> to vector<8x1xf32>
    %238 = vector.broadcast %237 : vector<8x1xf32> to vector<8x384xf32>
    %239 = arith.mulf %235, %238 : vector<8x384xf32>
    %240 = arith.addf %233, %239 : vector<8x384xf32>
    %c383_i32_55 = arith.constant 383 : i32
    %241 = tpu.dynamic_rotate %235 by %c383_i32_55 dim 1 : vector<8x384xf32>, i32 -> vector<8x384xf32>
    %242 = vector.extract_strided_slice %2 {offsets = [10, 0, 0], sizes = [1, 8, 1], strides = [1, 1, 1]} : vector<25x8x1xf32> to vector<1x8x1xf32>
    %243 = vector.shape_cast %242 : vector<1x8x1xf32> to vector<8x1xf32>
    %244 = vector.broadcast %243 : vector<8x1xf32> to vector<8x384xf32>
    %245 = arith.mulf %241, %244 : vector<8x384xf32>
    %246 = arith.addf %222, %245 : vector<8x384xf32>
    %247 = vector.extract_strided_slice %3 {offsets = [22, 0, 0], sizes = [1, 8, 1], strides = [1, 1, 1]} : vector<49x8x1xf32> to vector<1x8x1xf32>
    %248 = vector.shape_cast %247 : vector<1x8x1xf32> to vector<8x1xf32>
    %249 = vector.broadcast %248 : vector<8x1xf32> to vector<8x384xf32>
    %250 = arith.mulf %241, %249 : vector<8x384xf32>
    %251 = arith.addf %240, %250 : vector<8x384xf32>
    %c382_i32_56 = arith.constant 382 : i32
    %252 = tpu.dynamic_rotate %235 by %c382_i32_56 dim 1 : vector<8x384xf32>, i32 -> vector<8x384xf32>
    %253 = vector.extract_strided_slice %1 {offsets = [3, 0, 0], sizes = [1, 8, 1], strides = [1, 1, 1]} : vector<9x8x1xf32> to vector<1x8x1xf32>
    %254 = vector.shape_cast %253 : vector<1x8x1xf32> to vector<8x1xf32>
    %255 = vector.broadcast %254 : vector<8x1xf32> to vector<8x384xf32>
    %256 = arith.mulf %252, %255 : vector<8x384xf32>
    %257 = arith.addf %206, %256 : vector<8x384xf32>
    %258 = vector.extract_strided_slice %2 {offsets = [11, 0, 0], sizes = [1, 8, 1], strides = [1, 1, 1]} : vector<25x8x1xf32> to vector<1x8x1xf32>
    %259 = vector.shape_cast %258 : vector<1x8x1xf32> to vector<8x1xf32>
    %260 = vector.broadcast %259 : vector<8x1xf32> to vector<8x384xf32>
    %261 = arith.mulf %252, %260 : vector<8x384xf32>
    %262 = arith.addf %246, %261 : vector<8x384xf32>
    %263 = vector.extract_strided_slice %3 {offsets = [23, 0, 0], sizes = [1, 8, 1], strides = [1, 1, 1]} : vector<49x8x1xf32> to vector<1x8x1xf32>
    %264 = vector.shape_cast %263 : vector<1x8x1xf32> to vector<8x1xf32>
    %265 = vector.broadcast %264 : vector<8x1xf32> to vector<8x384xf32>
    %266 = arith.mulf %252, %265 : vector<8x384xf32>
    %267 = arith.addf %251, %266 : vector<8x384xf32>
    %268 = vector.shape_cast %0 : vector<1x8x1xf32> to vector<8x1xf32>
    %269 = vector.broadcast %268 : vector<8x1xf32> to vector<8x384xf32>
    %270 = arith.mulf %6, %269 : vector<8x384xf32>
    %271 = arith.addf %36, %270 : vector<8x384xf32>
    %272 = vector.extract_strided_slice %1 {offsets = [4, 0, 0], sizes = [1, 8, 1], strides = [1, 1, 1]} : vector<9x8x1xf32> to vector<1x8x1xf32>
    %273 = vector.shape_cast %272 : vector<1x8x1xf32> to vector<8x1xf32>
    %274 = vector.broadcast %273 : vector<8x1xf32> to vector<8x384xf32>
    %275 = arith.mulf %6, %274 : vector<8x384xf32>
    %276 = arith.addf %257, %275 : vector<8x384xf32>
    %277 = vector.extract_strided_slice %2 {offsets = [12, 0, 0], sizes = [1, 8, 1], strides = [1, 1, 1]} : vector<25x8x1xf32> to vector<1x8x1xf32>
    %278 = vector.shape_cast %277 : vector<1x8x1xf32> to vector<8x1xf32>
    %279 = vector.broadcast %278 : vector<8x1xf32> to vector<8x384xf32>
    %280 = arith.mulf %6, %279 : vector<8x384xf32>
    %281 = arith.addf %262, %280 : vector<8x384xf32>
    %282 = vector.extract_strided_slice %3 {offsets = [24, 0, 0], sizes = [1, 8, 1], strides = [1, 1, 1]} : vector<49x8x1xf32> to vector<1x8x1xf32>
    %283 = vector.shape_cast %282 : vector<1x8x1xf32> to vector<8x1xf32>
    %284 = vector.broadcast %283 : vector<8x1xf32> to vector<8x384xf32>
    %285 = arith.mulf %6, %284 : vector<8x384xf32>
    %286 = arith.addf %267, %285 : vector<8x384xf32>
    %c380_i32_57 = arith.constant 380 : i32
    %287 = tpu.dynamic_rotate %235 by %c380_i32_57 dim 1 : vector<8x384xf32>, i32 -> vector<8x384xf32>
    %288 = vector.extract_strided_slice %1 {offsets = [5, 0, 0], sizes = [1, 8, 1], strides = [1, 1, 1]} : vector<9x8x1xf32> to vector<1x8x1xf32>
    %289 = vector.shape_cast %288 : vector<1x8x1xf32> to vector<8x1xf32>
    %290 = vector.broadcast %289 : vector<8x1xf32> to vector<8x384xf32>
    %291 = arith.mulf %287, %290 : vector<8x384xf32>
    %292 = arith.addf %276, %291 : vector<8x384xf32>
    %293 = vector.extract_strided_slice %2 {offsets = [13, 0, 0], sizes = [1, 8, 1], strides = [1, 1, 1]} : vector<25x8x1xf32> to vector<1x8x1xf32>
    %294 = vector.shape_cast %293 : vector<1x8x1xf32> to vector<8x1xf32>
    %295 = vector.broadcast %294 : vector<8x1xf32> to vector<8x384xf32>
    %296 = arith.mulf %287, %295 : vector<8x384xf32>
    %297 = arith.addf %281, %296 : vector<8x384xf32>
    %298 = vector.extract_strided_slice %3 {offsets = [25, 0, 0], sizes = [1, 8, 1], strides = [1, 1, 1]} : vector<49x8x1xf32> to vector<1x8x1xf32>
    %299 = vector.shape_cast %298 : vector<1x8x1xf32> to vector<8x1xf32>
    %300 = vector.broadcast %299 : vector<8x1xf32> to vector<8x384xf32>
    %301 = arith.mulf %287, %300 : vector<8x384xf32>
    %302 = arith.addf %286, %301 : vector<8x384xf32>
    %c379_i32_58 = arith.constant 379 : i32
    %303 = tpu.dynamic_rotate %235 by %c379_i32_58 dim 1 : vector<8x384xf32>, i32 -> vector<8x384xf32>
    %304 = vector.extract_strided_slice %2 {offsets = [14, 0, 0], sizes = [1, 8, 1], strides = [1, 1, 1]} : vector<25x8x1xf32> to vector<1x8x1xf32>
    %305 = vector.shape_cast %304 : vector<1x8x1xf32> to vector<8x1xf32>
    %306 = vector.broadcast %305 : vector<8x1xf32> to vector<8x384xf32>
    %307 = arith.mulf %303, %306 : vector<8x384xf32>
    %308 = arith.addf %297, %307 : vector<8x384xf32>
    %309 = vector.extract_strided_slice %3 {offsets = [26, 0, 0], sizes = [1, 8, 1], strides = [1, 1, 1]} : vector<49x8x1xf32> to vector<1x8x1xf32>
    %310 = vector.shape_cast %309 : vector<1x8x1xf32> to vector<8x1xf32>
    %311 = vector.broadcast %310 : vector<8x1xf32> to vector<8x384xf32>
    %312 = arith.mulf %303, %311 : vector<8x384xf32>
    %313 = arith.addf %302, %312 : vector<8x384xf32>
    %c378_i32_59 = arith.constant 378 : i32
    %314 = tpu.dynamic_rotate %235 by %c378_i32_59 dim 1 : vector<8x384xf32>, i32 -> vector<8x384xf32>
    %315 = vector.extract_strided_slice %3 {offsets = [27, 0, 0], sizes = [1, 8, 1], strides = [1, 1, 1]} : vector<49x8x1xf32> to vector<1x8x1xf32>
    %316 = vector.shape_cast %315 : vector<1x8x1xf32> to vector<8x1xf32>
    %317 = vector.broadcast %316 : vector<8x1xf32> to vector<8x384xf32>
    %318 = arith.mulf %314, %317 : vector<8x384xf32>
    %319 = arith.addf %313, %318 : vector<8x384xf32>
    %c0_60 = arith.constant 0 : index
    %c0_61 = arith.constant 0 : index
    %c96 = arith.constant 96 : index
    %320 = vector.load %arg1[%c0_60, %c0_61, %c96] : memref<1x8x528xf32, #tpu.memory_space<vmem>>, vector<1x8x384xf32>
    %321 = vector.shape_cast %320 : vector<1x8x384xf32> to vector<8x384xf32>
    %322 = vector.extract_strided_slice %3 {offsets = [28, 0, 0], sizes = [1, 8, 1], strides = [1, 1, 1]} : vector<49x8x1xf32> to vector<1x8x1xf32>
    %323 = vector.shape_cast %322 : vector<1x8x1xf32> to vector<8x1xf32>
    %324 = vector.broadcast %323 : vector<8x1xf32> to vector<8x384xf32>
    %325 = arith.mulf %321, %324 : vector<8x384xf32>
    %326 = arith.addf %319, %325 : vector<8x384xf32>
    %c383_i32_62 = arith.constant 383 : i32
    %327 = tpu.dynamic_rotate %321 by %c383_i32_62 dim 1 : vector<8x384xf32>, i32 -> vector<8x384xf32>
    %328 = vector.extract_strided_slice %2 {offsets = [15, 0, 0], sizes = [1, 8, 1], strides = [1, 1, 1]} : vector<25x8x1xf32> to vector<1x8x1xf32>
    %329 = vector.shape_cast %328 : vector<1x8x1xf32> to vector<8x1xf32>
    %330 = vector.broadcast %329 : vector<8x1xf32> to vector<8x384xf32>
    %331 = arith.mulf %327, %330 : vector<8x384xf32>
    %332 = arith.addf %308, %331 : vector<8x384xf32>
    %333 = vector.extract_strided_slice %3 {offsets = [29, 0, 0], sizes = [1, 8, 1], strides = [1, 1, 1]} : vector<49x8x1xf32> to vector<1x8x1xf32>
    %334 = vector.shape_cast %333 : vector<1x8x1xf32> to vector<8x1xf32>
    %335 = vector.broadcast %334 : vector<8x1xf32> to vector<8x384xf32>
    %336 = arith.mulf %327, %335 : vector<8x384xf32>
    %337 = arith.addf %326, %336 : vector<8x384xf32>
    %c382_i32_63 = arith.constant 382 : i32
    %338 = tpu.dynamic_rotate %321 by %c382_i32_63 dim 1 : vector<8x384xf32>, i32 -> vector<8x384xf32>
    %339 = vector.extract_strided_slice %1 {offsets = [6, 0, 0], sizes = [1, 8, 1], strides = [1, 1, 1]} : vector<9x8x1xf32> to vector<1x8x1xf32>
    %340 = vector.shape_cast %339 : vector<1x8x1xf32> to vector<8x1xf32>
    %341 = vector.broadcast %340 : vector<8x1xf32> to vector<8x384xf32>
    %342 = arith.mulf %338, %341 : vector<8x384xf32>
    %343 = arith.addf %292, %342 : vector<8x384xf32>
    %344 = vector.extract_strided_slice %2 {offsets = [16, 0, 0], sizes = [1, 8, 1], strides = [1, 1, 1]} : vector<25x8x1xf32> to vector<1x8x1xf32>
    %345 = vector.shape_cast %344 : vector<1x8x1xf32> to vector<8x1xf32>
    %346 = vector.broadcast %345 : vector<8x1xf32> to vector<8x384xf32>
    %347 = arith.mulf %338, %346 : vector<8x384xf32>
    %348 = arith.addf %332, %347 : vector<8x384xf32>
    %349 = vector.extract_strided_slice %3 {offsets = [30, 0, 0], sizes = [1, 8, 1], strides = [1, 1, 1]} : vector<49x8x1xf32> to vector<1x8x1xf32>
    %350 = vector.shape_cast %349 : vector<1x8x1xf32> to vector<8x1xf32>
    %351 = vector.broadcast %350 : vector<8x1xf32> to vector<8x384xf32>
    %352 = arith.mulf %338, %351 : vector<8x384xf32>
    %353 = arith.addf %337, %352 : vector<8x384xf32>
    %c381_i32_64 = arith.constant 381 : i32
    %354 = tpu.dynamic_rotate %321 by %c381_i32_64 dim 1 : vector<8x384xf32>, i32 -> vector<8x384xf32>
    %355 = vector.extract_strided_slice %1 {offsets = [7, 0, 0], sizes = [1, 8, 1], strides = [1, 1, 1]} : vector<9x8x1xf32> to vector<1x8x1xf32>
    %356 = vector.shape_cast %355 : vector<1x8x1xf32> to vector<8x1xf32>
    %357 = vector.broadcast %356 : vector<8x1xf32> to vector<8x384xf32>
    %358 = arith.mulf %354, %357 : vector<8x384xf32>
    %359 = arith.addf %343, %358 : vector<8x384xf32>
    %360 = vector.extract_strided_slice %2 {offsets = [17, 0, 0], sizes = [1, 8, 1], strides = [1, 1, 1]} : vector<25x8x1xf32> to vector<1x8x1xf32>
    %361 = vector.shape_cast %360 : vector<1x8x1xf32> to vector<8x1xf32>
    %362 = vector.broadcast %361 : vector<8x1xf32> to vector<8x384xf32>
    %363 = arith.mulf %354, %362 : vector<8x384xf32>
    %364 = arith.addf %348, %363 : vector<8x384xf32>
    %365 = vector.extract_strided_slice %3 {offsets = [31, 0, 0], sizes = [1, 8, 1], strides = [1, 1, 1]} : vector<49x8x1xf32> to vector<1x8x1xf32>
    %366 = vector.shape_cast %365 : vector<1x8x1xf32> to vector<8x1xf32>
    %367 = vector.broadcast %366 : vector<8x1xf32> to vector<8x384xf32>
    %368 = arith.mulf %354, %367 : vector<8x384xf32>
    %369 = arith.addf %353, %368 : vector<8x384xf32>
    %c380_i32_65 = arith.constant 380 : i32
    %370 = tpu.dynamic_rotate %321 by %c380_i32_65 dim 1 : vector<8x384xf32>, i32 -> vector<8x384xf32>
    %371 = vector.extract_strided_slice %1 {offsets = [8, 0, 0], sizes = [1, 8, 1], strides = [1, 1, 1]} : vector<9x8x1xf32> to vector<1x8x1xf32>
    %372 = vector.shape_cast %371 : vector<1x8x1xf32> to vector<8x1xf32>
    %373 = vector.broadcast %372 : vector<8x1xf32> to vector<8x384xf32>
    %374 = arith.mulf %370, %373 : vector<8x384xf32>
    %375 = arith.addf %359, %374 : vector<8x384xf32>
    %376 = vector.extract_strided_slice %2 {offsets = [18, 0, 0], sizes = [1, 8, 1], strides = [1, 1, 1]} : vector<25x8x1xf32> to vector<1x8x1xf32>
    %377 = vector.shape_cast %376 : vector<1x8x1xf32> to vector<8x1xf32>
    %378 = vector.broadcast %377 : vector<8x1xf32> to vector<8x384xf32>
    %379 = arith.mulf %370, %378 : vector<8x384xf32>
    %380 = arith.addf %364, %379 : vector<8x384xf32>
    %381 = vector.extract_strided_slice %3 {offsets = [32, 0, 0], sizes = [1, 8, 1], strides = [1, 1, 1]} : vector<49x8x1xf32> to vector<1x8x1xf32>
    %382 = vector.shape_cast %381 : vector<1x8x1xf32> to vector<8x1xf32>
    %383 = vector.broadcast %382 : vector<8x1xf32> to vector<8x384xf32>
    %384 = arith.mulf %370, %383 : vector<8x384xf32>
    %385 = arith.addf %369, %384 : vector<8x384xf32>
    %c379_i32_66 = arith.constant 379 : i32
    %386 = tpu.dynamic_rotate %321 by %c379_i32_66 dim 1 : vector<8x384xf32>, i32 -> vector<8x384xf32>
    %387 = vector.extract_strided_slice %2 {offsets = [19, 0, 0], sizes = [1, 8, 1], strides = [1, 1, 1]} : vector<25x8x1xf32> to vector<1x8x1xf32>
    %388 = vector.shape_cast %387 : vector<1x8x1xf32> to vector<8x1xf32>
    %389 = vector.broadcast %388 : vector<8x1xf32> to vector<8x384xf32>
    %390 = arith.mulf %386, %389 : vector<8x384xf32>
    %391 = arith.addf %380, %390 : vector<8x384xf32>
    %392 = vector.extract_strided_slice %3 {offsets = [33, 0, 0], sizes = [1, 8, 1], strides = [1, 1, 1]} : vector<49x8x1xf32> to vector<1x8x1xf32>
    %393 = vector.shape_cast %392 : vector<1x8x1xf32> to vector<8x1xf32>
    %394 = vector.broadcast %393 : vector<8x1xf32> to vector<8x384xf32>
    %395 = arith.mulf %386, %394 : vector<8x384xf32>
    %396 = arith.addf %385, %395 : vector<8x384xf32>
    %c378_i32_67 = arith.constant 378 : i32
    %397 = tpu.dynamic_rotate %321 by %c378_i32_67 dim 1 : vector<8x384xf32>, i32 -> vector<8x384xf32>
    %398 = vector.extract_strided_slice %3 {offsets = [34, 0, 0], sizes = [1, 8, 1], strides = [1, 1, 1]} : vector<49x8x1xf32> to vector<1x8x1xf32>
    %399 = vector.shape_cast %398 : vector<1x8x1xf32> to vector<8x1xf32>
    %400 = vector.broadcast %399 : vector<8x1xf32> to vector<8x384xf32>
    %401 = arith.mulf %397, %400 : vector<8x384xf32>
    %402 = arith.addf %396, %401 : vector<8x384xf32>
    %c0_68 = arith.constant 0 : index
    %c0_69 = arith.constant 0 : index
    %c120 = arith.constant 120 : index
    %403 = vector.load %arg1[%c0_68, %c0_69, %c120] : memref<1x8x528xf32, #tpu.memory_space<vmem>>, vector<1x8x384xf32>
    %404 = vector.shape_cast %403 : vector<1x8x384xf32> to vector<8x384xf32>
    %405 = vector.extract_strided_slice %3 {offsets = [35, 0, 0], sizes = [1, 8, 1], strides = [1, 1, 1]} : vector<49x8x1xf32> to vector<1x8x1xf32>
    %406 = vector.shape_cast %405 : vector<1x8x1xf32> to vector<8x1xf32>
    %407 = vector.broadcast %406 : vector<8x1xf32> to vector<8x384xf32>
    %408 = arith.mulf %404, %407 : vector<8x384xf32>
    %409 = arith.addf %402, %408 : vector<8x384xf32>
    %c383_i32_70 = arith.constant 383 : i32
    %410 = tpu.dynamic_rotate %404 by %c383_i32_70 dim 1 : vector<8x384xf32>, i32 -> vector<8x384xf32>
    %411 = vector.extract_strided_slice %2 {offsets = [20, 0, 0], sizes = [1, 8, 1], strides = [1, 1, 1]} : vector<25x8x1xf32> to vector<1x8x1xf32>
    %412 = vector.shape_cast %411 : vector<1x8x1xf32> to vector<8x1xf32>
    %413 = vector.broadcast %412 : vector<8x1xf32> to vector<8x384xf32>
    %414 = arith.mulf %410, %413 : vector<8x384xf32>
    %415 = arith.addf %391, %414 : vector<8x384xf32>
    %416 = vector.extract_strided_slice %3 {offsets = [36, 0, 0], sizes = [1, 8, 1], strides = [1, 1, 1]} : vector<49x8x1xf32> to vector<1x8x1xf32>
    %417 = vector.shape_cast %416 : vector<1x8x1xf32> to vector<8x1xf32>
    %418 = vector.broadcast %417 : vector<8x1xf32> to vector<8x384xf32>
    %419 = arith.mulf %410, %418 : vector<8x384xf32>
    %420 = arith.addf %409, %419 : vector<8x384xf32>
    %c382_i32_71 = arith.constant 382 : i32
    %421 = tpu.dynamic_rotate %404 by %c382_i32_71 dim 1 : vector<8x384xf32>, i32 -> vector<8x384xf32>
    %422 = vector.extract_strided_slice %2 {offsets = [21, 0, 0], sizes = [1, 8, 1], strides = [1, 1, 1]} : vector<25x8x1xf32> to vector<1x8x1xf32>
    %423 = vector.shape_cast %422 : vector<1x8x1xf32> to vector<8x1xf32>
    %424 = vector.broadcast %423 : vector<8x1xf32> to vector<8x384xf32>
    %425 = arith.mulf %421, %424 : vector<8x384xf32>
    %426 = arith.addf %415, %425 : vector<8x384xf32>
    %427 = vector.extract_strided_slice %3 {offsets = [37, 0, 0], sizes = [1, 8, 1], strides = [1, 1, 1]} : vector<49x8x1xf32> to vector<1x8x1xf32>
    %428 = vector.shape_cast %427 : vector<1x8x1xf32> to vector<8x1xf32>
    %429 = vector.broadcast %428 : vector<8x1xf32> to vector<8x384xf32>
    %430 = arith.mulf %421, %429 : vector<8x384xf32>
    %431 = arith.addf %420, %430 : vector<8x384xf32>
    %c381_i32_72 = arith.constant 381 : i32
    %432 = tpu.dynamic_rotate %404 by %c381_i32_72 dim 1 : vector<8x384xf32>, i32 -> vector<8x384xf32>
    %433 = vector.extract_strided_slice %2 {offsets = [22, 0, 0], sizes = [1, 8, 1], strides = [1, 1, 1]} : vector<25x8x1xf32> to vector<1x8x1xf32>
    %434 = vector.shape_cast %433 : vector<1x8x1xf32> to vector<8x1xf32>
    %435 = vector.broadcast %434 : vector<8x1xf32> to vector<8x384xf32>
    %436 = arith.mulf %432, %435 : vector<8x384xf32>
    %437 = arith.addf %426, %436 : vector<8x384xf32>
    %438 = vector.extract_strided_slice %3 {offsets = [38, 0, 0], sizes = [1, 8, 1], strides = [1, 1, 1]} : vector<49x8x1xf32> to vector<1x8x1xf32>
    %439 = vector.shape_cast %438 : vector<1x8x1xf32> to vector<8x1xf32>
    %440 = vector.broadcast %439 : vector<8x1xf32> to vector<8x384xf32>
    %441 = arith.mulf %432, %440 : vector<8x384xf32>
    %442 = arith.addf %431, %441 : vector<8x384xf32>
    %c380_i32_73 = arith.constant 380 : i32
    %443 = tpu.dynamic_rotate %404 by %c380_i32_73 dim 1 : vector<8x384xf32>, i32 -> vector<8x384xf32>
    %444 = vector.extract_strided_slice %2 {offsets = [23, 0, 0], sizes = [1, 8, 1], strides = [1, 1, 1]} : vector<25x8x1xf32> to vector<1x8x1xf32>
    %445 = vector.shape_cast %444 : vector<1x8x1xf32> to vector<8x1xf32>
    %446 = vector.broadcast %445 : vector<8x1xf32> to vector<8x384xf32>
    %447 = arith.mulf %443, %446 : vector<8x384xf32>
    %448 = arith.addf %437, %447 : vector<8x384xf32>
    %449 = vector.extract_strided_slice %3 {offsets = [39, 0, 0], sizes = [1, 8, 1], strides = [1, 1, 1]} : vector<49x8x1xf32> to vector<1x8x1xf32>
    %450 = vector.shape_cast %449 : vector<1x8x1xf32> to vector<8x1xf32>
    %451 = vector.broadcast %450 : vector<8x1xf32> to vector<8x384xf32>
    %452 = arith.mulf %443, %451 : vector<8x384xf32>
    %453 = arith.addf %442, %452 : vector<8x384xf32>
    %c379_i32_74 = arith.constant 379 : i32
    %454 = tpu.dynamic_rotate %404 by %c379_i32_74 dim 1 : vector<8x384xf32>, i32 -> vector<8x384xf32>
    %455 = vector.extract_strided_slice %2 {offsets = [24, 0, 0], sizes = [1, 8, 1], strides = [1, 1, 1]} : vector<25x8x1xf32> to vector<1x8x1xf32>
    %456 = vector.shape_cast %455 : vector<1x8x1xf32> to vector<8x1xf32>
    %457 = vector.broadcast %456 : vector<8x1xf32> to vector<8x384xf32>
    %458 = arith.mulf %454, %457 : vector<8x384xf32>
    %459 = arith.addf %448, %458 : vector<8x384xf32>
    %460 = vector.extract_strided_slice %3 {offsets = [40, 0, 0], sizes = [1, 8, 1], strides = [1, 1, 1]} : vector<49x8x1xf32> to vector<1x8x1xf32>
    %461 = vector.shape_cast %460 : vector<1x8x1xf32> to vector<8x1xf32>
    %462 = vector.broadcast %461 : vector<8x1xf32> to vector<8x384xf32>
    %463 = arith.mulf %454, %462 : vector<8x384xf32>
    %464 = arith.addf %453, %463 : vector<8x384xf32>
    %c378_i32_75 = arith.constant 378 : i32
    %465 = tpu.dynamic_rotate %404 by %c378_i32_75 dim 1 : vector<8x384xf32>, i32 -> vector<8x384xf32>
    %466 = vector.extract_strided_slice %3 {offsets = [41, 0, 0], sizes = [1, 8, 1], strides = [1, 1, 1]} : vector<49x8x1xf32> to vector<1x8x1xf32>
    %467 = vector.shape_cast %466 : vector<1x8x1xf32> to vector<8x1xf32>
    %468 = vector.broadcast %467 : vector<8x1xf32> to vector<8x384xf32>
    %469 = arith.mulf %465, %468 : vector<8x384xf32>
    %470 = arith.addf %464, %469 : vector<8x384xf32>
    %c0_76 = arith.constant 0 : index
    %c0_77 = arith.constant 0 : index
    %c144 = arith.constant 144 : index
    %471 = vector.load %arg1[%c0_76, %c0_77, %c144] : memref<1x8x528xf32, #tpu.memory_space<vmem>>, vector<1x8x384xf32>
    %472 = vector.shape_cast %471 : vector<1x8x384xf32> to vector<8x384xf32>
    %473 = vector.extract_strided_slice %3 {offsets = [42, 0, 0], sizes = [1, 8, 1], strides = [1, 1, 1]} : vector<49x8x1xf32> to vector<1x8x1xf32>
    %474 = vector.shape_cast %473 : vector<1x8x1xf32> to vector<8x1xf32>
    %475 = vector.broadcast %474 : vector<8x1xf32> to vector<8x384xf32>
    %476 = arith.mulf %472, %475 : vector<8x384xf32>
    %477 = arith.addf %470, %476 : vector<8x384xf32>
    %c383_i32_78 = arith.constant 383 : i32
    %478 = tpu.dynamic_rotate %472 by %c383_i32_78 dim 1 : vector<8x384xf32>, i32 -> vector<8x384xf32>
    %479 = vector.extract_strided_slice %3 {offsets = [43, 0, 0], sizes = [1, 8, 1], strides = [1, 1, 1]} : vector<49x8x1xf32> to vector<1x8x1xf32>
    %480 = vector.shape_cast %479 : vector<1x8x1xf32> to vector<8x1xf32>
    %481 = vector.broadcast %480 : vector<8x1xf32> to vector<8x384xf32>
    %482 = arith.mulf %478, %481 : vector<8x384xf32>
    %483 = arith.addf %477, %482 : vector<8x384xf32>
    %c382_i32_79 = arith.constant 382 : i32
    %484 = tpu.dynamic_rotate %472 by %c382_i32_79 dim 1 : vector<8x384xf32>, i32 -> vector<8x384xf32>
    %485 = vector.extract_strided_slice %3 {offsets = [44, 0, 0], sizes = [1, 8, 1], strides = [1, 1, 1]} : vector<49x8x1xf32> to vector<1x8x1xf32>
    %486 = vector.shape_cast %485 : vector<1x8x1xf32> to vector<8x1xf32>
    %487 = vector.broadcast %486 : vector<8x1xf32> to vector<8x384xf32>
    %488 = arith.mulf %484, %487 : vector<8x384xf32>
    %489 = arith.addf %483, %488 : vector<8x384xf32>
    %c381_i32_80 = arith.constant 381 : i32
    %490 = tpu.dynamic_rotate %472 by %c381_i32_80 dim 1 : vector<8x384xf32>, i32 -> vector<8x384xf32>
    %491 = vector.extract_strided_slice %3 {offsets = [45, 0, 0], sizes = [1, 8, 1], strides = [1, 1, 1]} : vector<49x8x1xf32> to vector<1x8x1xf32>
    %492 = vector.shape_cast %491 : vector<1x8x1xf32> to vector<8x1xf32>
    %493 = vector.broadcast %492 : vector<8x1xf32> to vector<8x384xf32>
    %494 = arith.mulf %490, %493 : vector<8x384xf32>
    %495 = arith.addf %489, %494 : vector<8x384xf32>
    %c380_i32_81 = arith.constant 380 : i32
    %496 = tpu.dynamic_rotate %472 by %c380_i32_81 dim 1 : vector<8x384xf32>, i32 -> vector<8x384xf32>
    %497 = vector.extract_strided_slice %3 {offsets = [46, 0, 0], sizes = [1, 8, 1], strides = [1, 1, 1]} : vector<49x8x1xf32> to vector<1x8x1xf32>
    %498 = vector.shape_cast %497 : vector<1x8x1xf32> to vector<8x1xf32>
    %499 = vector.broadcast %498 : vector<8x1xf32> to vector<8x384xf32>
    %500 = arith.mulf %496, %499 : vector<8x384xf32>
    %501 = arith.addf %495, %500 : vector<8x384xf32>
    %c379_i32_82 = arith.constant 379 : i32
    %502 = tpu.dynamic_rotate %472 by %c379_i32_82 dim 1 : vector<8x384xf32>, i32 -> vector<8x384xf32>
    %503 = vector.extract_strided_slice %3 {offsets = [47, 0, 0], sizes = [1, 8, 1], strides = [1, 1, 1]} : vector<49x8x1xf32> to vector<1x8x1xf32>
    %504 = vector.shape_cast %503 : vector<1x8x1xf32> to vector<8x1xf32>
    %505 = vector.broadcast %504 : vector<8x1xf32> to vector<8x384xf32>
    %506 = arith.mulf %502, %505 : vector<8x384xf32>
    %507 = arith.addf %501, %506 : vector<8x384xf32>
    %c378_i32_83 = arith.constant 378 : i32
    %508 = tpu.dynamic_rotate %472 by %c378_i32_83 dim 1 : vector<8x384xf32>, i32 -> vector<8x384xf32>
    %509 = vector.extract_strided_slice %3 {offsets = [48, 0, 0], sizes = [1, 8, 1], strides = [1, 1, 1]} : vector<49x8x1xf32> to vector<1x8x1xf32>
    %510 = vector.shape_cast %509 : vector<1x8x1xf32> to vector<8x1xf32>
    %511 = vector.broadcast %510 : vector<8x1xf32> to vector<8x384xf32>
    %512 = arith.mulf %508, %511 : vector<8x384xf32>
    %513 = arith.addf %507, %512 : vector<8x384xf32>
    %cst_84 = arith.constant 0.000000e+00 : f32
    %514 = vector.broadcast %cst_84 : f32 to vector<8x384xf32>
    %515 = vector.extract_strided_slice %4 {offsets = [0, 0, 0], sizes = [1, 8, 1], strides = [1, 1, 1]} : vector<4x8x1xf32> to vector<1x8x1xf32>
    %516 = vector.shape_cast %515 : vector<1x8x1xf32> to vector<8x1xf32>
    %517 = vector.broadcast %516 : vector<8x1xf32> to vector<8x384xf32>
    %518 = arith.addf %271, %517 : vector<8x384xf32>
    %519 = arith.negf %518 : vector<8x384xf32>
    %520 = math.exp %519 : vector<8x384xf32>
    %cst_85 = arith.constant 1.000000e+00 : f32
    %521 = vector.broadcast %cst_85 : f32 to vector<8x384xf32>
    %522 = arith.addf %521, %520 : vector<8x384xf32>
    %523 = arith.divf %521, %522 : vector<8x384xf32>
    %524 = arith.mulf %518, %523 : vector<8x384xf32>
    %525 = vector.extract_strided_slice %35 {offsets = [0, 0], sizes = [1, 1], strides = [1, 1]} : vector<4x1xf32> to vector<1x1xf32>
    %526 = vector.broadcast %525 : vector<1x1xf32> to vector<8x384xf32>
    %527 = arith.mulf %524, %526 : vector<8x384xf32>
    %528 = arith.addf %514, %527 : vector<8x384xf32>
    %529 = vector.extract_strided_slice %4 {offsets = [1, 0, 0], sizes = [1, 8, 1], strides = [1, 1, 1]} : vector<4x8x1xf32> to vector<1x8x1xf32>
    %530 = vector.shape_cast %529 : vector<1x8x1xf32> to vector<8x1xf32>
    %531 = vector.broadcast %530 : vector<8x1xf32> to vector<8x384xf32>
    %532 = arith.addf %375, %531 : vector<8x384xf32>
    %533 = arith.negf %532 : vector<8x384xf32>
    %534 = math.exp %533 : vector<8x384xf32>
    %cst_86 = arith.constant 1.000000e+00 : f32
    %535 = vector.broadcast %cst_86 : f32 to vector<8x384xf32>
    %536 = arith.addf %535, %534 : vector<8x384xf32>
    %537 = arith.divf %535, %536 : vector<8x384xf32>
    %538 = arith.mulf %532, %537 : vector<8x384xf32>
    %539 = vector.extract_strided_slice %35 {offsets = [1, 0], sizes = [1, 1], strides = [1, 1]} : vector<4x1xf32> to vector<1x1xf32>
    %540 = vector.broadcast %539 : vector<1x1xf32> to vector<8x384xf32>
    %541 = arith.mulf %538, %540 : vector<8x384xf32>
    %542 = arith.addf %528, %541 : vector<8x384xf32>
    %543 = vector.extract_strided_slice %4 {offsets = [2, 0, 0], sizes = [1, 8, 1], strides = [1, 1, 1]} : vector<4x8x1xf32> to vector<1x8x1xf32>
    %544 = vector.shape_cast %543 : vector<1x8x1xf32> to vector<8x1xf32>
    %545 = vector.broadcast %544 : vector<8x1xf32> to vector<8x384xf32>
    %546 = arith.addf %459, %545 : vector<8x384xf32>
    %547 = arith.negf %546 : vector<8x384xf32>
    %548 = math.exp %547 : vector<8x384xf32>
    %cst_87 = arith.constant 1.000000e+00 : f32
    %549 = vector.broadcast %cst_87 : f32 to vector<8x384xf32>
    %550 = arith.addf %549, %548 : vector<8x384xf32>
    %551 = arith.divf %549, %550 : vector<8x384xf32>
    %552 = arith.mulf %546, %551 : vector<8x384xf32>
    %553 = vector.extract_strided_slice %35 {offsets = [2, 0], sizes = [1, 1], strides = [1, 1]} : vector<4x1xf32> to vector<1x1xf32>
    %554 = vector.broadcast %553 : vector<1x1xf32> to vector<8x384xf32>
    %555 = arith.mulf %552, %554 : vector<8x384xf32>
    %556 = arith.addf %542, %555 : vector<8x384xf32>
    %557 = vector.extract_strided_slice %4 {offsets = [3, 0, 0], sizes = [1, 8, 1], strides = [1, 1, 1]} : vector<4x8x1xf32> to vector<1x8x1xf32>
    %558 = vector.shape_cast %557 : vector<1x8x1xf32> to vector<8x1xf32>
    %559 = vector.broadcast %558 : vector<8x1xf32> to vector<8x384xf32>
    %560 = arith.addf %513, %559 : vector<8x384xf32>
    %561 = arith.negf %560 : vector<8x384xf32>
    %562 = math.exp %561 : vector<8x384xf32>
    %cst_88 = arith.constant 1.000000e+00 : f32
    %563 = vector.broadcast %cst_88 : f32 to vector<8x384xf32>
    %564 = arith.addf %563, %562 : vector<8x384xf32>
    %565 = arith.divf %563, %564 : vector<8x384xf32>
    %566 = arith.mulf %560, %565 : vector<8x384xf32>
    %567 = vector.extract_strided_slice %35 {offsets = [3, 0], sizes = [1, 1], strides = [1, 1]} : vector<4x1xf32> to vector<1x1xf32>
    %568 = vector.broadcast %567 : vector<1x1xf32> to vector<8x384xf32>
    %569 = arith.mulf %566, %568 : vector<8x384xf32>
    %570 = arith.addf %556, %569 : vector<8x384xf32>
    %c0_89 = arith.constant 0 : index
    %c0_90 = arith.constant 0 : index
    %571 = vector.load %arg11[%c0_89, %c0_90] : memref<8x8xf32, #tpu.memory_space<vmem>>, vector<8x8xf32>
    %cst_91 = arith.constant dense<0.000000e+00> : vector<8x384xf32>
    %572 = tpu.matmul %571, %570, %cst_91 {dimension_numbers = #tpu.dot_dimension_numbers<[1], [0], [0], [1], [0, 0, 1, 1], [], []>} : vector<8x8xf32>, vector<8x384xf32>, vector<8x384xf32> -> vector<8x384xf32>
    %c0_92 = arith.constant 0 : index
    %c0_93 = arith.constant 0 : index
    %573 = vector.load %arg12[%c0_92, %c0_93] : memref<8x1xf32, #tpu.memory_space<vmem>>, vector<8x1xf32>
    %574 = vector.broadcast %573 : vector<8x1xf32> to vector<8x384xf32>
    %575 = arith.addf %572, %574 : vector<8x384xf32>
    %576 = arith.negf %575 : vector<8x384xf32>
    %577 = math.exp %576 : vector<8x384xf32>
    %cst_94 = arith.constant 1.000000e+00 : f32
    %578 = vector.broadcast %cst_94 : f32 to vector<8x384xf32>
    %579 = arith.addf %578, %577 : vector<8x384xf32>
    %580 = arith.divf %578, %579 : vector<8x384xf32>
    %cst_95 = arith.constant 1.000000e+00 : f32
    %581 = vector.broadcast %cst_95 : f32 to vector<8x384xf32>
    %582 = arith.addf %580, %581 : vector<8x384xf32>
    %583 = arith.mulf %6, %582 : vector<8x384xf32>
    %c0_96 = arith.constant 0 : index
    %c0_97 = arith.constant 0 : index
    %c0_98 = arith.constant 0 : index
    %584 = vector.load %arg13[%c0_96, %c0_97, %c0_98] : memref<1x8x384xf32, #tpu.memory_space<vmem>>, vector<1x8x384xf32>
    %585 = vector.shape_cast %584 : vector<1x8x384xf32> to vector<8x384xf32>
    %586 = vector.shape_cast %583 : vector<8x384xf32> to vector<1x8x384xf32>
    tpu.vector_store %arg13[%c0_96, %c0_97, %c0_98], %586 {strides = array<i32>} : memref<1x8x384xf32, #tpu.memory_space<vmem>>, vector<1x8x384xf32>,
    return
  }
  func.func @transform_0(%arg0: i32) -> (i32, i32, i32) {
    %c0_i32 = arith.constant 0 : i32
    %c0_i32_0 = arith.constant 0 : i32
    %c0_i32_1 = arith.constant 0 : i32
    return %arg0, %c0_i32, %c0_i32_0 : i32, i32, i32
  }
  func.func @transform_1(%arg0: i32) -> (i32, i32, i32) {
    %c0_i32 = arith.constant 0 : i32
    %c0_i32_0 = arith.constant 0 : i32
    %c0_i32_1 = arith.constant 0 : i32
    %c0_i32_2 = arith.constant 0 : i32
    return %c0_i32, %c0_i32_0, %c0_i32_1 : i32, i32, i32
  }
  func.func @transform_2(%arg0: i32) -> (i32, i32, i32) {
    %c0_i32 = arith.constant 0 : i32
    %c0_i32_0 = arith.constant 0 : i32
    %c0_i32_1 = arith.constant 0 : i32
    %c0_i32_2 = arith.constant 0 : i32
    return %c0_i32, %c0_i32_0, %c0_i32_1 : i32, i32, i32
  }
  func.func @transform_3(%arg0: i32) -> (i32, i32, i32) {
    %c0_i32 = arith.constant 0 : i32
    %c0_i32_0 = arith.constant 0 : i32
    %c0_i32_1 = arith.constant 0 : i32
    %c0_i32_2 = arith.constant 0 : i32
    return %c0_i32, %c0_i32_0, %c0_i32_1 : i32, i32, i32
  }
  func.func @transform_4(%arg0: i32) -> (i32, i32, i32) {
    %c0_i32 = arith.constant 0 : i32
    %c0_i32_0 = arith.constant 0 : i32
    %c0_i32_1 = arith.constant 0 : i32
    %c0_i32_2 = arith.constant 0 : i32
    return %c0_i32, %c0_i32_0, %c0_i32_1 : i32, i32, i32
  }
  func.func @transform_5(%arg0: i32) -> (i32, i32, i32) {
    %c0_i32 = arith.constant 0 : i32
    %c0_i32_0 = arith.constant 0 : i32
    %c0_i32_1 = arith.constant 0 : i32
    %c0_i32_2 = arith.constant 0 : i32
    return %c0_i32, %c0_i32_0, %c0_i32_1 : i32, i32, i32
  }
  func.func @transform_6(%arg0: i32) -> (i32, i32) {
    %c0_i32 = arith.constant 0 : i32
    %c0_i32_0 = arith.constant 0 : i32
    %c0_i32_1 = arith.constant 0 : i32
    return %c0_i32, %c0_i32_0 : i32, i32
  }
  func.func @transform_7(%arg0: i32) -> (i32, i32) {
    %c0_i32 = arith.constant 0 : i32
    %c0_i32_0 = arith.constant 0 : i32
    %c0_i32_1 = arith.constant 0 : i32
    return %c0_i32, %c0_i32_0 : i32, i32
  }
  func.func @transform_8(%arg0: i32) -> (i32, i32) {
    %c0_i32 = arith.constant 0 : i32
    %c0_i32_0 = arith.constant 0 : i32
    %c0_i32_1 = arith.constant 0 : i32
    return %c0_i32, %c0_i32_0 : i32, i32
  }
  func.func @transform_9(%arg0: i32) -> (i32, i32) {
    %c0_i32 = arith.constant 0 : i32
    %c0_i32_0 = arith.constant 0 : i32
    %c0_i32_1 = arith.constant 0 : i32
    return %c0_i32, %c0_i32_0 : i32, i32
  }
  func.func @transform_10(%arg0: i32) -> (i32, i32) {
    %c0_i32 = arith.constant 0 : i32
    %c0_i32_0 = arith.constant 0 : i32
    %c0_i32_1 = arith.constant 0 : i32
    return %c0_i32, %c0_i32_0 : i32, i32
  }
  func.func @transform_11(%arg0: i32) -> (i32, i32) {
    %c0_i32 = arith.constant 0 : i32
    %c0_i32_0 = arith.constant 0 : i32
    %c0_i32_1 = arith.constant 0 : i32
    return %c0_i32, %c0_i32_0 : i32, i32
  }
  func.func @transform_12(%arg0: i32) -> (i32, i32, i32) {
    %c0_i32 = arith.constant 0 : i32
    %c0_i32_0 = arith.constant 0 : i32
    %c0_i32_1 = arith.constant 0 : i32
    return %arg0, %c0_i32, %c0_i32_0 : i32, i32, i32
  }
}

</mosaic_0001>

<llo_original>
// kernel: tpu_custom_call.1
$region0: #{tpu_custom_call.1}
  #allocation0 [shape = 'u32[]', space=smem, size = 0x4, offset = 0x4, fixed_abs, tag = 'smem constant byte address 0x4 - core index']
  #allocation1 [shape = 'u32[144,128]{1,0:T(1,128)}', space=vmem, size = 0x12000, scoped, tag = 'internal scratch']
  %s0 = inlined_call_operand.vmem [shape: f32[2,8,528], index: 0, kind: input, shape index: {}]
  %s1 = inlined_call_operand.vmem [shape: f32[1,8,1], index: 1, kind: input, shape index: {}]
  %s2 = inlined_call_operand.vmem [shape: f32[9,8,1], index: 2, kind: input, shape index: {}]
  %s3 = inlined_call_operand.vmem [shape: f32[25,8,1], index: 3, kind: input, shape index: {}]
  %s4 = inlined_call_operand.vmem [shape: f32[49,8,1], index: 4, kind: input, shape index: {}]
  %s5 = inlined_call_operand.vmem [shape: f32[4,8,1], index: 5, kind: input, shape index: {}]
  %s6 = inlined_call_operand.vmem [shape: f32[8,32], index: 6, kind: input, shape index: {}]
  %s7 = inlined_call_operand.vmem [shape: f32[1,32], index: 7, kind: input, shape index: {}]
  %s8 = inlined_call_operand.vmem [shape: f32[4,32], index: 8, kind: input, shape index: {}]
  %s9 = inlined_call_operand.vmem [shape: f32[4,1], index: 9, kind: input, shape index: {}]
  %s10 = inlined_call_operand.vmem [shape: f32[8,8], index: 10, kind: input, shape index: {}]
  %s11 = inlined_call_operand.vmem [shape: f32[8,1], index: 11, kind: input, shape index: {}]
  %s12 = inlined_call_operand.hbm [shape: f32[2,8,384], index: 12, kind: output, shape index: {}]
  %s13 = sld [smem:[#allocation0]]
  $region81: #{tpu_custom_call.1} parent=0
    _
  %s15 = ssub.s32 1, %s13
  %s16 = scalar_select 0, %s15, %s13
  $region1: #{tpu_custom_call.1} parent=0
    #allocation2 [shape = 'u8[24576]{0}', space=vmem, size = 0x6000, scoped, tag = 'output window, operand 0']
    #allocation3 [shape = 's32[2]{0}', space=sflag, size = 0x8, scoped, tag = 'scoped memory for tpu_custom_call.1']
    %17 = vsyncpa [#allocation3], 0
    %s18 = scalar_lea.sflag [#allocation3], 1
    %19 = vsyncpa %s18, 0
    loop: start=0, step=1, limit=4
    $region2: #{tpu_custom_call.1} parent=1 // loop_pre_header
      _
    $region3: #{tpu_custom_call.1} parent=1 // loop_header
      %s21 = sphi 0, %s25
      %p22 = scmp.ge.s32.totalorder %s21, 4
      %s31 = sphi 0, %s33
      %s34 = sphi 0, %s31
      %s35 = sphi 0, %s34
      %s51 = sphi 0, %s35
      %s55 = sphi 0, %s55
      %s57 = sphi 0, %s55
      %s58 = sphi 0, %s57
      %s72 = sphi 0, %s58
      %s76 = sphi 0, %s76
      %s78 = sphi 0, %s76
      %s79 = sphi 0, %s78
      %s93 = sphi 0, %s79
      %s97 = sphi 0, %s97
      %s99 = sphi 0, %s97
      %s100 = sphi 0, %s99
      %s114 = sphi 0, %s100
      %s118 = sphi 0, %s118
      %s120 = sphi 0, %s118
      %s121 = sphi 0, %s120
      %s135 = sphi 0, %s121
      %s139 = sphi 0, %s139
      %s141 = sphi 0, %s139
      %s142 = sphi 0, %s141
      %s156 = sphi 0, %s142
      %s160 = sphi 0, %s160
      %s162 = sphi 0, %s160
      %s163 = sphi 0, %s162
      %s177 = sphi 0, %s163
      %s181 = sphi 0, %s181
      %s183 = sphi 0, %s181
      %s184 = sphi 0, %s183
      %s198 = sphi 0, %s184
      %s202 = sphi 0, %s202
      %s204 = sphi 0, %s202
      %s205 = sphi 0, %s204
      %s219 = sphi 0, %s205
      %s223 = sphi 0, %s223
      %s225 = sphi 0, %s223
      %s226 = sphi 0, %s225
      %s240 = sphi 0, %s226
      %s244 = sphi 0, %s244
      %s246 = sphi 0, %s244
      %s247 = sphi 0, %s246
      %s261 = sphi 0, %s247
      %s265 = sphi 0, %s265
      %s267 = sphi 0, %s265
      %s268 = sphi 0, %s267
      %s282 = sphi 0, %s268
      %s288 = sphi 0, %s290
      %s291 = sphi 0, %s288
      %s292 = sphi 0, %s291
      %s308 = sphi 0, %s292
    $region4: #{tpu_custom_call.1} parent=1 // loop_header_branch
      %24 = sbr.rel (%p22) target = $region8
    $region5: #{tpu_custom_call.1} parent=1 // loop_body
      %s26 = ssub.s32 %s21, 1
      %s27 = ssub.s32 %s21, 2
      %s28 = sadd.s32 %s21, 1
      %s29 = ssub.s32 %s21, %s28
      %p30 = scmp.eq.s32.totalorder %s29, 0
      %s32 = sadd.s32 %s31, 1
      %s33 = scalar_select %p30, %s31, %s32
      %p36 = pneg %p30
      %p37 = scmp.eq.s32.totalorder %s21, 1
      %p38 = por %p36, %p37
      %p39 = scmp.ne.s32.totalorder %s31, %s34
      %p40 = scmp.eq.s32.totalorder %s21, 0
      %p41 = por %p39, %p40
      %p42 = scmp.ne.s32.totalorder %s31, %s34
      %p43 = scmp.eq.s32.totalorder %s26, 1
      %p44 = por %p42, %p43
      %p45 = scmp.ne.s32.totalorder %s34, %s35
      %p46 = scmp.eq.s32.totalorder %s26, 0
      %p47 = por %p45, %p46
      %p48 = scmp.ne.s32.totalorder %s34, %s35
      %p49 = scmp.eq.s32.totalorder %s27, 1
      %p50 = por %p48, %p49
      %p52 = scmp.ne.s32.totalorder %s35, %s51
      %p53 = scmp.eq.s32.totalorder %s27, 0
      %p54 = por %p52, %p53
      %s56 = sadd.s32 %s55, 1
      %p59 = scmp.eq.s32.totalorder %s21, 1
      %p60 = scmp.ne.s32.totalorder %s55, %s57
      %p61 = scmp.eq.s32.totalorder %s21, 0
      %p62 = por %p60, %p61
      %p63 = scmp.ne.s32.totalorder %s55, %s57
      %p64 = scmp.eq.s32.totalorder %s26, 1
      %p65 = por %p63, %p64
      %p66 = scmp.ne.s32.totalorder %s57, %s58
      %p67 = scmp.eq.s32.totalorder %s26, 0
      %p68 = por %p66, %p67
      %p69 = scmp.ne.s32.totalorder %s57, %s58
      %p70 = scmp.eq.s32.totalorder %s27, 1
      %p71 = por %p69, %p70
      %p73 = scmp.ne.s32.totalorder %s58, %s72
      %p74 = scmp.eq.s32.totalorder %s27, 0
      %p75 = por %p73, %p74
      %s77 = sadd.s32 %s76, 1
      %p80 = scmp.eq.s32.totalorder %s21, 1
      %p81 = scmp.ne.s32.totalorder %s76, %s78
      %p82 = scmp.eq.s32.totalorder %s21, 0
      %p83 = por %p81, %p82
      %p84 = scmp.ne.s32.totalorder %s76, %s78
      %p85 = scmp.eq.s32.totalorder %s26, 1
      %p86 = por %p84, %p85
      %p87 = scmp.ne.s32.totalorder %s78, %s79
      %p88 = scmp.eq.s32.totalorder %s26, 0
      %p89 = por %p87, %p88
      %p90 = scmp.ne.s32.totalorder %s78, %s79
      %p91 = scmp.eq.s32.totalorder %s27, 1
      %p92 = por %p90, %p91
      %p94 = scmp.ne.s32.totalorder %s79, %s93
      %p95 = scmp.eq.s32.totalorder %s27, 0
      %p96 = por %p94, %p95
      %s98 = sadd.s32 %s97, 1
      %p101 = scmp.eq.s32.totalorder %s21, 1
      %p102 = scmp.ne.s32.totalorder %s97, %s99
      %p103 = scmp.eq.s32.totalorder %s21, 0
      %p104 = por %p102, %p103
      %p105 = scmp.ne.s32.totalorder %s97, %s99
      %p106 = scmp.eq.s32.totalorder %s26, 1
      %p107 = por %p105, %p106
      %p108 = scmp.ne.s32.totalorder %s99, %s100
      %p109 = scmp.eq.s32.totalorder %s26, 0
      %p110 = por %p108, %p109
      %p111 = scmp.ne.s32.totalorder %s99, %s100
      %p112 = scmp.eq.s32.totalorder %s27, 1
      %p113 = por %p111, %p112
      %p115 = scmp.ne.s32.totalorder %s100, %s114
      %p116 = scmp.eq.s32.totalorder %s27, 0
      %p117 = por %p115, %p116
      %s119 = sadd.s32 %s118, 1
      %p122 = scmp.eq.s32.totalorder %s21, 1
      %p123 = scmp.ne.s32.totalorder %s118, %s120
      %p124 = scmp.eq.s32.totalorder %s21, 0
      %p125 = por %p123, %p124
      %p126 = scmp.ne.s32.totalorder %s118, %s120
      %p127 = scmp.eq.s32.totalorder %s26, 1
      %p128 = por %p126, %p127
      %p129 = scmp.ne.s32.totalorder %s120, %s121
      %p130 = scmp.eq.s32.totalorder %s26, 0
      %p131 = por %p129, %p130
      %p132 = scmp.ne.s32.totalorder %s120, %s121
      %p133 = scmp.eq.s32.totalorder %s27, 1
      %p134 = por %p132, %p133
      %p136 = scmp.ne.s32.totalorder %s121, %s135
      %p137 = scmp.eq.s32.totalorder %s27, 0
      %p138 = por %p136, %p137
      %s140 = sadd.s32 %s139, 1
      %p143 = scmp.eq.s32.totalorder %s21, 1
      %p144 = scmp.ne.s32.totalorder %s139, %s141
      %p145 = scmp.eq.s32.totalorder %s21, 0
      %p146 = por %p144, %p145
      %p147 = scmp.ne.s32.totalorder %s139, %s141
      %p148 = scmp.eq.s32.totalorder %s26, 1
      %p149 = por %p147, %p148
      %p150 = scmp.ne.s32.totalorder %s141, %s142
      %p151 = scmp.eq.s32.totalorder %s26, 0
      %p152 = por %p150, %p151
      %p153 = scmp.ne.s32.totalorder %s141, %s142
      %p154 = scmp.eq.s32.totalorder %s27, 1
      %p155 = por %p153, %p154
      %p157 = scmp.ne.s32.totalorder %s142, %s156
      %p158 = scmp.eq.s32.totalorder %s27, 0
      %p159 = por %p157, %p158
      %s161 = sadd.s32 %s160, 1
      %p164 = scmp.eq.s32.totalorder %s21, 1
      %p165 = scmp.ne.s32.totalorder %s160, %s162
      %p166 = scmp.eq.s32.totalorder %s21, 0
      %p167 = por %p165, %p166
      %p168 = scmp.ne.s32.totalorder %s160, %s162
      %p169 = scmp.eq.s32.totalorder %s26, 1
      %p170 = por %p168, %p169
      %p171 = scmp.ne.s32.totalorder %s162, %s163
      %p172 = scmp.eq.s32.totalorder %s26, 0
      %p173 = por %p171, %p172
      %p174 = scmp.ne.s32.totalorder %s162, %s163
      %p175 = scmp.eq.s32.totalorder %s27, 1
      %p176 = por %p174, %p175
      %p178 = scmp.ne.s32.totalorder %s163, %s177
      %p179 = scmp.eq.s32.totalorder %s27, 0
      %p180 = por %p178, %p179
      %s182 = sadd.s32 %s181, 1
      %p185 = scmp.eq.s32.totalorder %s21, 1
      %p186 = scmp.ne.s32.totalorder %s181, %s183
      %p187 = scmp.eq.s32.totalorder %s21, 0
      %p188 = por %p186, %p187
      %p189 = scmp.ne.s32.totalorder %s181, %s183
      %p190 = scmp.eq.s32.totalorder %s26, 1
      %p191 = por %p189, %p190
      %p192 = scmp.ne.s32.totalorder %s183, %s184
      %p193 = scmp.eq.s32.totalorder %s26, 0
      %p194 = por %p192, %p193
      %p195 = scmp.ne.s32.totalorder %s183, %s184
      %p196 = scmp.eq.s32.totalorder %s27, 1
      %p197 = por %p195, %p196
      %p199 = scmp.ne.s32.totalorder %s184, %s198
      %p200 = scmp.eq.s32.totalorder %s27, 0
      %p201 = por %p199, %p200
      %s203 = sadd.s32 %s202, 1
      %p206 = scmp.eq.s32.totalorder %s21, 1
      %p207 = scmp.ne.s32.totalorder %s202, %s204
      %p208 = scmp.eq.s32.totalorder %s21, 0
      %p209 = por %p207, %p208
      %p210 = scmp.ne.s32.totalorder %s202, %s204
      %p211 = scmp.eq.s32.totalorder %s26, 1
      %p212 = por %p210, %p211
      %p213 = scmp.ne.s32.totalorder %s204, %s205
      %p214 = scmp.eq.s32.totalorder %s26, 0
      %p215 = por %p213, %p214
      %p216 = scmp.ne.s32.totalorder %s204, %s205
      %p217 = scmp.eq.s32.totalorder %s27, 1
      %p218 = por %p216, %p217
      %p220 = scmp.ne.s32.totalorder %s205, %s219
      %p221 = scmp.eq.s32.totalorder %s27, 0
      %p222 = por %p220, %p221
      %s224 = sadd.s32 %s223, 1
      %p227 = scmp.eq.s32.totalorder %s21, 1
      %p228 = scmp.ne.s32.totalorder %s223, %s225
      %p229 = scmp.eq.s32.totalorder %s21, 0
      %p230 = por %p228, %p229
      %p231 = scmp.ne.s32.totalorder %s223, %s225
      %p232 = scmp.eq.s32.totalorder %s26, 1
      %p233 = por %p231, %p232
      %p234 = scmp.ne.s32.totalorder %s225, %s226
      %p235 = scmp.eq.s32.totalorder %s26, 0
      %p236 = por %p234, %p235
      %p237 = scmp.ne.s32.totalorder %s225, %s226
      %p238 = scmp.eq.s32.totalorder %s27, 1
      %p239 = por %p237, %p238
      %p241 = scmp.ne.s32.totalorder %s226, %s240
      %p242 = scmp.eq.s32.totalorder %s27, 0
      %p243 = por %p241, %p242
      %s245 = sadd.s32 %s244, 1
      %p248 = scmp.eq.s32.totalorder %s21, 1
      %p249 = scmp.ne.s32.totalorder %s244, %s246
      %p250 = scmp.eq.s32.totalorder %s21, 0
      %p251 = por %p249, %p250
      %p252 = scmp.ne.s32.totalorder %s244, %s246
      %p253 = scmp.eq.s32.totalorder %s26, 1
      %p254 = por %p252, %p253
      %p255 = scmp.ne.s32.totalorder %s246, %s247
      %p256 = scmp.eq.s32.totalorder %s26, 0
      %p257 = por %p255, %p256
      %p258 = scmp.ne.s32.totalorder %s246, %s247
      %p259 = scmp.eq.s32.totalorder %s27, 1
      %p260 = por %p258, %p259
      %p262 = scmp.ne.s32.totalorder %s247, %s261
      %p263 = scmp.eq.s32.totalorder %s27, 0
      %p264 = por %p262, %p263
      %s266 = sadd.s32 %s265, 1
      %p269 = scmp.eq.s32.totalorder %s21, 1
      %p270 = scmp.ne.s32.totalorder %s265, %s267
      %p271 = scmp.eq.s32.totalorder %s21, 0
      %p272 = por %p270, %p271
      %p273 = scmp.ne.s32.totalorder %s265, %s267
      %p274 = scmp.eq.s32.totalorder %s26, 1
      %p275 = por %p273, %p274
      %p276 = scmp.ne.s32.totalorder %s267, %s268
      %p277 = scmp.eq.s32.totalorder %s26, 0
      %p278 = por %p276, %p277
      %p279 = scmp.ne.s32.totalorder %s267, %s268
      %p280 = scmp.eq.s32.totalorder %s27, 1
      %p281 = por %p279, %p280
      %p283 = scmp.ne.s32.totalorder %s268, %s282
      %p284 = scmp.eq.s32.totalorder %s27, 0
      %p285 = por %p283, %p284
      %s286 = ssub.s32 %s21, %s28
      %p287 = scmp.eq.s32.totalorder %s286, 0
      %s289 = sadd.s32 %s288, 1
      %s290 = scalar_select %p287, %s288, %s289
      %p293 = pneg %p287
      %p294 = scmp.eq.s32.totalorder %s21, 1
      %p295 = por %p293, %p294
      %p296 = scmp.ne.s32.totalorder %s288, %s291
      %p297 = scmp.eq.s32.totalorder %s21, 0
      %p298 = por %p296, %p297
      %p299 = scmp.ne.s32.totalorder %s288, %s291
      %p300 = scmp.eq.s32.totalorder %s26, 1
      %p301 = por %p299, %p300
      %p302 = scmp.ne.s32.totalorder %s291, %s292
      %p303 = scmp.eq.s32.totalorder %s26, 0
      %p304 = por %p302, %p303
      %p305 = scmp.ne.s32.totalorder %s291, %s292
      %p306 = scmp.eq.s32.totalorder %s27, 1
      %p307 = por %p305, %p306
      %p309 = scmp.ne.s32.totalorder %s292, %s308
      %p310 = scmp.eq.s32.totalorder %s27, 0
      %p311 = por %p309, %p310
      %p312 = scmp.le.s32.totalorder 1, %s21
      %p313 = scmp.lt.s32.totalorder %s21, 3
      %p314 = pnand %p312, %p313
      %p315 = pneg %p314
      // Predicated region
      $region9: #{tpu_custom_call.1} parent=5 // pred_check
        _
      $region10: #{tpu_custom_call.1} parent=5 // pred_check_branch
        %317 = sbr.rel (%p314) target = $region12
      $region11: #{tpu_custom_call.1} parent=5 // pred_region
        %s318 = ssub.s32 %s21, 1
        // Predicated region
        $region13: #{tpu_custom_call.1} parent=11 // pred_check
          %p319 = pneg %p68
        $region14: #{tpu_custom_call.1} parent=11 // pred_check_branch
          %321 = sbr.rel (%p319) target = $region16
        $region15: #{tpu_custom_call.1} parent=11 // pred_region
          _
        $region16: #{tpu_custom_call.1} parent=11 // pred_fallthru
          _
        // Predicated region
        $region17: #{tpu_custom_call.1} parent=11 // pred_check
          %p322 = pneg %p89
        $region18: #{tpu_custom_call.1} parent=11 // pred_check_branch
          %324 = sbr.rel (%p322) target = $region20
        $region19: #{tpu_custom_call.1} parent=11 // pred_region
          _
        $region20: #{tpu_custom_call.1} parent=11 // pred_fallthru
          _
        // Predicated region
        $region21: #{tpu_custom_call.1} parent=11 // pred_check
          %p325 = pneg %p110
        $region22: #{tpu_custom_call.1} parent=11 // pred_check_branch
          %327 = sbr.rel (%p325) target = $region24
        $region23: #{tpu_custom_call.1} parent=11 // pred_region
          _
        $region24: #{tpu_custom_call.1} parent=11 // pred_fallthru
          _
        // Predicated region
        $region25: #{tpu_custom_call.1} parent=11 // pred_check
          %p328 = pneg %p131
        $region26: #{tpu_custom_call.1} parent=11 // pred_check_branch
          %330 = sbr.rel (%p328) target = $region28
        $region27: #{tpu_custom_call.1} parent=11 // pred_region
          _
        $region28: #{tpu_custom_call.1} parent=11 // pred_fallthru
          _
        // Predicated region
        $region29: #{tpu_custom_call.1} parent=11 // pred_check
          %p331 = pneg %p152
        $region30: #{tpu_custom_call.1} parent=11 // pred_check_branch
          %333 = sbr.rel (%p331) target = $region32
        $region31: #{tpu_custom_call.1} parent=11 // pred_region
          _
        $region32: #{tpu_custom_call.1} parent=11 // pred_fallthru
          _
        // Predicated region
        $region33: #{tpu_custom_call.1} parent=11 // pred_check
          %p334 = pneg %p173
        $region34: #{tpu_custom_call.1} parent=11 // pred_check_branch
          %336 = sbr.rel (%p334) target = $region36
        $region35: #{tpu_custom_call.1} parent=11 // pred_region
          _
        $region36: #{tpu_custom_call.1} parent=11 // pred_fallthru
          _
        // Predicated region
        $region37: #{tpu_custom_call.1} parent=11 // pred_check
          %p337 = pneg %p194
        $region38: #{tpu_custom_call.1} parent=11 // pred_check_branch
          %339 = sbr.rel (%p337) target = $region40
        $region39: #{tpu_custom_call.1} parent=11 // pred_region
          _
        $region40: #{tpu_custom_call.1} parent=11 // pred_fallthru
          _
        // Predicated region
        $region41: #{tpu_custom_call.1} parent=11 // pred_check
          %p340 = pneg %p215
        $region42: #{tpu_custom_call.1} parent=11 // pred_check_branch
          %342 = sbr.rel (%p340) target = $region44
        $region43: #{tpu_custom_call.1} parent=11 // pred_region
          _
        $region44: #{tpu_custom_call.1} parent=11 // pred_fallthru
          _
        // Predicated region
        $region45: #{tpu_custom_call.1} parent=11 // pred_check
          %p343 = pneg %p236
        $region46: #{tpu_custom_call.1} parent=11 // pred_check_branch
          %345 = sbr.rel (%p343) target = $region48
        $region47: #{tpu_custom_call.1} parent=11 // pred_region
          _
        $region48: #{tpu_custom_call.1} parent=11 // pred_fallthru
          _
        // Predicated region
        $region49: #{tpu_custom_call.1} parent=11 // pred_check
          %p346 = pneg %p257
        $region50: #{tpu_custom_call.1} parent=11 // pred_check_branch
          %348 = sbr.rel (%p346) target = $region52
        $region51: #{tpu_custom_call.1} parent=11 // pred_region
          _
        $region52: #{tpu_custom_call.1} parent=11 // pred_fallthru
          _
        // Predicated region
        $region53: #{tpu_custom_call.1} parent=11 // pred_check
          %p349 = pneg %p278
        $region54: #{tpu_custom_call.1} parent=11 // pred_check_branch
          %351 = sbr.rel (%p349) target = $region56
        $region55: #{tpu_custom_call.1} parent=11 // pred_region
          _
        $region56: #{tpu_custom_call.1} parent=11 // pred_fallthru
          _
      $region12: #{tpu_custom_call.1} parent=5 // pred_fallthru
        _
      %p352 = scmp.lt.s32.totalorder %s21, 2
      // Predicated region
      $region57: #{tpu_custom_call.1} parent=5 // pred_check
        %p353 = pneg %p352
      $region58: #{tpu_custom_call.1} parent=5 // pred_check_branch
        %355 = sbr.rel (%p353) target = $region60
      $region59: #{tpu_custom_call.1} parent=5 // pred_region
        // Predicated region
        $region61: #{tpu_custom_call.1} parent=59 // pred_check
          %p356 = pneg %p41
        $region62: #{tpu_custom_call.1} parent=59 // pred_check_branch
          %358 = sbr.rel (%p356) target = $region64
        $region63: #{tpu_custom_call.1} parent=59 // pred_region
          %p359 = scmp.lt.s32.totalorder %s21, 1
          %s360 = scalar_select %p359, %s21, 1
          %s361 = smul.addr %s360, 5
          %s362 = smul.addr %s361, 8
          %s363 = scalar_lea.vmem %s0, %s362
        $region64: #{tpu_custom_call.1} parent=59 // pred_fallthru
          _
      $region60: #{tpu_custom_call.1} parent=5 // pred_fallthru
        _
      %p364 = scmp.le.s32.totalorder 1, %s21
      %p365 = scmp.lt.s32.totalorder %s21, 3
      %p366 = pnand %p364, %p365
      %p367 = pneg %p366
      // Predicated region
      $region65: #{tpu_custom_call.1} parent=5 // pred_check
        _
      $region66: #{tpu_custom_call.1} parent=5 // pred_check_branch
        %369 = sbr.rel (%p366) target = $region68
      $region67: #{tpu_custom_call.1} parent=5 // pred_region
        %s370 = ssub.s32 %s21, 1
        %p371 = scmp.lt.s32.totalorder %s26, 1
        %s372 = scalar_select %p371, %s26, 1
        %s373 = smul.addr %s372, 5
        %s374 = smul.addr %s373, 8
        %s375 = scalar_lea.vmem %s0, %s374
        %p376 = pneg %p47
        %p377 = pneg %p44
        %p378 = pneg %p68
        %p379 = pneg %p65
        %p380 = pneg %p89
        %p381 = pneg %p86
        %p382 = pneg %p110
        %p383 = pneg %p107
        %p384 = pneg %p131
        %p385 = pneg %p128
        %p386 = pneg %p152
        %p387 = pneg %p149
        %p388 = pneg %p173
        %p389 = pneg %p170
        %p390 = pneg %p194
        %p391 = pneg %p191
        %p392 = pneg %p215
        %p393 = pneg %p212
        %p394 = pneg %p236
        %p395 = pneg %p233
        %p396 = pneg %p257
        %p397 = pneg %p254
        %p398 = pneg %p278
        %p399 = pneg %p275
        %p400 = pneg %p304
        %p401 = pneg %p301
        %s402 = sand.u32 %s291, 1
        %s403 = scalar_lea.sflag [#allocation3], %s402
        %s404 = sand.u32 %s291, 1
        %s405 = smul.addr %s404, 24
        %s406 = scalar_lea.vmem [#allocation2], %s405
        %p407 = scmp.lt.s32.totalorder %s26, 1
        %s408 = scalar_select %p407, %s26, 1
        %s409 = smul.addr %s408, 5
        %s410 = smul.addr %s409, 8
        %s411 = scalar_lea.vmem %s0, %s410
        %v412 = vld [vmem:[%s1] sm:$0xff]
        %v413 = vld [vmem:[%s2] sm:$0xff]
        %v414 = vld [vmem:[%s2 + $0x8] sm:$0xff]
        %v415 = vld [vmem:[%s2 + $0x10] sm:$0xff]
        %v416 = vld [vmem:[%s2 + $0x18] sm:$0xff]
        %v417 = vld [vmem:[%s2 + $0x20] sm:$0xff]
        %v418 = vld [vmem:[%s2 + $0x28] sm:$0xff]
        %v419 = vld [vmem:[%s2 + $0x30] sm:$0xff]
        %v420 = vld [vmem:[%s2 + $0x38] sm:$0xff]
        %v421 = vld [vmem:[%s2 + $0x40] sm:$0xff]
        %v422 = vld [vmem:[%s3] sm:$0xff]
        %v423 = vld [vmem:[%s3 + $0x8] sm:$0xff]
        %v424 = vld [vmem:[%s3 + $0x10] sm:$0xff]
        %v425 = vld [vmem:[%s3 + $0x18] sm:$0xff]
        %v426 = vld [vmem:[%s3 + $0x20] sm:$0xff]
        %v427 = vld [vmem:[%s3 + $0x28] sm:$0xff]
        %v428 = vld [vmem:[%s3 + $0x30] sm:$0xff]
        %v429 = vld [vmem:[%s3 + $0x38] sm:$0xff]
        %v430 = vld [vmem:[%s3 + $0x40] sm:$0xff]
        %v431 = vld [vmem:[%s3 + $0x48] sm:$0xff]
        %v432 = vld [vmem:[%s3 + $0x50] sm:$0xff]
        %v433 = vld [vmem:[%s3 + $0x58] sm:$0xff]
        %v434 = vld [vmem:[%s3 + $0x60] sm:$0xff]
        %v435 = vld [vmem:[%s3 + $0x68] sm:$0xff]
        %v436 = vld [vmem:[%s3 + $0x70] sm:$0xff]
        %v437 = vld [vmem:[%s3 + $0x78] sm:$0xff]
        %v438 = vld [vmem:[%s3 + $0x80] sm:$0xff]
        %v439 = vld [vmem:[%s3 + $0x88] sm:$0xff]
        %v440 = vld [vmem:[%s3 + $0x90] sm:$0xff]
        %v441 = vld [vmem:[%s3 + $0x98] sm:$0xff]
        %v442 = vld [vmem:[%s3 + $0xa0] sm:$0xff]
        %v443 = vld [vmem:[%s3 + $0xa8] sm:$0xff]
        %v444 = vld [vmem:[%s3 + $0xb0] sm:$0xff]
        %v445 = vld [vmem:[%s3 + $0xb8] sm:$0xff]
        %v446 = vld [vmem:[%s3 + $0xc0] sm:$0xff]
        %v447 = vld [vmem:[%s4] sm:$0xff]
        %v448 = vld [vmem:[%s4 + $0x8] sm:$0xff]
        %v449 = vld [vmem:[%s4 + $0x10] sm:$0xff]
        %v450 = vld [vmem:[%s4 + $0x18] sm:$0xff]
        %v451 = vld [vmem:[%s4 + $0x20] sm:$0xff]
        %v452 = vld [vmem:[%s4 + $0x28] sm:$0xff]
        %v453 = vld [vmem:[%s4 + $0x30] sm:$0xff]
        %v454 = vld [vmem:[%s4 + $0x38] sm:$0xff]
        %v455 = vld [vmem:[%s4 + $0x40] sm:$0xff]
        %v456 = vld [vmem:[%s4 + $0x48] sm:$0xff]
        %v457 = vld [vmem:[%s4 + $0x50] sm:$0xff]
        %v458 = vld [vmem:[%s4 + $0x58] sm:$0xff]
        %v459 = vld [vmem:[%s4 + $0x60] sm:$0xff]
        %v460 = vld [vmem:[%s4 + $0x68] sm:$0xff]
        %v461 = vld [vmem:[%s4 + $0x70] sm:$0xff]
        %v462 = vld [vmem:[%s4 + $0x78] sm:$0xff]
        %v463 = vld [vmem:[%s4 + $0x80] sm:$0xff]
        %v464 = vld [vmem:[%s4 + $0x88] sm:$0xff]
        %v465 = vld [vmem:[%s4 + $0x90] sm:$0xff]
        %v466 = vld [vmem:[%s4 + $0x98] sm:$0xff]
        %v467 = vld [vmem:[%s4 + $0xa0] sm:$0xff]
        %v468 = vld [vmem:[%s4 + $0xa8] sm:$0xff]
        %v469 = vld [vmem:[%s4 + $0xb0] sm:$0xff]
        %v470 = vld [vmem:[%s4 + $0xb8] sm:$0xff]
        %v471 = vld [vmem:[%s4 + $0xc0] sm:$0xff]
        %v472 = vld [vmem:[%s4 + $0xc8] sm:$0xff]
        %v473 = vld [vmem:[%s4 + $0xd0] sm:$0xff]
        %v474 = vld [vmem:[%s4 + $0xd8] sm:$0xff]
        %v475 = vld [vmem:[%s4 + $0xe0] sm:$0xff]
        %v476 = vld [vmem:[%s4 + $0xe8] sm:$0xff]
        %v477 = vld [vmem:[%s4 + $0xf0] sm:$0xff]
        %v478 = vld [vmem:[%s4 + $0xf8] sm:$0xff]
        %v479 = vld [vmem:[%s4 + $0x100] sm:$0xff]
        %v480 = vld [vmem:[%s4 + $0x108] sm:$0xff]
        %v481 = vld [vmem:[%s4 + $0x110] sm:$0xff]
        %v482 = vld [vmem:[%s4 + $0x118] sm:$0xff]
        %v483 = vld [vmem:[%s4 + $0x120] sm:$0xff]
        %v484 = vld [vmem:[%s4 + $0x128] sm:$0xff]
        %v485 = vld [vmem:[%s4 + $0x130] sm:$0xff]
        %v486 = vld [vmem:[%s4 + $0x138] sm:$0xff]
        %v487 = vld [vmem:[%s4 + $0x140] sm:$0xff]
        %v488 = vld [vmem:[%s4 + $0x148] sm:$0xff]
        %v489 = vld [vmem:[%s4 + $0x150] sm:$0xff]
        %v490 = vld [vmem:[%s4 + $0x158] sm:$0xff]
        %v491 = vld [vmem:[%s4 + $0x160] sm:$0xff]
        %v492 = vld [vmem:[%s4 + $0x168] sm:$0xff]
        %v493 = vld [vmem:[%s4 + $0x170] sm:$0xff]
        %v494 = vld [vmem:[%s4 + $0x178] sm:$0xff]
        %v495 = vld [vmem:[%s4 + $0x180] sm:$0xff]
        %v496 = vld [vmem:[%s5] sm:$0xff]
        %v497 = vld [vmem:[%s5 + $0x8] sm:$0xff]
        %v498 = vld [vmem:[%s5 + $0x10] sm:$0xff]
        %v499 = vld [vmem:[%s5 + $0x18] sm:$0xff]
        %v500 = vld [vmem:[%s411] sm:$0xff]
        %v501 = vld [vmem:[%s411 + $0x8] sm:$0xff]
        %v502 = vld [vmem:[%s411 + $0x10] sm:$0xff]
        %v503 = vld [vmem:[%s411 + $0x18] sm:$0xff]
        %508 = vrot.lane.b32.xlu0 %v500, 53
        %v509 = vpop.permute.xlu0 %508
        %510 = vrot.lane.b32.xlu0 %v501, 53
        %v511 = vpop.permute.xlu0 %510
        %512 = vrot.lane.b32.xlu0 %v502, 53
        %v513 = vpop.permute.xlu0 %512
        %514 = vrot.lane.b32.xlu0 %v503, 53
        %v515 = vpop.permute.xlu0 %514
        %vm516 = vcmask 433152
        %v517 = vsel %vm516, %v509, %v511
        %v518 = vsel %vm516, %v511, %v513
        %v519 = vsel %vm516, %v513, %v515
        %v523 = vadd.f32 %v517, %v518
        %v524 = vadd.f32 %v523, %v519
        %525 = vadd.xlane.f32.xlu0 %v524
        %v526 = vpop.xlane.xlu0 %525
        %v527 = vmul.f32 %v526, 0.00390625
        %v528 = vld [vmem:[%s6] sm:$0xff]
        %v529 = vmul.f32 %v527, %v528
        %vm530 = vcmask 261120
        %v531 = vsel %vm530, %v529, 0.0
        %v532 = vrot.slane %v531, 4
        %v533 = vadd.f32 %v531, %v532
        %v534 = vrot.slane %v533, 2
        %v535 = vadd.f32 %v533, %v534
        %v536 = vrot.slane %v535, 1
        %v537 = vadd.f32 %v535, %v536
        %v538 = vld [vmem:[%s7] sm:$0x1]
        %v539 = vadd.f32 %v537, %v538
        %v540 = vmax.f32 %v539, 0.0
        %v541 = vld [vmem:[%s8] sm:$0xf]
        %v542 = vlaneseq
        %v543 = vshrl.u32 %v542, 7
        %v544 = vsub.s32 0, %v543
        %v545 = vrot.slane %v540, %v544
        %v546 = vmul.f32 %v545, %v541
        %vm547 = vcmask 257024
        %v548 = vsel %vm547, %v546, 0.0
        %549 = vadd.xlane.f32.xlu0 %v548
        %v550 = vpop.xlane.xlu0 %549
        %v551 = vld [vmem:[%s9] sm:$0xf]
        %v552 = vadd.f32 %v550, %v551
        %vm553 = vcmask 3072
        %v554 = vsel %vm553, %v552, -inf
        %v555 = vrot.slane %v554, 4
        %v556 = vmax.f32 %v554, %v555
        %v557 = vrot.slane %v556, 2
        %v558 = vmax.f32 %v556, %v557
        %v559 = vrot.slane %v558, 1
        %v560 = vmax.f32 %v558, %v559
        %v561 = vsub.f32 %v552, %v560
        %v562 = vmul.f32 %v561, 1.442695
        %v563 = vpow.pop %v562
        %v564 = vsel %vm553, %v563, 0.0
        %v565 = vrot.slane %v564, 4
        %v566 = vadd.f32 %v564, %v565
        %v567 = vrot.slane %v566, 2
        %v568 = vadd.f32 %v566, %v567
        %v569 = vrot.slane %v568, 1
        %v570 = vadd.f32 %v568, %v569
        %v571 = vrcp.pop %v570
        %v572 = vmul.f32 %v563, %v571
        %574 = vset.pattern.permute.xlu0 0
        %575 = vperm.xlu0 %574, %v447
        %v576 = vpop.permute.xlu0 %575
        %v578 = vmul.f32 %v500, %v576
        %v579 = vmul.f32 %v501, %v576
        %v580 = vmul.f32 %v502, %v576
        %v581 = vadd.f32 %v578, 0.0
        %v582 = vadd.f32 %v579, 0.0
        %v583 = vadd.f32 %v580, 0.0
        %584 = vrot.lane.b32.xlu0 %v500, 127
        %v585 = vpop.permute.xlu0 %584
        %586 = vrot.lane.b32.xlu0 %v501, 127
        %v587 = vpop.permute.xlu0 %586
        %588 = vrot.lane.b32.xlu0 %v502, 127
        %v589 = vpop.permute.xlu0 %588
        %v590 = vlaneseq
        %v591 = vand.u32 %v590, 127
        %vm592 = vcmp.lt.s32.totalorder %v591, 127
        %v593 = vsel %vm592, %v587, %v589
        %v594 = vsel %vm592, %v585, %v587
        %v595 = vsel %vm592, %v589, %v585
        %597 = vset.pattern.permute.xlu0 0
        %598 = vperm.xlu0 %597, %v448
        %v599 = vpop.permute.xlu0 %598
        %v601 = vmul.f32 %v594, %v599
        %v602 = vmul.f32 %v593, %v599
        %v603 = vmul.f32 %v595, %v599
        %v604 = vadd.f32 %v581, %v601
        %v605 = vadd.f32 %v582, %v602
        %v606 = vadd.f32 %v583, %v603
        %607 = vrot.lane.b32.xlu0 %v500, 126
        %v608 = vpop.permute.xlu0 %607
        %609 = vrot.lane.b32.xlu0 %v501, 126
        %v610 = vpop.permute.xlu0 %609
        %611 = vrot.lane.b32.xlu0 %v502, 126
        %v612 = vpop.permute.xlu0 %611
        %vm613 = vcmp.lt.s32.totalorder %v591, 126
        %v614 = vsel %vm613, %v610, %v612
        %v615 = vsel %vm613, %v608, %v610
        %v616 = vsel %vm613, %v612, %v608
        %618 = vset.pattern.permute.xlu0 0
        %619 = vperm.xlu0 %618, %v449
        %v620 = vpop.permute.xlu0 %619
        %v622 = vmul.f32 %v615, %v620
        %v623 = vmul.f32 %v614, %v620
        %v624 = vmul.f32 %v616, %v620
        %v625 = vadd.f32 %v604, %v622
        %v626 = vadd.f32 %v605, %v623
        %v627 = vadd.f32 %v606, %v624
        %628 = vrot.lane.b32.xlu0 %v500, 125
        %v629 = vpop.permute.xlu0 %628
        %630 = vrot.lane.b32.xlu0 %v501, 125
        %v631 = vpop.permute.xlu0 %630
        %632 = vrot.lane.b32.xlu0 %v502, 125
        %v633 = vpop.permute.xlu0 %632
        %vm634 = vcmp.lt.s32.totalorder %v591, 125
        %v635 = vsel %vm634, %v631, %v633
        %v636 = vsel %vm634, %v629, %v631
        %v637 = vsel %vm634, %v633, %v629
        %639 = vset.pattern.permute.xlu0 0
        %640 = vperm.xlu0 %639, %v450
        %v641 = vpop.permute.xlu0 %640
        %v643 = vmul.f32 %v636, %v641
        %v644 = vmul.f32 %v635, %v641
        %v645 = vmul.f32 %v637, %v641
        %v646 = vadd.f32 %v625, %v643
        %v647 = vadd.f32 %v626, %v644
        %v648 = vadd.f32 %v627, %v645
        %649 = vrot.lane.b32.xlu0 %v500, 124
        %v650 = vpop.permute.xlu0 %649
        %651 = vrot.lane.b32.xlu0 %v501, 124
        %v652 = vpop.permute.xlu0 %651
        %653 = vrot.lane.b32.xlu0 %v502, 124
        %v654 = vpop.permute.xlu0 %653
        %vm655 = vcmp.lt.s32.totalorder %v591, 124
        %v656 = vsel %vm655, %v652, %v654
        %v657 = vsel %vm655, %v650, %v652
        %v658 = vsel %vm655, %v654, %v650
        %660 = vset.pattern.permute.xlu0 0
        %661 = vperm.xlu0 %660, %v451
        %v662 = vpop.permute.xlu0 %661
        %v664 = vmul.f32 %v657, %v662
        %v665 = vmul.f32 %v656, %v662
        %v666 = vmul.f32 %v658, %v662
        %v667 = vadd.f32 %v646, %v664
        %v668 = vadd.f32 %v647, %v665
        %v669 = vadd.f32 %v648, %v666
        %670 = vrot.lane.b32.xlu0 %v500, 123
        %v671 = vpop.permute.xlu0 %670
        %672 = vrot.lane.b32.xlu0 %v501, 123
        %v673 = vpop.permute.xlu0 %672
        %674 = vrot.lane.b32.xlu0 %v502, 123
        %v675 = vpop.permute.xlu0 %674
        %vm676 = vcmp.lt.s32.totalorder %v591, 123
        %v677 = vsel %vm676, %v673, %v675
        %v678 = vsel %vm676, %v671, %v673
        %v679 = vsel %vm676, %v675, %v671
        %681 = vset.pattern.permute.xlu0 0
        %682 = vperm.xlu0 %681, %v452
        %v683 = vpop.permute.xlu0 %682
        %v685 = vmul.f32 %v678, %v683
        %v686 = vmul.f32 %v677, %v683
        %v687 = vmul.f32 %v679, %v683
        %v688 = vadd.f32 %v667, %v685
        %v689 = vadd.f32 %v668, %v686
        %v690 = vadd.f32 %v669, %v687
        %691 = vrot.lane.b32.xlu0 %v500, 122
        %v692 = vpop.permute.xlu0 %691
        %693 = vrot.lane.b32.xlu0 %v501, 122
        %v694 = vpop.permute.xlu0 %693
        %695 = vrot.lane.b32.xlu0 %v502, 122
        %v696 = vpop.permute.xlu0 %695
        %vm697 = vcmp.lt.s32.totalorder %v591, 122
        %v698 = vsel %vm697, %v694, %v696
        %v699 = vsel %vm697, %v692, %v694
        %v700 = vsel %vm697, %v696, %v692
        %702 = vset.pattern.permute.xlu0 0
        %703 = vperm.xlu0 %702, %v453
        %v704 = vpop.permute.xlu0 %703
        %v706 = vmul.f32 %v699, %v704
        %v707 = vmul.f32 %v698, %v704
        %v708 = vmul.f32 %v700, %v704
        %v709 = vadd.f32 %v688, %v706
        %v710 = vadd.f32 %v689, %v707
        %v711 = vadd.f32 %v690, %v708
        %713 = vset.pattern.permute.xlu0 0
        %714 = vperm.xlu0 %713, %v454
        %v715 = vpop.permute.xlu0 %714
        %v717 = vmul.f32 %v500, %v715
        %v718 = vmul.f32 %v501, %v715
        %v719 = vmul.f32 %v502, %v715
        %v720 = vmul.f32 %v503, %v715
        %725 = vrot.lane.b32.xlu0 %v717, 104
        %v726 = vpop.permute.xlu0 %725
        %727 = vrot.lane.b32.xlu0 %v718, 104
        %v728 = vpop.permute.xlu0 %727
        %729 = vrot.lane.b32.xlu0 %v719, 104
        %v730 = vpop.permute.xlu0 %729
        %731 = vrot.lane.b32.xlu0 %v720, 104
        %v732 = vpop.permute.xlu0 %731
        %vm733 = vcmask 850944
        %v734 = vsel %vm733, %v726, %v728
        %v735 = vsel %vm733, %v728, %v730
        %v736 = vsel %vm733, %v730, %v732
        %v740 = vadd.f32 %v709, %v734
        %v741 = vadd.f32 %v710, %v735
        %v742 = vadd.f32 %v711, %v736
        %743 = vrot.lane.b32.xlu0 %v500, 104
        %v744 = vpop.permute.xlu0 %743
        %745 = vrot.lane.b32.xlu0 %v501, 104
        %v746 = vpop.permute.xlu0 %745
        %747 = vrot.lane.b32.xlu0 %v502, 104
        %v748 = vpop.permute.xlu0 %747
        %749 = vrot.lane.b32.xlu0 %v503, 104
        %v750 = vpop.permute.xlu0 %749
        %v751 = vsel %vm733, %v744, %v746
        %v752 = vsel %vm733, %v746, %v748
        %v753 = vsel %vm733, %v748, %v750
        %757 = vrot.lane.b32.xlu0 %v751, 127
        %v758 = vpop.permute.xlu0 %757
        %759 = vrot.lane.b32.xlu0 %v752, 127
        %v760 = vpop.permute.xlu0 %759
        %761 = vrot.lane.b32.xlu0 %v753, 127
        %v762 = vpop.permute.xlu0 %761
        %v763 = vsel %vm592, %v760, %v762
        %v764 = vsel %vm592, %v758, %v760
        %v765 = vsel %vm592, %v762, %v758
        %767 = vset.pattern.permute.xlu0 0
        %768 = vperm.xlu0 %767, %v422
        %v769 = vpop.permute.xlu0 %768
        %v771 = vmul.f32 %v764, %v769
        %v772 = vmul.f32 %v763, %v769
        %v773 = vmul.f32 %v765, %v769
        %v774 = vadd.f32 %v771, 0.0
        %v775 = vadd.f32 %v772, 0.0
        %v776 = vadd.f32 %v773, 0.0
        %778 = vset.pattern.permute.xlu0 0
        %779 = vperm.xlu0 %778, %v455
        %v780 = vpop.permute.xlu0 %779
        %v782 = vmul.f32 %v764, %v780
        %v783 = vmul.f32 %v763, %v780
        %v784 = vmul.f32 %v765, %v780
        %v785 = vadd.f32 %v740, %v782
        %v786 = vadd.f32 %v741, %v783
        %v787 = vadd.f32 %v742, %v784
        %788 = vrot.lane.b32.xlu0 %v751, 126
        %v789 = vpop.permute.xlu0 %788
        %790 = vrot.lane.b32.xlu0 %v752, 126
        %v791 = vpop.permute.xlu0 %790
        %792 = vrot.lane.b32.xlu0 %v753, 126
        %v793 = vpop.permute.xlu0 %792
        %v794 = vsel %vm613, %v791, %v793
        %v795 = vsel %vm613, %v789, %v791
        %v796 = vsel %vm613, %v793, %v789
        %798 = vset.pattern.permute.xlu0 0
        %799 = vperm.xlu0 %798, %v423
        %v800 = vpop.permute.xlu0 %799
        %v802 = vmul.f32 %v795, %v800
        %v803 = vmul.f32 %v794, %v800
        %v804 = vmul.f32 %v796, %v800
        %v805 = vadd.f32 %v774, %v802
        %v806 = vadd.f32 %v775, %v803
        %v807 = vadd.f32 %v776, %v804
        %809 = vset.pattern.permute.xlu0 0
        %810 = vperm.xlu0 %809, %v456
        %v811 = vpop.permute.xlu0 %810
        %v813 = vmul.f32 %v795, %v811
        %v814 = vmul.f32 %v794, %v811
        %v815 = vmul.f32 %v796, %v811
        %v816 = vadd.f32 %v785, %v813
        %v817 = vadd.f32 %v786, %v814
        %v818 = vadd.f32 %v787, %v815
        %819 = vrot.lane.b32.xlu0 %v751, 125
        %v820 = vpop.permute.xlu0 %819
        %821 = vrot.lane.b32.xlu0 %v752, 125
        %v822 = vpop.permute.xlu0 %821
        %823 = vrot.lane.b32.xlu0 %v753, 125
        %v824 = vpop.permute.xlu0 %823
        %v825 = vsel %vm634, %v822, %v824
        %v826 = vsel %vm634, %v820, %v822
        %v827 = vsel %vm634, %v824, %v820
        %829 = vset.pattern.permute.xlu0 0
        %830 = vperm.xlu0 %829, %v424
        %v831 = vpop.permute.xlu0 %830
        %v833 = vmul.f32 %v826, %v831
        %v834 = vmul.f32 %v825, %v831
        %v835 = vmul.f32 %v827, %v831
        %v836 = vadd.f32 %v805, %v833
        %v837 = vadd.f32 %v806, %v834
        %v838 = vadd.f32 %v807, %v835
        %840 = vset.pattern.permute.xlu0 0
        %841 = vperm.xlu0 %840, %v457
        %v842 = vpop.permute.xlu0 %841
        %v844 = vmul.f32 %v826, %v842
        %v845 = vmul.f32 %v825, %v842
        %v846 = vmul.f32 %v827, %v842
        %v847 = vadd.f32 %v816, %v844
        %v848 = vadd.f32 %v817, %v845
        %v849 = vadd.f32 %v818, %v846
        %850 = vrot.lane.b32.xlu0 %v751, 124
        %v851 = vpop.permute.xlu0 %850
        %852 = vrot.lane.b32.xlu0 %v752, 124
        %v853 = vpop.permute.xlu0 %852
        %854 = vrot.lane.b32.xlu0 %v753, 124
        %v855 = vpop.permute.xlu0 %854
        %v856 = vsel %vm655, %v853, %v855
        %v857 = vsel %vm655, %v851, %v853
        %v858 = vsel %vm655, %v855, %v851
        %860 = vset.pattern.permute.xlu0 0
        %861 = vperm.xlu0 %860, %v425
        %v862 = vpop.permute.xlu0 %861
        %v864 = vmul.f32 %v857, %v862
        %v865 = vmul.f32 %v856, %v862
        %v866 = vmul.f32 %v858, %v862
        %v867 = vadd.f32 %v836, %v864
        %v868 = vadd.f32 %v837, %v865
        %v869 = vadd.f32 %v838, %v866
        %871 = vset.pattern.permute.xlu0 0
        %872 = vperm.xlu0 %871, %v458
        %v873 = vpop.permute.xlu0 %872
        %v875 = vmul.f32 %v857, %v873
        %v876 = vmul.f32 %v856, %v873
        %v877 = vmul.f32 %v858, %v873
        %v878 = vadd.f32 %v847, %v875
        %v879 = vadd.f32 %v848, %v876
        %v880 = vadd.f32 %v849, %v877
        %881 = vrot.lane.b32.xlu0 %v751, 123
        %v882 = vpop.permute.xlu0 %881
        %883 = vrot.lane.b32.xlu0 %v752, 123
        %v884 = vpop.permute.xlu0 %883
        %885 = vrot.lane.b32.xlu0 %v753, 123
        %v886 = vpop.permute.xlu0 %885
        %v887 = vsel %vm676, %v884, %v886
        %v888 = vsel %vm676, %v882, %v884
        %v889 = vsel %vm676, %v886, %v882
        %891 = vset.pattern.permute.xlu0 0
        %892 = vperm.xlu0 %891, %v426
        %v893 = vpop.permute.xlu0 %892
        %v895 = vmul.f32 %v888, %v893
        %v896 = vmul.f32 %v887, %v893
        %v897 = vmul.f32 %v889, %v893
        %v898 = vadd.f32 %v867, %v895
        %v899 = vadd.f32 %v868, %v896
        %v900 = vadd.f32 %v869, %v897
        %902 = vset.pattern.permute.xlu0 0
        %903 = vperm.xlu0 %902, %v459
        %v904 = vpop.permute.xlu0 %903
        %v906 = vmul.f32 %v888, %v904
        %v907 = vmul.f32 %v887, %v904
        %v908 = vmul.f32 %v889, %v904
        %v909 = vadd.f32 %v878, %v906
        %v910 = vadd.f32 %v879, %v907
        %v911 = vadd.f32 %v880, %v908
        %912 = vrot.lane.b32.xlu0 %v751, 122
        %v913 = vpop.permute.xlu0 %912
        %914 = vrot.lane.b32.xlu0 %v752, 122
        %v915 = vpop.permute.xlu0 %914
        %916 = vrot.lane.b32.xlu0 %v753, 122
        %v917 = vpop.permute.xlu0 %916
        %v918 = vsel %vm697, %v915, %v917
        %v919 = vsel %vm697, %v913, %v915
        %v920 = vsel %vm697, %v917, %v913
        %922 = vset.pattern.permute.xlu0 0
        %923 = vperm.xlu0 %922, %v460
        %v924 = vpop.permute.xlu0 %923
        %v926 = vmul.f32 %v919, %v924
        %v927 = vmul.f32 %v918, %v924
        %v928 = vmul.f32 %v920, %v924
        %v929 = vadd.f32 %v909, %v926
        %v930 = vadd.f32 %v910, %v927
        %v931 = vadd.f32 %v911, %v928
        %933 = vset.pattern.permute.xlu0 0
        %934 = vperm.xlu0 %933, %v461
        %v935 = vpop.permute.xlu0 %934
        %v937 = vmul.f32 %v500, %v935
        %v938 = vmul.f32 %v501, %v935
        %v939 = vmul.f32 %v502, %v935
        %v940 = vmul.f32 %v503, %v935
        %945 = vrot.lane.b32.xlu0 %v937, 80
        %v946 = vpop.permute.xlu0 %945
        %947 = vrot.lane.b32.xlu0 %v938, 80
        %v948 = vpop.permute.xlu0 %947
        %949 = vrot.lane.b32.xlu0 %v939, 80
        %v950 = vpop.permute.xlu0 %949
        %951 = vrot.lane.b32.xlu0 %v940, 80
        %v952 = vpop.permute.xlu0 %951
        %vm953 = vcmask 654336
        %v954 = vsel %vm953, %v946, %v948
        %v955 = vsel %vm953, %v948, %v950
        %v956 = vsel %vm953, %v950, %v952
        %v960 = vadd.f32 %v929, %v954
        %v961 = vadd.f32 %v930, %v955
        %v962 = vadd.f32 %v931, %v956
        %963 = vrot.lane.b32.xlu0 %v500, 80
        %v964 = vpop.permute.xlu0 %963
        %965 = vrot.lane.b32.xlu0 %v501, 80
        %v966 = vpop.permute.xlu0 %965
        %967 = vrot.lane.b32.xlu0 %v502, 80
        %v968 = vpop.permute.xlu0 %967
        %969 = vrot.lane.b32.xlu0 %v503, 80
        %v970 = vpop.permute.xlu0 %969
        %v971 = vsel %vm953, %v964, %v966
        %v972 = vsel %vm953, %v966, %v968
        %v973 = vsel %vm953, %v968, %v970
        %977 = vrot.lane.b32.xlu0 %v971, 127
        %v978 = vpop.permute.xlu0 %977
        %979 = vrot.lane.b32.xlu0 %v972, 127
        %v980 = vpop.permute.xlu0 %979
        %981 = vrot.lane.b32.xlu0 %v973, 127
        %v982 = vpop.permute.xlu0 %981
        %v983 = vsel %vm592, %v980, %v982
        %v984 = vsel %vm592, %v978, %v980
        %v985 = vsel %vm592, %v982, %v978
        %987 = vset.pattern.permute.xlu0 0
        %988 = vperm.xlu0 %987, %v427
        %v989 = vpop.permute.xlu0 %988
        %v991 = vmul.f32 %v984, %v989
        %v992 = vmul.f32 %v983, %v989
        %v993 = vmul.f32 %v985, %v989
        %v994 = vadd.f32 %v898, %v991
        %v995 = vadd.f32 %v899, %v992
        %v996 = vadd.f32 %v900, %v993
        %998 = vset.pattern.permute.xlu0 0
        %999 = vperm.xlu0 %998, %v462
        %v1000 = vpop.permute.xlu0 %999
        %v1002 = vmul.f32 %v984, %v1000
        %v1003 = vmul.f32 %v983, %v1000
        %v1004 = vmul.f32 %v985, %v1000
        %v1005 = vadd.f32 %v960, %v1002
        %v1006 = vadd.f32 %v961, %v1003
        %v1007 = vadd.f32 %v962, %v1004
        %1008 = vrot.lane.b32.xlu0 %v971, 126
        %v1009 = vpop.permute.xlu0 %1008
        %1010 = vrot.lane.b32.xlu0 %v972, 126
        %v1011 = vpop.permute.xlu0 %1010
        %1012 = vrot.lane.b32.xlu0 %v973, 126
        %v1013 = vpop.permute.xlu0 %1012
        %v1014 = vsel %vm613, %v1011, %v1013
        %v1015 = vsel %vm613, %v1009, %v1011
        %v1016 = vsel %vm613, %v1013, %v1009
        %1018 = vset.pattern.permute.xlu0 0
        %1019 = vperm.xlu0 %1018, %v413
        %v1020 = vpop.permute.xlu0 %1019
        %v1022 = vmul.f32 %v1015, %v1020
        %v1023 = vmul.f32 %v1014, %v1020
        %v1024 = vmul.f32 %v1016, %v1020
        %v1025 = vadd.f32 %v1022, 0.0
        %v1026 = vadd.f32 %v1023, 0.0
        %v1027 = vadd.f32 %v1024, 0.0
        %1029 = vset.pattern.permute.xlu0 0
        %1030 = vperm.xlu0 %1029, %v428
        %v1031 = vpop.permute.xlu0 %1030
        %v1033 = vmul.f32 %v1015, %v1031
        %v1034 = vmul.f32 %v1014, %v1031
        %v1035 = vmul.f32 %v1016, %v1031
        %v1036 = vadd.f32 %v994, %v1033
        %v1037 = vadd.f32 %v995, %v1034
        %v1038 = vadd.f32 %v996, %v1035
        %1040 = vset.pattern.permute.xlu0 0
        %1041 = vperm.xlu0 %1040, %v463
        %v1042 = vpop.permute.xlu0 %1041
        %v1044 = vmul.f32 %v1015, %v1042
        %v1045 = vmul.f32 %v1014, %v1042
        %v1046 = vmul.f32 %v1016, %v1042
        %v1047 = vadd.f32 %v1005, %v1044
        %v1048 = vadd.f32 %v1006, %v1045
        %v1049 = vadd.f32 %v1007, %v1046
        %1050 = vrot.lane.b32.xlu0 %v971, 125
        %v1051 = vpop.permute.xlu0 %1050
        %1052 = vrot.lane.b32.xlu0 %v972, 125
        %v1053 = vpop.permute.xlu0 %1052
        %1054 = vrot.lane.b32.xlu0 %v973, 125
        %v1055 = vpop.permute.xlu0 %1054
        %v1056 = vsel %vm634, %v1053, %v1055
        %v1057 = vsel %vm634, %v1051, %v1053
        %v1058 = vsel %vm634, %v1055, %v1051
        %1060 = vset.pattern.permute.xlu0 0
        %1061 = vperm.xlu0 %1060, %v414
        %v1062 = vpop.permute.xlu0 %1061
        %v1064 = vmul.f32 %v1057, %v1062
        %v1065 = vmul.f32 %v1056, %v1062
        %v1066 = vmul.f32 %v1058, %v1062
        %v1067 = vadd.f32 %v1025, %v1064
        %v1068 = vadd.f32 %v1026, %v1065
        %v1069 = vadd.f32 %v1027, %v1066
        %1071 = vset.pattern.permute.xlu0 0
        %1072 = vperm.xlu0 %1071, %v429
        %v1073 = vpop.permute.xlu0 %1072
        %v1075 = vmul.f32 %v1057, %v1073
        %v1076 = vmul.f32 %v1056, %v1073
        %v1077 = vmul.f32 %v1058, %v1073
        %v1078 = vadd.f32 %v1036, %v1075
        %v1079 = vadd.f32 %v1037, %v1076
        %v1080 = vadd.f32 %v1038, %v1077
        %1082 = vset.pattern.permute.xlu0 0
        %1083 = vperm.xlu0 %1082, %v464
        %v1084 = vpop.permute.xlu0 %1083
        %v1086 = vmul.f32 %v1057, %v1084
        %v1087 = vmul.f32 %v1056, %v1084
        %v1088 = vmul.f32 %v1058, %v1084
        %v1089 = vadd.f32 %v1047, %v1086
        %v1090 = vadd.f32 %v1048, %v1087
        %v1091 = vadd.f32 %v1049, %v1088
        %1092 = vrot.lane.b32.xlu0 %v971, 124
        %v1093 = vpop.permute.xlu0 %1092
        %1094 = vrot.lane.b32.xlu0 %v972, 124
        %v1095 = vpop.permute.xlu0 %1094
        %1096 = vrot.lane.b32.xlu0 %v973, 124
        %v1097 = vpop.permute.xlu0 %1096
        %v1098 = vsel %vm655, %v1095, %v1097
        %v1099 = vsel %vm655, %v1093, %v1095
        %v1100 = vsel %vm655, %v1097, %v1093
        %1102 = vset.pattern.permute.xlu0 0
        %1103 = vperm.xlu0 %1102, %v415
        %v1104 = vpop.permute.xlu0 %1103
        %v1106 = vmul.f32 %v1099, %v1104
        %v1107 = vmul.f32 %v1098, %v1104
        %v1108 = vmul.f32 %v1100, %v1104
        %v1109 = vadd.f32 %v1067, %v1106
        %v1110 = vadd.f32 %v1068, %v1107
        %v1111 = vadd.f32 %v1069, %v1108
        %1113 = vset.pattern.permute.xlu0 0
        %1114 = vperm.xlu0 %1113, %v430
        %v1115 = vpop.permute.xlu0 %1114
        %v1117 = vmul.f32 %v1099, %v1115
        %v1118 = vmul.f32 %v1098, %v1115
        %v1119 = vmul.f32 %v1100, %v1115
        %v1120 = vadd.f32 %v1078, %v1117
        %v1121 = vadd.f32 %v1079, %v1118
        %v1122 = vadd.f32 %v1080, %v1119
        %1124 = vset.pattern.permute.xlu0 0
        %1125 = vperm.xlu0 %1124, %v465
        %v1126 = vpop.permute.xlu0 %1125
        %v1128 = vmul.f32 %v1099, %v1126
        %v1129 = vmul.f32 %v1098, %v1126
        %v1130 = vmul.f32 %v1100, %v1126
        %v1131 = vadd.f32 %v1089, %v1128
        %v1132 = vadd.f32 %v1090, %v1129
        %v1133 = vadd.f32 %v1091, %v1130
        %1134 = vrot.lane.b32.xlu0 %v971, 123
        %v1135 = vpop.permute.xlu0 %1134
        %1136 = vrot.lane.b32.xlu0 %v972, 123
        %v1137 = vpop.permute.xlu0 %1136
        %1138 = vrot.lane.b32.xlu0 %v973, 123
        %v1139 = vpop.permute.xlu0 %1138
        %v1140 = vsel %vm676, %v1137, %v1139
        %v1141 = vsel %vm676, %v1135, %v1137
        %v1142 = vsel %vm676, %v1139, %v1135
        %1144 = vset.pattern.permute.xlu0 0
        %1145 = vperm.xlu0 %1144, %v431
        %v1146 = vpop.permute.xlu0 %1145
        %v1148 = vmul.f32 %v1141, %v1146
        %v1149 = vmul.f32 %v1140, %v1146
        %v1150 = vmul.f32 %v1142, %v1146
        %v1151 = vadd.f32 %v1120, %v1148
        %v1152 = vadd.f32 %v1121, %v1149
        %v1153 = vadd.f32 %v1122, %v1150
        %1155 = vset.pattern.permute.xlu0 0
        %1156 = vperm.xlu0 %1155, %v466
        %v1157 = vpop.permute.xlu0 %1156
        %v1159 = vmul.f32 %v1141, %v1157
        %v1160 = vmul.f32 %v1140, %v1157
        %v1161 = vmul.f32 %v1142, %v1157
        %v1162 = vadd.f32 %v1131, %v1159
        %v1163 = vadd.f32 %v1132, %v1160
        %v1164 = vadd.f32 %v1133, %v1161
        %1165 = vrot.lane.b32.xlu0 %v971, 122
        %v1166 = vpop.permute.xlu0 %1165
        %1167 = vrot.lane.b32.xlu0 %v972, 122
        %v1168 = vpop.permute.xlu0 %1167
        %1169 = vrot.lane.b32.xlu0 %v973, 122
        %v1170 = vpop.permute.xlu0 %1169
        %v1171 = vsel %vm697, %v1168, %v1170
        %v1172 = vsel %vm697, %v1166, %v1168
        %v1173 = vsel %vm697, %v1170, %v1166
        %1175 = vset.pattern.permute.xlu0 0
        %1176 = vperm.xlu0 %1175, %v467
        %v1177 = vpop.permute.xlu0 %1176
        %v1179 = vmul.f32 %v1172, %v1177
        %v1180 = vmul.f32 %v1171, %v1177
        %v1181 = vmul.f32 %v1173, %v1177
        %v1182 = vadd.f32 %v1162, %v1179
        %v1183 = vadd.f32 %v1163, %v1180
        %v1184 = vadd.f32 %v1164, %v1181
        %1186 = vset.pattern.permute.xlu0 0
        %1187 = vperm.xlu0 %1186, %v468
        %v1188 = vpop.permute.xlu0 %1187
        %v1190 = vmul.f32 %v500, %v1188
        %v1191 = vmul.f32 %v501, %v1188
        %v1192 = vmul.f32 %v502, %v1188
        %v1193 = vmul.f32 %v503, %v1188
        %1198 = vrot.lane.b32.xlu0 %v1190, 56
        %v1199 = vpop.permute.xlu0 %1198
        %1200 = vrot.lane.b32.xlu0 %v1191, 56
        %v1201 = vpop.permute.xlu0 %1200
        %1202 = vrot.lane.b32.xlu0 %v1192, 56
        %v1203 = vpop.permute.xlu0 %1202
        %1204 = vrot.lane.b32.xlu0 %v1193, 56
        %v1205 = vpop.permute.xlu0 %1204
        %vm1206 = vcmask 457728
        %v1207 = vsel %vm1206, %v1199, %v1201
        %v1208 = vsel %vm1206, %v1201, %v1203
        %v1209 = vsel %vm1206, %v1203, %v1205
        %v1213 = vadd.f32 %v1182, %v1207
        %v1214 = vadd.f32 %v1183, %v1208
        %v1215 = vadd.f32 %v1184, %v1209
        %1216 = vrot.lane.b32.xlu0 %v500, 56
        %v1217 = vpop.permute.xlu0 %1216
        %1218 = vrot.lane.b32.xlu0 %v501, 56
        %v1219 = vpop.permute.xlu0 %1218
        %1220 = vrot.lane.b32.xlu0 %v502, 56
        %v1221 = vpop.permute.xlu0 %1220
        %1222 = vrot.lane.b32.xlu0 %v503, 56
        %v1223 = vpop.permute.xlu0 %1222
        %v1224 = vsel %vm1206, %v1217, %v1219
        %v1225 = vsel %vm1206, %v1219, %v1221
        %v1226 = vsel %vm1206, %v1221, %v1223
        %1230 = vrot.lane.b32.xlu0 %v1224, 127
        %v1231 = vpop.permute.xlu0 %1230
        %1232 = vrot.lane.b32.xlu0 %v1225, 127
        %v1233 = vpop.permute.xlu0 %1232
        %1234 = vrot.lane.b32.xlu0 %v1226, 127
        %v1235 = vpop.permute.xlu0 %1234
        %v1236 = vsel %vm592, %v1233, %v1235
        %v1237 = vsel %vm592, %v1231, %v1233
        %v1238 = vsel %vm592, %v1235, %v1231
        %1240 = vset.pattern.permute.xlu0 0
        %1241 = vperm.xlu0 %1240, %v432
        %v1242 = vpop.permute.xlu0 %1241
        %v1244 = vmul.f32 %v1237, %v1242
        %v1245 = vmul.f32 %v1236, %v1242
        %v1246 = vmul.f32 %v1238, %v1242
        %v1247 = vadd.f32 %v1151, %v1244
        %v1248 = vadd.f32 %v1152, %v1245
        %v1249 = vadd.f32 %v1153, %v1246
        %1251 = vset.pattern.permute.xlu0 0
        %1252 = vperm.xlu0 %1251, %v469
        %v1253 = vpop.permute.xlu0 %1252
        %v1255 = vmul.f32 %v1237, %v1253
        %v1256 = vmul.f32 %v1236, %v1253
        %v1257 = vmul.f32 %v1238, %v1253
        %v1258 = vadd.f32 %v1213, %v1255
        %v1259 = vadd.f32 %v1214, %v1256
        %v1260 = vadd.f32 %v1215, %v1257
        %1261 = vrot.lane.b32.xlu0 %v1224, 126
        %v1262 = vpop.permute.xlu0 %1261
        %1263 = vrot.lane.b32.xlu0 %v1225, 126
        %v1264 = vpop.permute.xlu0 %1263
        %1265 = vrot.lane.b32.xlu0 %v1226, 126
        %v1266 = vpop.permute.xlu0 %1265
        %v1267 = vsel %vm613, %v1264, %v1266
        %v1268 = vsel %vm613, %v1262, %v1264
        %v1269 = vsel %vm613, %v1266, %v1262
        %1271 = vset.pattern.permute.xlu0 0
        %1272 = vperm.xlu0 %1271, %v416
        %v1273 = vpop.permute.xlu0 %1272
        %v1275 = vmul.f32 %v1268, %v1273
        %v1276 = vmul.f32 %v1267, %v1273
        %v1277 = vmul.f32 %v1269, %v1273
        %v1278 = vadd.f32 %v1109, %v1275
        %v1279 = vadd.f32 %v1110, %v1276
        %v1280 = vadd.f32 %v1111, %v1277
        %1282 = vset.pattern.permute.xlu0 0
        %1283 = vperm.xlu0 %1282, %v433
        %v1284 = vpop.permute.xlu0 %1283
        %v1286 = vmul.f32 %v1268, %v1284
        %v1287 = vmul.f32 %v1267, %v1284
        %v1288 = vmul.f32 %v1269, %v1284
        %v1289 = vadd.f32 %v1247, %v1286
        %v1290 = vadd.f32 %v1248, %v1287
        %v1291 = vadd.f32 %v1249, %v1288
        %1293 = vset.pattern.permute.xlu0 0
        %1294 = vperm.xlu0 %1293, %v470
        %v1295 = vpop.permute.xlu0 %1294
        %v1297 = vmul.f32 %v1268, %v1295
        %v1298 = vmul.f32 %v1267, %v1295
        %v1299 = vmul.f32 %v1269, %v1295
        %v1300 = vadd.f32 %v1258, %v1297
        %v1301 = vadd.f32 %v1259, %v1298
        %v1302 = vadd.f32 %v1260, %v1299
        %1304 = vset.pattern.permute.xlu0 0
        %1305 = vperm.xlu0 %1304, %v412
        %v1306 = vpop.permute.xlu0 %1305
        %v1308 = vmul.f32 %v500, %v1306
        %v1309 = vmul.f32 %v501, %v1306
        %v1310 = vmul.f32 %v502, %v1306
        %v1311 = vmul.f32 %v503, %v1306
        %v1312 = vadd.f32 %v1308, 0.0
        %v1313 = vadd.f32 %v1309, 0.0
        %v1314 = vadd.f32 %v1310, 0.0
        %v1315 = vadd.f32 %v1311, 0.0
        %1317 = vset.pattern.permute.xlu0 0
        %1318 = vperm.xlu0 %1317, %v417
        %v1319 = vpop.permute.xlu0 %1318
        %v1321 = vmul.f32 %v500, %v1319
        %v1322 = vmul.f32 %v501, %v1319
        %v1323 = vmul.f32 %v502, %v1319
        %v1324 = vmul.f32 %v503, %v1319
        %1329 = vrot.lane.b32.xlu0 %v1321, 53
        %v1330 = vpop.permute.xlu0 %1329
        %1331 = vrot.lane.b32.xlu0 %v1322, 53
        %v1332 = vpop.permute.xlu0 %1331
        %1333 = vrot.lane.b32.xlu0 %v1323, 53
        %v1334 = vpop.permute.xlu0 %1333
        %1335 = vrot.lane.b32.xlu0 %v1324, 53
        %v1336 = vpop.permute.xlu0 %1335
        %v1337 = vsel %vm516, %v1330, %v1332
        %v1338 = vsel %vm516, %v1332, %v1334
        %v1339 = vsel %vm516, %v1334, %v1336
        %v1343 = vadd.f32 %v1278, %v1337
        %v1344 = vadd.f32 %v1279, %v1338
        %v1345 = vadd.f32 %v1280, %v1339
        %1347 = vset.pattern.permute.xlu0 0
        %1348 = vperm.xlu0 %1347, %v434
        %v1349 = vpop.permute.xlu0 %1348
        %v1351 = vmul.f32 %v500, %v1349
        %v1352 = vmul.f32 %v501, %v1349
        %v1353 = vmul.f32 %v502, %v1349
        %v1354 = vmul.f32 %v503, %v1349
        %1359 = vrot.lane.b32.xlu0 %v1351, 53
        %v1360 = vpop.permute.xlu0 %1359
        %1361 = vrot.lane.b32.xlu0 %v1352, 53
        %v1362 = vpop.permute.xlu0 %1361
        %1363 = vrot.lane.b32.xlu0 %v1353, 53
        %v1364 = vpop.permute.xlu0 %1363
        %1365 = vrot.lane.b32.xlu0 %v1354, 53
        %v1366 = vpop.permute.xlu0 %1365
        %v1367 = vsel %vm516, %v1360, %v1362
        %v1368 = vsel %vm516, %v1362, %v1364
        %v1369 = vsel %vm516, %v1364, %v1366
        %v1373 = vadd.f32 %v1289, %v1367
        %v1374 = vadd.f32 %v1290, %v1368
        %v1375 = vadd.f32 %v1291, %v1369
        %1377 = vset.pattern.permute.xlu0 0
        %1378 = vperm.xlu0 %1377, %v471
        %v1379 = vpop.permute.xlu0 %1378
        %v1381 = vmul.f32 %v500, %v1379
        %v1382 = vmul.f32 %v501, %v1379
        %v1383 = vmul.f32 %v502, %v1379
        %v1384 = vmul.f32 %v503, %v1379
        %1389 = vrot.lane.b32.xlu0 %v1381, 53
        %v1390 = vpop.permute.xlu0 %1389
        %1391 = vrot.lane.b32.xlu0 %v1382, 53
        %v1392 = vpop.permute.xlu0 %1391
        %1393 = vrot.lane.b32.xlu0 %v1383, 53
        %v1394 = vpop.permute.xlu0 %1393
        %1395 = vrot.lane.b32.xlu0 %v1384, 53
        %v1396 = vpop.permute.xlu0 %1395
        %v1397 = vsel %vm516, %v1390, %v1392
        %v1398 = vsel %vm516, %v1392, %v1394
        %v1399 = vsel %vm516, %v1394, %v1396
        %v1403 = vadd.f32 %v1300, %v1397
        %v1404 = vadd.f32 %v1301, %v1398
        %v1405 = vadd.f32 %v1302, %v1399
        %1406 = vrot.lane.b32.xlu0 %v1224, 124
        %v1407 = vpop.permute.xlu0 %1406
        %1408 = vrot.lane.b32.xlu0 %v1225, 124
        %v1409 = vpop.permute.xlu0 %1408
        %1410 = vrot.lane.b32.xlu0 %v1226, 124
        %v1411 = vpop.permute.xlu0 %1410
        %v1412 = vsel %vm655, %v1409, %v1411
        %v1413 = vsel %vm655, %v1407, %v1409
        %v1414 = vsel %vm655, %v1411, %v1407
        %1416 = vset.pattern.permute.xlu0 0
        %1417 = vperm.xlu0 %1416, %v418
        %v1418 = vpop.permute.xlu0 %1417
        %v1420 = vmul.f32 %v1413, %v1418
        %v1421 = vmul.f32 %v1412, %v1418
        %v1422 = vmul.f32 %v1414, %v1418
        %v1423 = vadd.f32 %v1343, %v1420
        %v1424 = vadd.f32 %v1344, %v1421
        %v1425 = vadd.f32 %v1345, %v1422
        %1427 = vset.pattern.permute.xlu0 0
        %1428 = vperm.xlu0 %1427, %v435
        %v1429 = vpop.permute.xlu0 %1428
        %v1431 = vmul.f32 %v1413, %v1429
        %v1432 = vmul.f32 %v1412, %v1429
        %v1433 = vmul.f32 %v1414, %v1429
        %v1434 = vadd.f32 %v1373, %v1431
        %v1435 = vadd.f32 %v1374, %v1432
        %v1436 = vadd.f32 %v1375, %v1433
        %1438 = vset.pattern.permute.xlu0 0
        %1439 = vperm.xlu0 %1438, %v472
        %v1440 = vpop.permute.xlu0 %1439
        %v1442 = vmul.f32 %v1413, %v1440
        %v1443 = vmul.f32 %v1412, %v1440
        %v1444 = vmul.f32 %v1414, %v1440
        %v1445 = vadd.f32 %v1403, %v1442
        %v1446 = vadd.f32 %v1404, %v1443
        %v1447 = vadd.f32 %v1405, %v1444
        %1448 = vrot.lane.b32.xlu0 %v1224, 123
        %v1449 = vpop.permute.xlu0 %1448
        %1450 = vrot.lane.b32.xlu0 %v1225, 123
        %v1451 = vpop.permute.xlu0 %1450
        %1452 = vrot.lane.b32.xlu0 %v1226, 123
        %v1453 = vpop.permute.xlu0 %1452
        %v1454 = vsel %vm676, %v1451, %v1453
        %v1455 = vsel %vm676, %v1449, %v1451
        %v1456 = vsel %vm676, %v1453, %v1449
        %1458 = vset.pattern.permute.xlu0 0
        %1459 = vperm.xlu0 %1458, %v436
        %v1460 = vpop.permute.xlu0 %1459
        %v1462 = vmul.f32 %v1455, %v1460
        %v1463 = vmul.f32 %v1454, %v1460
        %v1464 = vmul.f32 %v1456, %v1460
        %v1465 = vadd.f32 %v1434, %v1462
        %v1466 = vadd.f32 %v1435, %v1463
        %v1467 = vadd.f32 %v1436, %v1464
        %1469 = vset.pattern.permute.xlu0 0
        %1470 = vperm.xlu0 %1469, %v473
        %v1471 = vpop.permute.xlu0 %1470
        %v1473 = vmul.f32 %v1455, %v1471
        %v1474 = vmul.f32 %v1454, %v1471
        %v1475 = vmul.f32 %v1456, %v1471
        %v1476 = vadd.f32 %v1445, %v1473
        %v1477 = vadd.f32 %v1446, %v1474
        %v1478 = vadd.f32 %v1447, %v1475
        %1479 = vrot.lane.b32.xlu0 %v1224, 122
        %v1480 = vpop.permute.xlu0 %1479
        %1481 = vrot.lane.b32.xlu0 %v1225, 122
        %v1482 = vpop.permute.xlu0 %1481
        %1483 = vrot.lane.b32.xlu0 %v1226, 122
        %v1484 = vpop.permute.xlu0 %1483
        %v1485 = vsel %vm697, %v1482, %v1484
        %v1486 = vsel %vm697, %v1480, %v1482
        %v1487 = vsel %vm697, %v1484, %v1480
        %1489 = vset.pattern.permute.xlu0 0
        %1490 = vperm.xlu0 %1489, %v474
        %v1491 = vpop.permute.xlu0 %1490
        %v1493 = vmul.f32 %v1486, %v1491
        %v1494 = vmul.f32 %v1485, %v1491
        %v1495 = vmul.f32 %v1487, %v1491
        %v1496 = vadd.f32 %v1476, %v1493
        %v1497 = vadd.f32 %v1477, %v1494
        %v1498 = vadd.f32 %v1478, %v1495
        %1500 = vset.pattern.permute.xlu0 0
        %1501 = vperm.xlu0 %1500, %v475
        %v1502 = vpop.permute.xlu0 %1501
        %v1504 = vmul.f32 %v500, %v1502
        %v1505 = vmul.f32 %v501, %v1502
        %v1506 = vmul.f32 %v502, %v1502
        %v1507 = vmul.f32 %v503, %v1502
        %1512 = vrot.lane.b32.xlu0 %v1504, 32
        %v1513 = vpop.permute.xlu0 %1512
        %1514 = vrot.lane.b32.xlu0 %v1505, 32
        %v1515 = vpop.permute.xlu0 %1514
        %1516 = vrot.lane.b32.xlu0 %v1506, 32
        %v1517 = vpop.permute.xlu0 %1516
        %1518 = vrot.lane.b32.xlu0 %v1507, 32
        %v1519 = vpop.permute.xlu0 %1518
        %v1520 = vsel %vm530, %v1513, %v1515
        %v1521 = vsel %vm530, %v1515, %v1517
        %v1522 = vsel %vm530, %v1517, %v1519
        %v1526 = vadd.f32 %v1496, %v1520
        %v1527 = vadd.f32 %v1497, %v1521
        %v1528 = vadd.f32 %v1498, %v1522
        %1529 = vrot.lane.b32.xlu0 %v500, 32
        %v1530 = vpop.permute.xlu0 %1529
        %1531 = vrot.lane.b32.xlu0 %v501, 32
        %v1532 = vpop.permute.xlu0 %1531
        %1533 = vrot.lane.b32.xlu0 %v502, 32
        %v1534 = vpop.permute.xlu0 %1533
        %1535 = vrot.lane.b32.xlu0 %v503, 32
        %v1536 = vpop.permute.xlu0 %1535
        %v1537 = vsel %vm530, %v1530, %v1532
        %v1538 = vsel %vm530, %v1532, %v1534
        %v1539 = vsel %vm530, %v1534, %v1536
        %1543 = vrot.lane.b32.xlu0 %v1537, 127
        %v1544 = vpop.permute.xlu0 %1543
        %1545 = vrot.lane.b32.xlu0 %v1538, 127
        %v1546 = vpop.permute.xlu0 %1545
        %1547 = vrot.lane.b32.xlu0 %v1539, 127
        %v1548 = vpop.permute.xlu0 %1547
        %v1549 = vsel %vm592, %v1546, %v1548
        %v1550 = vsel %vm592, %v1544, %v1546
        %v1551 = vsel %vm592, %v1548, %v1544
        %1553 = vset.pattern.permute.xlu0 0
        %1554 = vperm.xlu0 %1553, %v437
        %v1555 = vpop.permute.xlu0 %1554
        %v1557 = vmul.f32 %v1550, %v1555
        %v1558 = vmul.f32 %v1549, %v1555
        %v1559 = vmul.f32 %v1551, %v1555
        %v1560 = vadd.f32 %v1465, %v1557
        %v1561 = vadd.f32 %v1466, %v1558
        %v1562 = vadd.f32 %v1467, %v1559
        %1564 = vset.pattern.permute.xlu0 0
        %1565 = vperm.xlu0 %1564, %v476
        %v1566 = vpop.permute.xlu0 %1565
        %v1568 = vmul.f32 %v1550, %v1566
        %v1569 = vmul.f32 %v1549, %v1566
        %v1570 = vmul.f32 %v1551, %v1566
        %v1571 = vadd.f32 %v1526, %v1568
        %v1572 = vadd.f32 %v1527, %v1569
        %v1573 = vadd.f32 %v1528, %v1570
        %1574 = vrot.lane.b32.xlu0 %v1537, 126
        %v1575 = vpop.permute.xlu0 %1574
        %1576 = vrot.lane.b32.xlu0 %v1538, 126
        %v1577 = vpop.permute.xlu0 %1576
        %1578 = vrot.lane.b32.xlu0 %v1539, 126
        %v1579 = vpop.permute.xlu0 %1578
        %v1580 = vsel %vm613, %v1577, %v1579
        %v1581 = vsel %vm613, %v1575, %v1577
        %v1582 = vsel %vm613, %v1579, %v1575
        %1584 = vset.pattern.permute.xlu0 0
        %1585 = vperm.xlu0 %1584, %v419
        %v1586 = vpop.permute.xlu0 %1585
        %v1588 = vmul.f32 %v1581, %v1586
        %v1589 = vmul.f32 %v1580, %v1586
        %v1590 = vmul.f32 %v1582, %v1586
        %v1591 = vadd.f32 %v1423, %v1588
        %v1592 = vadd.f32 %v1424, %v1589
        %v1593 = vadd.f32 %v1425, %v1590
        %1595 = vset.pattern.permute.xlu0 0
        %1596 = vperm.xlu0 %1595, %v438
        %v1597 = vpop.permute.xlu0 %1596
        %v1599 = vmul.f32 %v1581, %v1597
        %v1600 = vmul.f32 %v1580, %v1597
        %v1601 = vmul.f32 %v1582, %v1597
        %v1602 = vadd.f32 %v1560, %v1599
        %v1603 = vadd.f32 %v1561, %v1600
        %v1604 = vadd.f32 %v1562, %v1601
        %1606 = vset.pattern.permute.xlu0 0
        %1607 = vperm.xlu0 %1606, %v477
        %v1608 = vpop.permute.xlu0 %1607
        %v1610 = vmul.f32 %v1581, %v1608
        %v1611 = vmul.f32 %v1580, %v1608
        %v1612 = vmul.f32 %v1582, %v1608
        %v1613 = vadd.f32 %v1571, %v1610
        %v1614 = vadd.f32 %v1572, %v1611
        %v1615 = vadd.f32 %v1573, %v1612
        %1616 = vrot.lane.b32.xlu0 %v1537, 125
        %v1617 = vpop.permute.xlu0 %1616
        %1618 = vrot.lane.b32.xlu0 %v1538, 125
        %v1619 = vpop.permute.xlu0 %1618
        %1620 = vrot.lane.b32.xlu0 %v1539, 125
        %v1621 = vpop.permute.xlu0 %1620
        %v1622 = vsel %vm634, %v1619, %v1621
        %v1623 = vsel %vm634, %v1617, %v1619
        %v1624 = vsel %vm634, %v1621, %v1617
        %1626 = vset.pattern.permute.xlu0 0
        %1627 = vperm.xlu0 %1626, %v420
        %v1628 = vpop.permute.xlu0 %1627
        %v1630 = vmul.f32 %v1623, %v1628
        %v1631 = vmul.f32 %v1622, %v1628
        %v1632 = vmul.f32 %v1624, %v1628
        %v1633 = vadd.f32 %v1591, %v1630
        %v1634 = vadd.f32 %v1592, %v1631
        %v1635 = vadd.f32 %v1593, %v1632
        %1637 = vset.pattern.permute.xlu0 0
        %1638 = vperm.xlu0 %1637, %v439
        %v1639 = vpop.permute.xlu0 %1638
        %v1641 = vmul.f32 %v1623, %v1639
        %v1642 = vmul.f32 %v1622, %v1639
        %v1643 = vmul.f32 %v1624, %v1639
        %v1644 = vadd.f32 %v1602, %v1641
        %v1645 = vadd.f32 %v1603, %v1642
        %v1646 = vadd.f32 %v1604, %v1643
        %1648 = vset.pattern.permute.xlu0 0
        %1649 = vperm.xlu0 %1648, %v478
        %v1650 = vpop.permute.xlu0 %1649
        %v1652 = vmul.f32 %v1623, %v1650
        %v1653 = vmul.f32 %v1622, %v1650
        %v1654 = vmul.f32 %v1624, %v1650
        %v1655 = vadd.f32 %v1613, %v1652
        %v1656 = vadd.f32 %v1614, %v1653
        %v1657 = vadd.f32 %v1615, %v1654
        %1658 = vrot.lane.b32.xlu0 %v1537, 124
        %v1659 = vpop.permute.xlu0 %1658
        %1660 = vrot.lane.b32.xlu0 %v1538, 124
        %v1661 = vpop.permute.xlu0 %1660
        %1662 = vrot.lane.b32.xlu0 %v1539, 124
        %v1663 = vpop.permute.xlu0 %1662
        %v1664 = vsel %vm655, %v1661, %v1663
        %v1665 = vsel %vm655, %v1659, %v1661
        %v1666 = vsel %vm655, %v1663, %v1659
        %1668 = vset.pattern.permute.xlu0 0
        %1669 = vperm.xlu0 %1668, %v421
        %v1670 = vpop.permute.xlu0 %1669
        %v1672 = vmul.f32 %v1665, %v1670
        %v1673 = vmul.f32 %v1664, %v1670
        %v1674 = vmul.f32 %v1666, %v1670
        %v1675 = vadd.f32 %v1633, %v1672
        %v1676 = vadd.f32 %v1634, %v1673
        %v1677 = vadd.f32 %v1635, %v1674
        %1679 = vset.pattern.permute.xlu0 0
        %1680 = vperm.xlu0 %1679, %v440
        %v1681 = vpop.permute.xlu0 %1680
        %v1683 = vmul.f32 %v1665, %v1681
        %v1684 = vmul.f32 %v1664, %v1681
        %v1685 = vmul.f32 %v1666, %v1681
        %v1686 = vadd.f32 %v1644, %v1683
        %v1687 = vadd.f32 %v1645, %v1684
        %v1688 = vadd.f32 %v1646, %v1685
        %1690 = vset.pattern.permute.xlu0 0
        %1691 = vperm.xlu0 %1690, %v479
        %v1692 = vpop.permute.xlu0 %1691
        %v1694 = vmul.f32 %v1665, %v1692
        %v1695 = vmul.f32 %v1664, %v1692
        %v1696 = vmul.f32 %v1666, %v1692
        %v1697 = vadd.f32 %v1655, %v1694
        %v1698 = vadd.f32 %v1656, %v1695
        %v1699 = vadd.f32 %v1657, %v1696
        %1700 = vrot.lane.b32.xlu0 %v1537, 123
        %v1701 = vpop.permute.xlu0 %1700
        %1702 = vrot.lane.b32.xlu0 %v1538, 123
        %v1703 = vpop.permute.xlu0 %1702
        %1704 = vrot.lane.b32.xlu0 %v1539, 123
        %v1705 = vpop.permute.xlu0 %1704
        %v1706 = vsel %vm676, %v1703, %v1705
        %v1707 = vsel %vm676, %v1701, %v1703
        %v1708 = vsel %vm676, %v1705, %v1701
        %1710 = vset.pattern.permute.xlu0 0
        %1711 = vperm.xlu0 %1710, %v441
        %v1712 = vpop.permute.xlu0 %1711
        %v1714 = vmul.f32 %v1707, %v1712
        %v1715 = vmul.f32 %v1706, %v1712
        %v1716 = vmul.f32 %v1708, %v1712
        %v1717 = vadd.f32 %v1686, %v1714
        %v1718 = vadd.f32 %v1687, %v1715
        %v1719 = vadd.f32 %v1688, %v1716
        %1721 = vset.pattern.permute.xlu0 0
        %1722 = vperm.xlu0 %1721, %v480
        %v1723 = vpop.permute.xlu0 %1722
        %v1725 = vmul.f32 %v1707, %v1723
        %v1726 = vmul.f32 %v1706, %v1723
        %v1727 = vmul.f32 %v1708, %v1723
        %v1728 = vadd.f32 %v1697, %v1725
        %v1729 = vadd.f32 %v1698, %v1726
        %v1730 = vadd.f32 %v1699, %v1727
        %1731 = vrot.lane.b32.xlu0 %v1537, 122
        %v1732 = vpop.permute.xlu0 %1731
        %1733 = vrot.lane.b32.xlu0 %v1538, 122
        %v1734 = vpop.permute.xlu0 %1733
        %1735 = vrot.lane.b32.xlu0 %v1539, 122
        %v1736 = vpop.permute.xlu0 %1735
        %v1737 = vsel %vm697, %v1734, %v1736
        %v1738 = vsel %vm697, %v1732, %v1734
        %v1739 = vsel %vm697, %v1736, %v1732
        %1741 = vset.pattern.permute.xlu0 0
        %1742 = vperm.xlu0 %1741, %v481
        %v1743 = vpop.permute.xlu0 %1742
        %v1745 = vmul.f32 %v1738, %v1743
        %v1746 = vmul.f32 %v1737, %v1743
        %v1747 = vmul.f32 %v1739, %v1743
        %v1748 = vadd.f32 %v1728, %v1745
        %v1749 = vadd.f32 %v1729, %v1746
        %v1750 = vadd.f32 %v1730, %v1747
        %1752 = vset.pattern.permute.xlu0 0
        %1753 = vperm.xlu0 %1752, %v482
        %v1754 = vpop.permute.xlu0 %1753
        %v1756 = vmul.f32 %v500, %v1754
        %v1757 = vmul.f32 %v501, %v1754
        %v1758 = vmul.f32 %v502, %v1754
        %v1759 = vmul.f32 %v503, %v1754
        %1764 = vrot.lane.b32.xlu0 %v1756, 8
        %v1765 = vpop.permute.xlu0 %1764
        %1766 = vrot.lane.b32.xlu0 %v1757, 8
        %v1767 = vpop.permute.xlu0 %1766
        %1768 = vrot.lane.b32.xlu0 %v1758, 8
        %v1769 = vpop.permute.xlu0 %1768
        %1770 = vrot.lane.b32.xlu0 %v1759, 8
        %v1771 = vpop.permute.xlu0 %1770
        %vm1772 = vcmask 64512
        %v1773 = vsel %vm1772, %v1765, %v1767
        %v1774 = vsel %vm1772, %v1767, %v1769
        %v1775 = vsel %vm1772, %v1769, %v1771
        %v1779 = vadd.f32 %v1748, %v1773
        %v1780 = vadd.f32 %v1749, %v1774
        %v1781 = vadd.f32 %v1750, %v1775
        %1782 = vrot.lane.b32.xlu0 %v500, 8
        %v1783 = vpop.permute.xlu0 %1782
        %1784 = vrot.lane.b32.xlu0 %v501, 8
        %v1785 = vpop.permute.xlu0 %1784
        %1786 = vrot.lane.b32.xlu0 %v502, 8
        %v1787 = vpop.permute.xlu0 %1786
        %1788 = vrot.lane.b32.xlu0 %v503, 8
        %v1789 = vpop.permute.xlu0 %1788
        %v1790 = vsel %vm1772, %v1783, %v1785
        %v1791 = vsel %vm1772, %v1785, %v1787
        %v1792 = vsel %vm1772, %v1787, %v1789
        %1796 = vrot.lane.b32.xlu0 %v1790, 127
        %v1797 = vpop.permute.xlu0 %1796
        %1798 = vrot.lane.b32.xlu0 %v1791, 127
        %v1799 = vpop.permute.xlu0 %1798
        %1800 = vrot.lane.b32.xlu0 %v1792, 127
        %v1801 = vpop.permute.xlu0 %1800
        %v1802 = vsel %vm592, %v1799, %v1801
        %v1803 = vsel %vm592, %v1797, %v1799
        %v1804 = vsel %vm592, %v1801, %v1797
        %1806 = vset.pattern.permute.xlu0 0
        %1807 = vperm.xlu0 %1806, %v442
        %v1808 = vpop.permute.xlu0 %1807
        %v1810 = vmul.f32 %v1803, %v1808
        %v1811 = vmul.f32 %v1802, %v1808
        %v1812 = vmul.f32 %v1804, %v1808
        %v1813 = vadd.f32 %v1717, %v1810
        %v1814 = vadd.f32 %v1718, %v1811
        %v1815 = vadd.f32 %v1719, %v1812
        %1817 = vset.pattern.permute.xlu0 0
        %1818 = vperm.xlu0 %1817, %v483
        %v1819 = vpop.permute.xlu0 %1818
        %v1821 = vmul.f32 %v1803, %v1819
        %v1822 = vmul.f32 %v1802, %v1819
        %v1823 = vmul.f32 %v1804, %v1819
        %v1824 = vadd.f32 %v1779, %v1821
        %v1825 = vadd.f32 %v1780, %v1822
        %v1826 = vadd.f32 %v1781, %v1823
        %1827 = vrot.lane.b32.xlu0 %v1790, 126
        %v1828 = vpop.permute.xlu0 %1827
        %1829 = vrot.lane.b32.xlu0 %v1791, 126
        %v1830 = vpop.permute.xlu0 %1829
        %1831 = vrot.lane.b32.xlu0 %v1792, 126
        %v1832 = vpop.permute.xlu0 %1831
        %v1833 = vsel %vm613, %v1830, %v1832
        %v1834 = vsel %vm613, %v1828, %v1830
        %v1835 = vsel %vm613, %v1832, %v1828
        %1837 = vset.pattern.permute.xlu0 0
        %1838 = vperm.xlu0 %1837, %v443
        %v1839 = vpop.permute.xlu0 %1838
        %v1841 = vmul.f32 %v1834, %v1839
        %v1842 = vmul.f32 %v1833, %v1839
        %v1843 = vmul.f32 %v1835, %v1839
        %v1844 = vadd.f32 %v1813, %v1841
        %v1845 = vadd.f32 %v1814, %v1842
        %v1846 = vadd.f32 %v1815, %v1843
        %1848 = vset.pattern.permute.xlu0 0
        %1849 = vperm.xlu0 %1848, %v484
        %v1850 = vpop.permute.xlu0 %1849
        %v1852 = vmul.f32 %v1834, %v1850
        %v1853 = vmul.f32 %v1833, %v1850
        %v1854 = vmul.f32 %v1835, %v1850
        %v1855 = vadd.f32 %v1824, %v1852
        %v1856 = vadd.f32 %v1825, %v1853
        %v1857 = vadd.f32 %v1826, %v1854
        %1858 = vrot.lane.b32.xlu0 %v1790, 125
        %v1859 = vpop.permute.xlu0 %1858
        %1860 = vrot.lane.b32.xlu0 %v1791, 125
        %v1861 = vpop.permute.xlu0 %1860
        %1862 = vrot.lane.b32.xlu0 %v1792, 125
        %v1863 = vpop.permute.xlu0 %1862
        %v1864 = vsel %vm634, %v1861, %v1863
        %v1865 = vsel %vm634, %v1859, %v1861
        %v1866 = vsel %vm634, %v1863, %v1859
        %1868 = vset.pattern.permute.xlu0 0
        %1869 = vperm.xlu0 %1868, %v444
        %v1870 = vpop.permute.xlu0 %1869
        %v1872 = vmul.f32 %v1865, %v1870
        %v1873 = vmul.f32 %v1864, %v1870
        %v1874 = vmul.f32 %v1866, %v1870
        %v1875 = vadd.f32 %v1844, %v1872
        %v1876 = vadd.f32 %v1845, %v1873
        %v1877 = vadd.f32 %v1846, %v1874
        %1879 = vset.pattern.permute.xlu0 0
        %1880 = vperm.xlu0 %1879, %v485
        %v1881 = vpop.permute.xlu0 %1880
        %v1883 = vmul.f32 %v1865, %v1881
        %v1884 = vmul.f32 %v1864, %v1881
        %v1885 = vmul.f32 %v1866, %v1881
        %v1886 = vadd.f32 %v1855, %v1883
        %v1887 = vadd.f32 %v1856, %v1884
        %v1888 = vadd.f32 %v1857, %v1885
        %1889 = vrot.lane.b32.xlu0 %v1790, 124
        %v1890 = vpop.permute.xlu0 %1889
        %1891 = vrot.lane.b32.xlu0 %v1791, 124
        %v1892 = vpop.permute.xlu0 %1891
        %1893 = vrot.lane.b32.xlu0 %v1792, 124
        %v1894 = vpop.permute.xlu0 %1893
        %v1895 = vsel %vm655, %v1892, %v1894
        %v1896 = vsel %vm655, %v1890, %v1892
        %v1897 = vsel %vm655, %v1894, %v1890
        %1899 = vset.pattern.permute.xlu0 0
        %1900 = vperm.xlu0 %1899, %v445
        %v1901 = vpop.permute.xlu0 %1900
        %v1903 = vmul.f32 %v1896, %v1901
        %v1904 = vmul.f32 %v1895, %v1901
        %v1905 = vmul.f32 %v1897, %v1901
        %v1906 = vadd.f32 %v1875, %v1903
        %v1907 = vadd.f32 %v1876, %v1904
        %v1908 = vadd.f32 %v1877, %v1905
        %1910 = vset.pattern.permute.xlu0 0
        %1911 = vperm.xlu0 %1910, %v486
        %v1912 = vpop.permute.xlu0 %1911
        %v1914 = vmul.f32 %v1896, %v1912
        %v1915 = vmul.f32 %v1895, %v1912
        %v1916 = vmul.f32 %v1897, %v1912
        %v1917 = vadd.f32 %v1886, %v1914
        %v1918 = vadd.f32 %v1887, %v1915
        %v1919 = vadd.f32 %v1888, %v1916
        %1920 = vrot.lane.b32.xlu0 %v1790, 123
        %v1921 = vpop.permute.xlu0 %1920
        %1922 = vrot.lane.b32.xlu0 %v1791, 123
        %v1923 = vpop.permute.xlu0 %1922
        %1924 = vrot.lane.b32.xlu0 %v1792, 123
        %v1925 = vpop.permute.xlu0 %1924
        %v1926 = vsel %vm676, %v1923, %v1925
        %v1927 = vsel %vm676, %v1921, %v1923
        %v1928 = vsel %vm676, %v1925, %v1921
        %1930 = vset.pattern.permute.xlu0 0
        %1931 = vperm.xlu0 %1930, %v446
        %v1932 = vpop.permute.xlu0 %1931
        %v1934 = vmul.f32 %v1927, %v1932
        %v1935 = vmul.f32 %v1926, %v1932
        %v1936 = vmul.f32 %v1928, %v1932
        %v1937 = vadd.f32 %v1906, %v1934
        %v1938 = vadd.f32 %v1907, %v1935
        %v1939 = vadd.f32 %v1908, %v1936
        %1941 = vset.pattern.permute.xlu0 0
        %1942 = vperm.xlu0 %1941, %v487
        %v1943 = vpop.permute.xlu0 %1942
        %v1945 = vmul.f32 %v1927, %v1943
        %v1946 = vmul.f32 %v1926, %v1943
        %v1947 = vmul.f32 %v1928, %v1943
        %v1948 = vadd.f32 %v1917, %v1945
        %v1949 = vadd.f32 %v1918, %v1946
        %v1950 = vadd.f32 %v1919, %v1947
        %1951 = vrot.lane.b32.xlu0 %v1790, 122
        %v1952 = vpop.permute.xlu0 %1951
        %1953 = vrot.lane.b32.xlu0 %v1791, 122
        %v1954 = vpop.permute.xlu0 %1953
        %1955 = vrot.lane.b32.xlu0 %v1792, 122
        %v1956 = vpop.permute.xlu0 %1955
        %v1957 = vsel %vm697, %v1954, %v1956
        %v1958 = vsel %vm697, %v1952, %v1954
        %v1959 = vsel %vm697, %v1956, %v1952
        %1961 = vset.pattern.permute.xlu0 0
        %1962 = vperm.xlu0 %1961, %v488
        %v1963 = vpop.permute.xlu0 %1962
        %v1965 = vmul.f32 %v1958, %v1963
        %v1966 = vmul.f32 %v1957, %v1963
        %v1967 = vmul.f32 %v1959, %v1963
        %v1968 = vadd.f32 %v1948, %v1965
        %v1969 = vadd.f32 %v1949, %v1966
        %v1970 = vadd.f32 %v1950, %v1967
        %v1971 = vld [vmem:[%s411 + $0x8] sm:$0xff]
        %v1972 = vld [vmem:[%s411 + $0x10] sm:$0xff]
        %v1973 = vld [vmem:[%s411 + $0x18] sm:$0xff]
        %v1974 = vld [vmem:[%s411 + $0x20] sm:$0xff]
        %1976 = vset.pattern.permute.xlu0 0
        %1977 = vperm.xlu0 %1976, %v489
        %v1978 = vpop.permute.xlu0 %1977
        %v1980 = vmul.f32 %v1971, %v1978
        %v1981 = vmul.f32 %v1972, %v1978
        %v1982 = vmul.f32 %v1973, %v1978
        %v1983 = vmul.f32 %v1974, %v1978
        %1988 = vrot.lane.b32.xlu0 %v1980, 112
        %v1989 = vpop.permute.xlu0 %1988
        %1990 = vrot.lane.b32.xlu0 %v1981, 112
        %v1991 = vpop.permute.xlu0 %1990
        %1992 = vrot.lane.b32.xlu0 %v1982, 112
        %v1993 = vpop.permute.xlu0 %1992
        %1994 = vrot.lane.b32.xlu0 %v1983, 112
        %v1995 = vpop.permute.xlu0 %1994
        %vm1996 = vcmask 916480
        %v1997 = vsel %vm1996, %v1989, %v1991
        %v1998 = vsel %vm1996, %v1991, %v1993
        %v1999 = vsel %vm1996, %v1993, %v1995
        %v2003 = vadd.f32 %v1968, %v1997
        %v2004 = vadd.f32 %v1969, %v1998
        %v2005 = vadd.f32 %v1970, %v1999
        %2010 = vrot.lane.b32.xlu0 %v1971, 112
        %v2011 = vpop.permute.xlu0 %2010
        %2012 = vrot.lane.b32.xlu0 %v1972, 112
        %v2013 = vpop.permute.xlu0 %2012
        %2014 = vrot.lane.b32.xlu0 %v1973, 112
        %v2015 = vpop.permute.xlu0 %2014
        %2016 = vrot.lane.b32.xlu0 %v1974, 112
        %v2017 = vpop.permute.xlu0 %2016
        %v2018 = vsel %vm1996, %v2011, %v2013
        %v2019 = vsel %vm1996, %v2013, %v2015
        %v2020 = vsel %vm1996, %v2015, %v2017
        %2024 = vrot.lane.b32.xlu0 %v2018, 127
        %v2025 = vpop.permute.xlu0 %2024
        %2026 = vrot.lane.b32.xlu0 %v2019, 127
        %v2027 = vpop.permute.xlu0 %2026
        %2028 = vrot.lane.b32.xlu0 %v2020, 127
        %v2029 = vpop.permute.xlu0 %2028
        %v2030 = vsel %vm592, %v2027, %v2029
        %v2031 = vsel %vm592, %v2025, %v2027
        %v2032 = vsel %vm592, %v2029, %v2025
        %2034 = vset.pattern.permute.xlu0 0
        %2035 = vperm.xlu0 %2034, %v490
        %v2036 = vpop.permute.xlu0 %2035
        %v2038 = vmul.f32 %v2031, %v2036
        %v2039 = vmul.f32 %v2030, %v2036
        %v2040 = vmul.f32 %v2032, %v2036
        %v2041 = vadd.f32 %v2003, %v2038
        %v2042 = vadd.f32 %v2004, %v2039
        %v2043 = vadd.f32 %v2005, %v2040
        %2044 = vrot.lane.b32.xlu0 %v2018, 126
        %v2045 = vpop.permute.xlu0 %2044
        %2046 = vrot.lane.b32.xlu0 %v2019, 126
        %v2047 = vpop.permute.xlu0 %2046
        %2048 = vrot.lane.b32.xlu0 %v2020, 126
        %v2049 = vpop.permute.xlu0 %2048
        %v2050 = vsel %vm613, %v2047, %v2049
        %v2051 = vsel %vm613, %v2045, %v2047
        %v2052 = vsel %vm613, %v2049, %v2045
        %2054 = vset.pattern.permute.xlu0 0
        %2055 = vperm.xlu0 %2054, %v491
        %v2056 = vpop.permute.xlu0 %2055
        %v2058 = vmul.f32 %v2051, %v2056
        %v2059 = vmul.f32 %v2050, %v2056
        %v2060 = vmul.f32 %v2052, %v2056
        %v2061 = vadd.f32 %v2041, %v2058
        %v2062 = vadd.f32 %v2042, %v2059
        %v2063 = vadd.f32 %v2043, %v2060
        %2064 = vrot.lane.b32.xlu0 %v2018, 125
        %v2065 = vpop.permute.xlu0 %2064
        %2066 = vrot.lane.b32.xlu0 %v2019, 125
        %v2067 = vpop.permute.xlu0 %2066
        %2068 = vrot.lane.b32.xlu0 %v2020, 125
        %v2069 = vpop.permute.xlu0 %2068
        %v2070 = vsel %vm634, %v2067, %v2069
        %v2071 = vsel %vm634, %v2065, %v2067
        %v2072 = vsel %vm634, %v2069, %v2065
        %2074 = vset.pattern.permute.xlu0 0
        %2075 = vperm.xlu0 %2074, %v492
        %v2076 = vpop.permute.xlu0 %2075
        %v2078 = vmul.f32 %v2071, %v2076
        %v2079 = vmul.f32 %v2070, %v2076
        %v2080 = vmul.f32 %v2072, %v2076
        %v2081 = vadd.f32 %v2061, %v2078
        %v2082 = vadd.f32 %v2062, %v2079
        %v2083 = vadd.f32 %v2063, %v2080
        %2084 = vrot.lane.b32.xlu0 %v2018, 124
        %v2085 = vpop.permute.xlu0 %2084
        %2086 = vrot.lane.b32.xlu0 %v2019, 124
        %v2087 = vpop.permute.xlu0 %2086
        %2088 = vrot.lane.b32.xlu0 %v2020, 124
        %v2089 = vpop.permute.xlu0 %2088
        %v2090 = vsel %vm655, %v2087, %v2089
        %v2091 = vsel %vm655, %v2085, %v2087
        %v2092 = vsel %vm655, %v2089, %v2085
        %2094 = vset.pattern.permute.xlu0 0
        %2095 = vperm.xlu0 %2094, %v493
        %v2096 = vpop.permute.xlu0 %2095
        %v2098 = vmul.f32 %v2091, %v2096
        %v2099 = vmul.f32 %v2090, %v2096
        %v2100 = vmul.f32 %v2092, %v2096
        %v2101 = vadd.f32 %v2081, %v2098
        %v2102 = vadd.f32 %v2082, %v2099
        %v2103 = vadd.f32 %v2083, %v2100
        %2104 = vrot.lane.b32.xlu0 %v2018, 123
        %v2105 = vpop.permute.xlu0 %2104
        %2106 = vrot.lane.b32.xlu0 %v2019, 123
        %v2107 = vpop.permute.xlu0 %2106
        %2108 = vrot.lane.b32.xlu0 %v2020, 123
        %v2109 = vpop.permute.xlu0 %2108
        %v2110 = vsel %vm676, %v2107, %v2109
        %v2111 = vsel %vm676, %v2105, %v2107
        %v2112 = vsel %vm676, %v2109, %v2105
        %2114 = vset.pattern.permute.xlu0 0
        %2115 = vperm.xlu0 %2114, %v494
        %v2116 = vpop.permute.xlu0 %2115
        %v2118 = vmul.f32 %v2111, %v2116
        %v2119 = vmul.f32 %v2110, %v2116
        %v2120 = vmul.f32 %v2112, %v2116
        %v2121 = vadd.f32 %v2101, %v2118
        %v2122 = vadd.f32 %v2102, %v2119
        %v2123 = vadd.f32 %v2103, %v2120
        %2124 = vrot.lane.b32.xlu0 %v2018, 122
        %v2125 = vpop.permute.xlu0 %2124
        %2126 = vrot.lane.b32.xlu0 %v2019, 122
        %v2127 = vpop.permute.xlu0 %2126
        %2128 = vrot.lane.b32.xlu0 %v2020, 122
        %v2129 = vpop.permute.xlu0 %2128
        %v2130 = vsel %vm697, %v2127, %v2129
        %v2131 = vsel %vm697, %v2125, %v2127
        %v2132 = vsel %vm697, %v2129, %v2125
        %2134 = vset.pattern.permute.xlu0 0
        %2135 = vperm.xlu0 %2134, %v495
        %v2136 = vpop.permute.xlu0 %2135
        %v2138 = vmul.f32 %v2131, %v2136
        %v2139 = vmul.f32 %v2130, %v2136
        %v2140 = vmul.f32 %v2132, %v2136
        %v2141 = vadd.f32 %v2121, %v2138
        %v2142 = vadd.f32 %v2122, %v2139
        %v2143 = vadd.f32 %v2123, %v2140
        %2145 = vset.pattern.permute.xlu0 0
        %2146 = vperm.xlu0 %2145, %v496
        %v2147 = vpop.permute.xlu0 %2146
        %v2149 = vadd.f32 %v1312, %v2147
        %v2150 = vadd.f32 %v1313, %v2147
        %v2151 = vadd.f32 %v1314, %v2147
        %v2152 = vadd.f32 %v1315, %v2147
        %v2153 = vxor.u32 %v2149, 2147483648
        %v2154 = vxor.u32 %v2150, 2147483648
        %v2155 = vxor.u32 %v2151, 2147483648
        %v2156 = vxor.u32 %v2152, 2147483648
        %v2157 = vmul.f32 %v2153, 1.442695
        %v2158 = vpow.pop %v2157
        %v2159 = vmul.f32 %v2154, 1.442695
        %v2160 = vpow.pop %v2159
        %v2161 = vmul.f32 %v2155, 1.442695
        %v2162 = vpow.pop %v2161
        %v2163 = vmul.f32 %v2156, 1.442695
        %v2164 = vpow.pop %v2163
        %v2165 = vadd.f32 %v2158, 1.0
        %v2166 = vadd.f32 %v2160, 1.0
        %v2167 = vadd.f32 %v2162, 1.0
        %v2168 = vadd.f32 %v2164, 1.0
        %v2169 = vrcp.pop %v2165
        %v2170 = vmul.f32 1.0, %v2169
        %v2171 = vrcp.pop %v2166
        %v2172 = vmul.f32 1.0, %v2171
        %v2173 = vrcp.pop %v2167
        %v2174 = vmul.f32 1.0, %v2173
        %v2175 = vrcp.pop %v2168
        %v2176 = vmul.f32 1.0, %v2175
        %v2177 = vmul.f32 %v2149, %v2170
        %v2178 = vmul.f32 %v2150, %v2172
        %v2179 = vmul.f32 %v2151, %v2174
        %v2180 = vmul.f32 %v2152, %v2176
        %s2182 = vtos %v572
        %v2183 = vstv %s2182
        %v2185 = vmul.f32 %v2177, %v2183
        %v2186 = vmul.f32 %v2178, %v2183
        %v2187 = vmul.f32 %v2179, %v2183
        %v2188 = vmul.f32 %v2180, %v2183
        %v2189 = vadd.f32 %v2185, 0.0
        %v2190 = vadd.f32 %v2186, 0.0
        %v2191 = vadd.f32 %v2187, 0.0
        %v2192 = vadd.f32 %v2188, 0.0
        %2194 = vset.pattern.permute.xlu0 0
        %2195 = vperm.xlu0 %2194, %v497
        %v2196 = vpop.permute.xlu0 %2195
        %v2198 = vadd.f32 %v1675, %v2196
        %v2199 = vadd.f32 %v1676, %v2196
        %v2200 = vadd.f32 %v1677, %v2196
        %v2201 = vxor.u32 %v2198, 2147483648
        %v2202 = vxor.u32 %v2199, 2147483648
        %v2203 = vxor.u32 %v2200, 2147483648
        %v2204 = vmul.f32 %v2201, 1.442695
        %v2205 = vpow.pop %v2204
        %v2206 = vmul.f32 %v2202, 1.442695
        %v2207 = vpow.pop %v2206
        %v2208 = vmul.f32 %v2203, 1.442695
        %v2209 = vpow.pop %v2208
        %v2210 = vadd.f32 %v2205, 1.0
        %v2211 = vadd.f32 %v2207, 1.0
        %v2212 = vadd.f32 %v2209, 1.0
        %v2213 = vrcp.pop %v2210
        %v2214 = vmul.f32 1.0, %v2213
        %v2215 = vrcp.pop %v2211
        %v2216 = vmul.f32 1.0, %v2215
        %v2217 = vrcp.pop %v2212
        %v2218 = vmul.f32 1.0, %v2217
        %v2219 = vmul.f32 %v2198, %v2214
        %v2220 = vmul.f32 %v2199, %v2216
        %v2221 = vmul.f32 %v2200, %v2218
        %v2222 = vrot.slane %v572, 1
        %s2223 = vtos %v2222
        %v2224 = vstv %s2223
        %v2226 = vmul.f32 %v2219, %v2224
        %v2227 = vmul.f32 %v2220, %v2224
        %v2228 = vmul.f32 %v2221, %v2224
        %2232 = vrot.lane.b32.xlu0 %v2226, 75
        %v2233 = vpop.permute.xlu0 %2232
        %2234 = vrot.lane.b32.xlu0 %v2227, 75
        %v2235 = vpop.permute.xlu0 %2234
        %2236 = vrot.lane.b32.xlu0 %v2228, 75
        %v2237 = vpop.permute.xlu0 %2236
        %vm2238 = vcmask 613376
        %v2239 = vsel %vm2238, %v2233, %v2235
        %v2240 = vsel %vm2238, %v2235, %v2237
        %v2245 = vadd.f32 %v2189, %v2233
        %v2246 = vadd.f32 %v2190, %v2239
        %v2247 = vadd.f32 %v2191, %v2240
        %v2248 = vadd.f32 %v2192, %v2237
        %2250 = vset.pattern.permute.xlu0 0
        %2251 = vperm.xlu0 %2250, %v498
        %v2252 = vpop.permute.xlu0 %2251
        %v2254 = vadd.f32 %v1937, %v2252
        %v2255 = vadd.f32 %v1938, %v2252
        %v2256 = vadd.f32 %v1939, %v2252
        %v2257 = vxor.u32 %v2254, 2147483648
        %v2258 = vxor.u32 %v2255, 2147483648
        %v2259 = vxor.u32 %v2256, 2147483648
        %v2260 = vmul.f32 %v2257, 1.442695
        %v2261 = vpow.pop %v2260
        %v2262 = vmul.f32 %v2258, 1.442695
        %v2263 = vpow.pop %v2262
        %v2264 = vmul.f32 %v2259, 1.442695
        %v2265 = vpow.pop %v2264
        %v2266 = vadd.f32 %v2261, 1.0
        %v2267 = vadd.f32 %v2263, 1.0
        %v2268 = vadd.f32 %v2265, 1.0
        %v2269 = vrcp.pop %v2266
        %v2270 = vmul.f32 1.0, %v2269
        %v2271 = vrcp.pop %v2267
        %v2272 = vmul.f32 1.0, %v2271
        %v2273 = vrcp.pop %v2268
        %v2274 = vmul.f32 1.0, %v2273
        %v2275 = vmul.f32 %v2254, %v2270
        %v2276 = vmul.f32 %v2255, %v2272
        %v2277 = vmul.f32 %v2256, %v2274
        %v2278 = vrot.slane %v572, 2
        %s2279 = vtos %v2278
        %v2280 = vstv %s2279
        %v2282 = vmul.f32 %v2275, %v2280
        %v2283 = vmul.f32 %v2276, %v2280
        %v2284 = vmul.f32 %v2277, %v2280
        %2288 = vrot.lane.b32.xlu0 %v2282, 75
        %v2289 = vpop.permute.xlu0 %2288
        %2290 = vrot.lane.b32.xlu0 %v2283, 75
        %v2291 = vpop.permute.xlu0 %2290
        %2292 = vrot.lane.b32.xlu0 %v2284, 75
        %v2293 = vpop.permute.xlu0 %2292
        %v2294 = vsel %vm2238, %v2289, %v2291
        %v2295 = vsel %vm2238, %v2291, %v2293
        %v2300 = vadd.f32 %v2245, %v2289
        %v2301 = vadd.f32 %v2246, %v2294
        %v2302 = vadd.f32 %v2247, %v2295
        %v2303 = vadd.f32 %v2248, %v2293
        %2305 = vset.pattern.permute.xlu0 0
        %2306 = vperm.xlu0 %2305, %v499
        %v2307 = vpop.permute.xlu0 %2306
        %v2309 = vadd.f32 %v2141, %v2307
        %v2310 = vadd.f32 %v2142, %v2307
        %v2311 = vadd.f32 %v2143, %v2307
        %v2312 = vxor.u32 %v2309, 2147483648
        %v2313 = vxor.u32 %v2310, 2147483648
        %v2314 = vxor.u32 %v2311, 2147483648
        %v2315 = vmul.f32 %v2312, 1.442695
        %v2316 = vpow.pop %v2315
        %v2317 = vmul.f32 %v2313, 1.442695
        %v2318 = vpow.pop %v2317
        %v2319 = vmul.f32 %v2314, 1.442695
        %v2320 = vpow.pop %v2319
        %v2321 = vadd.f32 %v2316, 1.0
        %v2322 = vadd.f32 %v2318, 1.0
        %v2323 = vadd.f32 %v2320, 1.0
        %v2324 = vrcp.pop %v2321
        %v2325 = vmul.f32 1.0, %v2324
        %v2326 = vrcp.pop %v2322
        %v2327 = vmul.f32 1.0, %v2326
        %v2328 = vrcp.pop %v2323
        %v2329 = vmul.f32 1.0, %v2328
        %v2330 = vmul.f32 %v2309, %v2325
        %v2331 = vmul.f32 %v2310, %v2327
        %v2332 = vmul.f32 %v2311, %v2329
        %v2333 = vrot.slane %v572, 3
        %s2334 = vtos %v2333
        %v2335 = vstv %s2334
        %v2337 = vmul.f32 %v2330, %v2335
        %v2338 = vmul.f32 %v2331, %v2335
        %v2339 = vmul.f32 %v2332, %v2335
        %2343 = vrot.lane.b32.xlu0 %v2337, 75
        %v2344 = vpop.permute.xlu0 %2343
        %2345 = vrot.lane.b32.xlu0 %v2338, 75
        %v2346 = vpop.permute.xlu0 %2345
        %2347 = vrot.lane.b32.xlu0 %v2339, 75
        %v2348 = vpop.permute.xlu0 %2347
        %v2349 = vsel %vm2238, %v2344, %v2346
        %v2350 = vsel %vm2238, %v2346, %v2348
        %v2355 = vadd.f32 %v2300, %v2344
        %v2356 = vadd.f32 %v2301, %v2349
        %v2357 = vadd.f32 %v2302, %v2350
        %v2358 = vadd.f32 %v2303, %v2348
        %v2359 = vld [vmem:[%s10] sm:$0xff]
        %v2360 = vld [vmem:[%s11] sm:$0xff]
        %2362 = vset.pattern.permute.xlu0 0
        %2363 = vperm.xlu0 %2362, %v2360
        %v2364 = vpop.permute.xlu0 %2363
        %2370 = vrot.lane.b32.xlu0 %v2355, 53
        %v2371 = vpop.permute.xlu0 %2370
        %2372 = vrot.lane.b32.xlu0 %v2356, 53
        %v2373 = vpop.permute.xlu0 %2372
        %2374 = vrot.lane.b32.xlu0 %v2357, 53
        %v2375 = vpop.permute.xlu0 %2374
        %2376 = vrot.lane.b32.xlu0 %v2358, 53
        %v2377 = vpop.permute.xlu0 %2376
        %v2378 = vsel %vm516, %v2371, %v2373
        %v2379 = vsel %vm516, %v2373, %v2375
        %v2380 = vsel %vm516, %v2375, %v2377
        %v2385 = vsel %vm1772, %v2359, 0
        %2387 = vmatprep.subr.mxu0 %v2379
        %2388 = vmatpush1.msra.mxu0 %v2378
        %2389 = vmatprep.subr.mxu0 0.0
        %2390 = vmatpush1.msra.mxu0 0.0
        %2391 = vmatprep.subr.mxu0 0.0
        %2392 = vmatpush1.msra.mxu0 0.0
        %2393 = vmatprep.subr.mxu0 0.0
        %2394 = vmatpush1.msra.mxu0 0.0
        %2395 = vmatprep.subr.mxu0 0.0
        %2396 = vmatpush1.msra.mxu0 0.0
        %2397 = vmatprep.subr.mxu0 0.0
        %2398 = vmatpush1.msra.mxu0 0.0
        %2399 = vmatprep.subr.mxu0 0.0
        %2400 = vmatpush1.msra.mxu0 0.0
        %2401 = vmatprep.subr.mxu0 0.0
        %2402 = vmatpush1.msra.mxu0 0.0
        %2403 = vmatprep.subr.mxu0 0.0
        %2404 = vmatpush1.msra.mxu0 0.0
        %2405 = vmatprep.subr.mxu0 0.0
        %2406 = vmatpush1.msra.mxu0 0.0
        %2407 = vmatprep.subr.mxu0 0.0
        %2408 = vmatpush1.msra.mxu0 0.0
        %2409 = vmatprep.subr.mxu0 0.0
        %2410 = vmatpush1.msra.mxu0 0.0
        %2411 = vmatprep.subr.mxu0 0.0
        %2412 = vmatpush1.msra.mxu0 0.0
        %2413 = vmatprep.subr.mxu0 0.0
        %2414 = vmatpush1.msra.mxu0 0.0
        %2415 = vmatprep.subr.mxu0 0.0
        %2416 = vmatpush1.msra.mxu0 0.0
        %2417 = vmatprep.subr.mxu0 0.0
        %2418 = vmatpush1.msra.mxu0 0.0
        %2419 = vmatprep.subr.mxu0 0.0
        %2420 = vmatpush1.msra.mxu0 0.0
        %2421 = vmatprep.subr.mxu0 0.0
        %2422 = vmatpush1.msra.mxu0 0.0
        %2423 = vmatprep.subr.mxu0 0.0
        %2424 = vmatpush1.msra.mxu0 0.0
        %2425 = vmatprep.subr.mxu0 0.0
        %2426 = vmatpush1.msra.mxu0 0.0
        %2427 = vmatprep.subr.mxu0 0.0
        %2428 = vmatpush1.msra.mxu0 0.0
        %2429 = vmatprep.subr.mxu0 0.0
        %2430 = vmatpush1.msra.mxu0 0.0
        %2431 = vmatprep.subr.mxu0 0.0
        %2432 = vmatpush1.msra.mxu0 0.0
        %2433 = vmatprep.subr.mxu0 0.0
        %2434 = vmatpush1.msra.mxu0 0.0
        %2435 = vmatprep.subr.mxu0 0.0
        %2436 = vmatpush1.msra.mxu0 0.0
        %2437 = vmatprep.subr.mxu0 0.0
        %2438 = vmatpush1.msra.mxu0 0.0
        %2439 = vmatprep.subr.mxu0 0.0
        %2440 = vmatpush1.msra.mxu0 0.0
        %2441 = vmatprep.subr.mxu0 0.0
        %2442 = vmatpush1.msra.mxu0 0.0
        %2443 = vmatprep.subr.mxu0 0.0
        %2444 = vmatpush1.msra.mxu0 0.0
        %2445 = vmatprep.subr.mxu0 0.0
        %2446 = vmatpush1.msra.mxu0 0.0
        %2447 = vmatprep.subr.mxu0 0.0
        %2448 = vmatpush1.msra.mxu0 0.0
        %2449 = vmatprep.subr.mxu0 0.0
        %2450 = vmatpush1.msra.mxu0 0.0
        %2451 = vmatprep.mubr.f32.mxu0 0.0
        %2452 = vmatmul.mubr.f32.gmra.mrb[0].mxu0 %v2385
        %v2453 = vpop.f32.mrb[0].mxu0
        %v2454 = vadd.f32 %v2364, %v2453
        %v2455 = vpop.f32.mrb[0].mxu0
        %v2456 = vadd.f32 %v2364, %v2455
        %2457 = vdwg.mxu0
        %2458 = vmatprep.subr.mxu0 0.0
        %2459 = vmatpush1.msra.mxu0 %v2380
        %2460 = vmatprep.subr.mxu0 0.0
        %2461 = vmatpush1.msra.mxu0 0.0
        %2462 = vmatprep.subr.mxu0 0.0
        %2463 = vmatpush1.msra.mxu0 0.0
        %2464 = vmatprep.subr.mxu0 0.0
        %2465 = vmatpush1.msra.mxu0 0.0
        %2466 = vmatprep.subr.mxu0 0.0
        %2467 = vmatpush1.msra.mxu0 0.0
        %2468 = vmatprep.subr.mxu0 0.0
        %2469 = vmatpush1.msra.mxu0 0.0
        %2470 = vmatprep.subr.mxu0 0.0
        %2471 = vmatpush1.msra.mxu0 0.0
        %2472 = vmatprep.subr.mxu0 0.0
        %2473 = vmatpush1.msra.mxu0 0.0
        %2474 = vmatprep.subr.mxu0 0.0
        %2475 = vmatpush1.msra.mxu0 0.0
        %2476 = vmatprep.subr.mxu0 0.0
        %2477 = vmatpush1.msra.mxu0 0.0
        %2478 = vmatprep.subr.mxu0 0.0
        %2479 = vmatpush1.msra.mxu0 0.0
        %2480 = vmatprep.subr.mxu0 0.0
        %2481 = vmatpush1.msra.mxu0 0.0
        %2482 = vmatprep.subr.mxu0 0.0
        %2483 = vmatpush1.msra.mxu0 0.0
        %2484 = vmatprep.subr.mxu0 0.0
        %2485 = vmatpush1.msra.mxu0 0.0
        %2486 = vmatprep.subr.mxu0 0.0
        %2487 = vmatpush1.msra.mxu0 0.0
        %2488 = vmatprep.subr.mxu0 0.0
        %2489 = vmatpush1.msra.mxu0 0.0
        %2490 = vmatprep.subr.mxu0 0.0
        %2491 = vmatpush1.msra.mxu0 0.0
        %2492 = vmatprep.subr.mxu0 0.0
        %2493 = vmatpush1.msra.mxu0 0.0
        %2494 = vmatprep.subr.mxu0 0.0
        %2495 = vmatpush1.msra.mxu0 0.0
        %2496 = vmatprep.subr.mxu0 0.0
        %2497 = vmatpush1.msra.mxu0 0.0
        %2498 = vmatprep.subr.mxu0 0.0
        %2499 = vmatpush1.msra.mxu0 0.0
        %2500 = vmatprep.subr.mxu0 0.0
        %2501 = vmatpush1.msra.mxu0 0.0
        %2502 = vmatprep.subr.mxu0 0.0
        %2503 = vmatpush1.msra.mxu0 0.0
        %2504 = vmatprep.subr.mxu0 0.0
        %2505 = vmatpush1.msra.mxu0 0.0
        %2506 = vmatprep.subr.mxu0 0.0
        %2507 = vmatpush1.msra.mxu0 0.0
        %2508 = vmatprep.subr.mxu0 0.0
        %2509 = vmatpush1.msra.mxu0 0.0
        %2510 = vmatprep.subr.mxu0 0.0
        %2511 = vmatpush1.msra.mxu0 0.0
        %2512 = vmatprep.subr.mxu0 0.0
        %2513 = vmatpush1.msra.mxu0 0.0
        %2514 = vmatprep.subr.mxu0 0.0
        %2515 = vmatpush1.msra.mxu0 0.0
        %2516 = vmatprep.subr.mxu0 0.0
        %2517 = vmatpush1.msra.mxu0 0.0
        %2518 = vmatprep.subr.mxu0 0.0
        %2519 = vmatpush1.msra.mxu0 0.0
        %2520 = vmatprep.subr.mxu0 0.0
        %2521 = vmatpush1.msra.mxu0 0.0
        %2522 = vmatprep.mubr.f32.mxu0 0.0
        %2523 = vmatmul.mubr.f32.gmra.mrb[0].mxu0 %v2385
        %v2524 = vpop.f32.mrb[0].mxu0
        %v2525 = vadd.f32 %v2364, %v2524
        %v2526 = vpop.f32.mrb[0].mxu0
        %2527 = vdwg.mxu0
        %v2528 = vxor.u32 %v2454, 2147483648
        %v2529 = vxor.u32 %v2456, 2147483648
        %v2530 = vxor.u32 %v2525, 2147483648
        %v2531 = vmul.f32 %v2528, 1.442695
        %v2532 = vpow.pop %v2531
        %v2533 = vmul.f32 %v2529, 1.442695
        %v2534 = vpow.pop %v2533
        %v2535 = vmul.f32 %v2530, 1.442695
        %v2536 = vpow.pop %v2535
        %v2537 = vadd.f32 %v2532, 1.0
        %v2538 = vadd.f32 %v2534, 1.0
        %v2539 = vadd.f32 %v2536, 1.0
        %v2540 = vrcp.pop %v2537
        %v2541 = vmul.f32 1.0, %v2540
        %v2542 = vrcp.pop %v2538
        %v2543 = vmul.f32 1.0, %v2542
        %v2544 = vrcp.pop %v2539
        %v2545 = vmul.f32 1.0, %v2544
        %v2546 = vadd.f32 %v2541, 1.0
        %v2547 = vadd.f32 %v2543, 1.0
        %v2548 = vadd.f32 %v2545, 1.0
        %2552 = vrot.lane.b32.xlu0 %v2546, 75
        %v2553 = vpop.permute.xlu0 %2552
        %2554 = vrot.lane.b32.xlu0 %v2547, 75
        %v2555 = vpop.permute.xlu0 %2554
        %2556 = vrot.lane.b32.xlu0 %v2548, 75
        %v2557 = vpop.permute.xlu0 %2556
        %v2558 = vsel %vm2238, %v2553, %v2555
        %v2559 = vsel %vm2238, %v2555, %v2557
        %v2564 = vmul.f32 %v500, %v2553
        %v2565 = vmul.f32 %v501, %v2558
        %v2566 = vmul.f32 %v502, %v2559
        %v2567 = vmul.f32 %v503, %v2557
        %2572 = vrot.lane.b32.xlu0 %v2564, 53
        %v2573 = vpop.permute.xlu0 %2572
        %2574 = vrot.lane.b32.xlu0 %v2565, 53
        %v2575 = vpop.permute.xlu0 %2574
        %2576 = vrot.lane.b32.xlu0 %v2566, 53
        %v2577 = vpop.permute.xlu0 %2576
        %2578 = vrot.lane.b32.xlu0 %v2567, 53
        %v2579 = vpop.permute.xlu0 %2578
        %v2580 = vsel %vm516, %v2573, %v2575
        %v2581 = vsel %vm516, %v2575, %v2577
        %v2582 = vsel %vm516, %v2577, %v2579
        %2586 = vst [vmem:[%s406] sm:$0xff] %v2580
        %2587 = vst [vmem:[%s406 + $0x8] sm:$0xff] %v2581
        %2588 = vst [vmem:[%s406 + $0x10] sm:$0xff] %v2582
        %s2589 = sand.u32 %s291, 1
        %s2590 = scalar_lea.sflag [#allocation3], %s2589
        %s2591 = sand.u32 %s291, 1
        %s2592 = smul.addr %s2591, 24
        %s2593 = scalar_lea.vmem [#allocation2], %s2592
        // Predicated region
        $region69: #{tpu_custom_call.1} parent=67 // pred_check
          %p2594 = pneg %p301
        $region70: #{tpu_custom_call.1} parent=67 // pred_check_branch
          %2596 = sbr.rel (%p2594) target = $region72
        $region71: #{tpu_custom_call.1} parent=67 // pred_region
          %s2598 = ssub.s32 384, 384
          %2599 = vsyncadd %s2590, %s2598
          %s2600 = smul.addr %s26, 3
          %s2601 = smul.addr %s2600, 128
          %s2602 = scalar_lea.hbm %s12, %s2601
          %s2604 = sshll.u32 %s2593, 4
          %s2605 = int_to_ptr.vmem [resolvable:$true] %s2604
          %2607 = dma.vmem_to_hbm [thread:$0]  %s2605, 384, %s2602, %s2590
        $region72: #{tpu_custom_call.1} parent=67 // pred_fallthru
          _
      $region68: #{tpu_custom_call.1} parent=5 // pred_fallthru
        _
      %p2608 = scmp.le.s32.totalorder 2, %s21
      // Predicated region
      $region73: #{tpu_custom_call.1} parent=5 // pred_check
        %p2609 = pneg %p2608
      $region74: #{tpu_custom_call.1} parent=5 // pred_check_branch
        %2611 = sbr.rel (%p2609) target = $region76
      $region75: #{tpu_custom_call.1} parent=5 // pred_region
        %s2612 = ssub.s32 %s21, 2
        // Predicated region
        $region77: #{tpu_custom_call.1} parent=75 // pred_check
          %p2613 = pneg %p307
        $region78: #{tpu_custom_call.1} parent=75 // pred_check_branch
          %2615 = sbr.rel (%p2613) target = $region80
        $region79: #{tpu_custom_call.1} parent=75 // pred_region
          %s2616 = sand.u32 %s292, 1
          %s2617 = scalar_lea.sflag [#allocation3], %s2616
          %s2618 = sand.u32 %s292, 1
          %s2619 = smul.addr %s2618, 24
          %s2620 = scalar_lea.vmem [#allocation2], %s2619
          %2621 = dma.done %s2617, 384
        $region80: #{tpu_custom_call.1} parent=75 // pred_fallthru
          _
      $region76: #{tpu_custom_call.1} parent=5 // pred_fallthru
        _
    $region6: #{tpu_custom_call.1} parent=1 // loop_footer
      %s25 = sadd.s32 1, %s21
    $region7: #{tpu_custom_call.1} parent=1 // loop_footer_branch
      %20 = sbr.rel target = $region3
    $region8: #{tpu_custom_call.1} parent=1 // loop_exit
      _
    %2622 = vsyncpa [#allocation3], 1
    %s2623 = scalar_lea.sflag [#allocation3], 1
    %2624 = vsyncpa %s2623, 1

</llo_original>
